<compile_context>
chip_gen: v7x
topology: tpu7x:2x2x1
jax: 0.10.0
libtpu: 0.0.40
codegen_flags: <defaults>
</compile_context>

<pallas_src>
import jax
import jax.numpy as jnp
from jax import lax
from jax.experimental import pallas as pl
from jax.experimental.pallas import tpu as pltpu

EPS = 1e-5
LANE = 128
VMEM_LIMIT = 64 * 1024 * 1024


def _round_up(x, m):
    return ((x + m - 1) // m) * m


def _band_rows(h, w, cin_p, cout_p, target_m=128, vmem_cap=4 << 20):
    """Band height th (divides H): smallest divisor giving a matmul M-dim
    (th*W) of at least `target_m`, bounded by a per-block VMEM budget."""
    best = 1
    for t in range(1, h + 1):
        if h % t:
            continue
        blk = (3 * (t + 2) * w * cin_p * 2 + t * w * cout_p * 2) * 2  # 2x dbuf
        if blk > vmem_cap:
            break
        best = t
        if t * w >= target_m:
            break
    return best


def _flat_rows(m, cap=2048):
    """Largest divisor of m that is <= cap (row tile for the BN/ReLU pass)."""
    best = 1
    for t in range(1, min(m, cap) + 1):
        if m % t == 0:
            best = t
    return best


# ----------------------------- Pallas kernels --------------------------------
def _conv_stats_kernel(x0_ref, x1_ref, x2_ref, w_ref, b_ref,
                       y_ref, sum_ref, ssq_ref):
    """Conv3x3 (9 batched bf16 matmuls, f32 accum) + bias for one row band,
    plus running per-channel sum / sum-of-squares for the BN batch statistics.

    x{0,1,2}_ref : (1, th+2, W, Cin_p)  bf16, dx-shifted banded views
    w_ref        : (9, Cin_p, Cout_p)   bf16, tap-major weights (resident)
    b_ref        : (1, Cout_p)          f32, conv bias (resident)
    y_ref        : (th*W, Cout_p)       bf16, pre-BN conv output (flat rows)
    sum_ref      : (1, Cout_p)          f32, pinned accumulator (sum)
    ssq_ref      : (1, Cout_p)          f32, pinned accumulator (sum of sq.)
    """
    # init the pinned stat accumulators on the first grid step
    @pl.when(pl.program_id(0) == 0)
    def _():
        sum_ref[...] = jnp.zeros_like(sum_ref)
        ssq_ref[...] = jnp.zeros_like(ssq_ref)

    tm, cout_p = y_ref.shape
    _, thp2, _, cin_p = x0_ref.shape
    th = thp2 - 2
    x_refs = (x0_ref, x1_ref, x2_ref)

    acc = jnp.zeros((tm, cout_p), jnp.float32)
    for dx in range(3):
        xr = x_refs[dx]
        for dy in range(3):
            # dy halo is a slice along the (non-tiled) band-row axis -> free,
            # and the reshape collapses an aligned (th, W, Cin_p) slab.
            lhs = xr[0, dy:dy + th, :, :].reshape(tm, cin_p)
            acc = acc + jnp.dot(lhs, w_ref[dy * 3 + dx],
                                preferred_element_type=jnp.float32)

    row = acc + b_ref[...]
    y_ref[...] = row.astype(y_ref.dtype)
    sum_ref[...] += jnp.sum(row, axis=0, keepdims=True)
    ssq_ref[...] += jnp.sum(row * row, axis=0, keepdims=True)


def _bn_relu_kernel(y_ref, scale_ref, shift_ref, o_ref):
    """BatchNorm apply (precomputed affine form) + ReLU + cast."""
    y = y_ref[...].astype(jnp.float32)
    o_ref[...] = jnp.maximum(
        y * scale_ref[...] + shift_ref[...], 0.0).astype(o_ref.dtype)


# ----------------------------- layer wrapper ---------------------------------
def _conv_bn_relu(x_nhwc, w9, bias, gamma, beta, out_dtype):
    """One Conv3x3(pad=1) + BatchNorm (batch stats) + ReLU layer.

    x_nhwc : (N, H, W, Cin_p), channels already zero-padded to a lane multiple.
    Returns (N, H, W, Cout_p) in `out_dtype`; padded channels are exactly 0.
    """
    n, h, w, cin_p = x_nhwc.shape
    cout_p = w9.shape[-1]
    m_total = n * h * w

    # Spatial zero-pad; matmul inputs in bf16.
    xp = jnp.pad(x_nhwc.astype(jnp.bfloat16), ((0, 0), (1, 1), (1, 1), (0, 0)))

    th = _band_rows(h, w, cin_p, cout_p)
    nb = h // th
    tm = th * w

    # Three dx-shifted views, restructured into overlapping row bands of th+2
    # rows so the dy halo is available inside each block without misaligned
    # in-kernel slicing:   (N*nb, th+2, W, Cin_p)
    # TODO(synk): a manual halo DMA (memory_space=pl.ANY + make_async_copy)
    # could remove the ~3x bf16 view materialization entirely.
    def bands(v):  # v: (N, H+2, W, Cin_p)
        v = jnp.stack([v[:, j * th:j * th + th + 2] for j in range(nb)], axis=1)
        return v.reshape(n * nb, th + 2, w, cin_p)

    x_dx = [bands(xp[:, :, dx:dx + w, :]) for dx in range(3)]

    grid1 = (n * nb,)
    x_spec = pl.BlockSpec((1, th + 2, w, cin_p), lambda i: (i, 0, 0, 0))
    w_spec = pl.BlockSpec((9, cin_p, cout_p), lambda i: (0, 0, 0))
    vec_spec = pl.BlockSpec((1, cout_p), lambda i: (0, 0))     # resident/pinned
    y_spec = pl.BlockSpec((tm, cout_p), lambda i: (i, 0))

    flops = 2 * m_total * 9 * cin_p * cout_p
    bytes_accessed = (3 * n * nb * (th + 2) * w * cin_p * 2
                      + 9 * cin_p * cout_p * 2
                      + m_total * cout_p * 2 + 3 * cout_p * 4)

    # pass 1: conv + bias + per-channel stats (pinned accumulators over grid)
    y, ch_sum, ch_ssq = pl.pallas_call(
        _conv_stats_kernel,
        out_shape=(jax.ShapeDtypeStruct((m_total, cout_p), jnp.bfloat16),
                   jax.ShapeDtypeStruct((1, cout_p), jnp.float32),
                   jax.ShapeDtypeStruct((1, cout_p), jnp.float32)),
        grid=grid1,
        in_specs=[x_spec, x_spec, x_spec, w_spec, vec_spec],
        out_specs=(y_spec, vec_spec, vec_spec),
        compiler_params=pltpu.CompilerParams(
            # stats accumulate across the grid -> must run sequentially
            dimension_semantics=("arbitrary",),
            vmem_limit_bytes=VMEM_LIMIT),
        cost_estimate=pl.CostEstimate(flops=flops, transcendentals=0,
                                      bytes_accessed=bytes_accessed),
    )(x_dx[0], x_dx[1], x_dx[2], w9, bias)

    # batch statistics (PyTorch train-mode BN uses the biased variance)
    m = float(m_total)
    mean = ch_sum / m
    var = jnp.maximum(ch_ssq / m - mean * mean, 0.0)
    scale = gamma * lax.rsqrt(var + EPS)
    shift = beta - mean * scale

    # pass 2: normalize + ReLU on big flat lane-dense tiles (parallel/megacore)
    tr = _flat_rows(m_total)
    grid2 = (m_total // tr,)
    r_spec = pl.BlockSpec((tr, cout_p), lambda i: (i, 0))

    out = pl.pallas_call(
        _bn_relu_kernel,
        out_shape=jax.ShapeDtypeStruct((m_total, cout_p), out_dtype),
        grid=grid2,
        in_specs=[r_spec, vec_spec, vec_spec],
        out_specs=r_spec,
        compiler_params=pltpu.CompilerParams(
            dimension_semantics=("parallel",),
            vmem_limit_bytes=VMEM_LIMIT),
    )(y, scale, shift)

    return out.reshape(n, h, w, cout_p)


# ------------------------------- JAX glue ------------------------------------
def _prep_layer(w_oihw, b, gamma, beta, cin_p, cout_p):
    """(Cout, Cin, 3, 3) PyTorch weights -> (9, Cin_p, Cout_p) bf16 tap-major,
    plus (1, Cout_p) f32 bias / gamma / beta (zero-padded channels)."""
    cout, cin = w_oihw.shape[0], w_oihw.shape[1]
    wt = jnp.transpose(w_oihw, (2, 3, 1, 0))                 # (3, 3, Cin, Cout)
    wt = jnp.pad(wt, ((0, 0), (0, 0), (0, cin_p - cin), (0, cout_p - cout)))
    w9 = wt.reshape(9, cin_p, cout_p).astype(jnp.bfloat16)

    def pad_vec(v):
        return jnp.pad(v, (0, cout_p - cout)).reshape(1, cout_p).astype(jnp.float32)

    return w9, pad_vec(b), pad_vec(gamma), pad_vec(beta)


@jax.jit
def double_conv(x_nchw, params):
    n, cin, h, w = x_nchw.shape
    cout = params["w1"].shape[0]
    cin_p = _round_up(cin, LANE)
    cout_p = _round_up(cout, LANE)

    # weight / BN-parameter packing (tiny, folded into the single jit trace)
    w9a, b1, g1, beta1 = _prep_layer(params["w1"], params["b1"],
                                     params["g1"], params["beta1"],
                                     cin_p, cout_p)
    w9b, b2, g2, beta2 = _prep_layer(params["w2"], params["b2"],
                                     params["g2"], params["beta2"],
                                     cout_p, cout_p)

    # NCHW -> NHWC (channels on lanes), zero-pad channels to a lane multiple
    x = jnp.transpose(x_nchw, (0, 2, 3, 1))
    x = jnp.pad(x, ((0, 0), (0, 0), (0, 0), (0, cin_p - cin)))

    y1 = _conv_bn_relu(x, w9a, b1, g1, beta1, jnp.bfloat16)   # layer 1 (bf16)
    y2 = _conv_bn_relu(y1, w9b, b2, g2, beta2, jnp.float32)   # layer 2 (f32)

    return jnp.transpose(y2[..., :cout], (0, 3, 1, 2))        # NCHW, drop pad


# --------------------------- pure-JAX reference -------------------------------
def ref_double_conv(x, params):
    def conv(x, wt, b):
        y = lax.conv_general_dilated(
            x, wt, window_strides=(1, 1), padding=((1, 1), (1, 1)),
            dimension_numbers=("NCHW", "OIHW", "NCHW"))
        return y + b[None, :, None, None]

    def bn_relu(x, g, be):
        mean = x.mean(axis=(0, 2, 3), keepdims=True)
        var = ((x - mean) ** 2).mean(axis=(0, 2, 3), keepdims=True)
        y = (x - mean) * lax.rsqrt(var + EPS)
        y = y * g[None, :, None, None] + be[None, :, None, None]
        return jnp.maximum(y, 0.0)

    x = bn_relu(conv(x, params["w1"], params["b1"]), params["g1"], params["beta1"])
    x = bn_relu(conv(x, params["w2"], params["b2"]), params["g2"], params["beta2"])
    return x


# ----------------------------------- main -------------------------------------
if __name__ == "__main__":
    key = jax.random.PRNGKey(0)
    N, CIN, COUT, H, W = 2, 4, 8, 16, 16

    ks = jax.random.split(key, 9)
    x = jax.random.normal(ks[0], (N, CIN, H, W), jnp.float32)

    params = {
        # conv1: Conv2d(CIN, COUT, 3, padding=1)
        "w1": 0.2 * jax.random.normal(ks[1], (COUT, CIN, 3, 3), jnp.float32),
        "b1": 0.1 * jax.random.normal(ks[2], (COUT,), jnp.float32),
        "g1": 1.0 + 0.1 * jax.random.normal(ks[3], (COUT,), jnp.float32),
        "beta1": 0.1 * jax.random.normal(ks[4], (COUT,), jnp.float32),
        # conv2: Conv2d(COUT, COUT, 3, padding=1)
        "w2": 0.2 * jax.random.normal(ks[5], (COUT, COUT, 3, 3), jnp.float32),
        "b2": 0.1 * jax.random.normal(ks[6], (COUT,), jnp.float32),
        "g2": 1.0 + 0.1 * jax.random.normal(ks[7], (COUT,), jnp.float32),
        "beta2": 0.1 * jax.random.normal(ks[8], (COUT,), jnp.float32),
    }

    out = jax.block_until_ready(double_conv(x, params))
    assert out.shape == (N, COUT, H, W), out.shape

    # TODO(synk): BatchNorm running_mean/running_var updates (train-mode side
    # effect) are not modeled; only forward values are produced.
    ref = jax.block_until_ready(ref_double_conv(x, params))
    err = float(jnp.max(jnp.abs(out - ref)))
    # tolerance relaxed vs the f32 reference because the conv matmuls run in
    # bf16 and the pre-BN intermediate is stored in bf16
    assert jnp.allclose(out, ref, rtol=5e-2, atol=5e-2), err

    print("KERNEL_OK")
</pallas_src>

<mosaic_0001>
module attributes {stable_mosaic.version = 11 : i64} {
  func.func @_conv_stats_kernel(%arg0: i32, %arg1: memref<1x10x16x128xbf16, #tpu.memory_space<vmem>>, %arg2: memref<1x10x16x128xbf16, #tpu.memory_space<vmem>>, %arg3: memref<1x10x16x128xbf16, #tpu.memory_space<vmem>>, %arg4: memref<9x128x128xbf16, #tpu.memory_space<vmem>>, %arg5: memref<1x128xf32, #tpu.memory_space<vmem>>, %arg6: memref<128x128xbf16, #tpu.memory_space<vmem>>, %arg7: memref<1x128xf32, #tpu.memory_space<vmem>>, %arg8: memref<1x128xf32, #tpu.memory_space<vmem>>) attributes {dimension_semantics = [#tpu.dimension_semantics<arbitrary>], iteration_bounds = array<i64: 4>, scalar_prefetch = 0 : i64, scratch_operands = 0 : i64, tpu.core_type = #tpu.core_type<tc>, window_params = [{transform_indices = @transform_0, window_bounds = array<i64: 1, 10, 16, 128>}, {transform_indices = @transform_1, window_bounds = array<i64: 1, 10, 16, 128>}, {transform_indices = @transform_2, window_bounds = array<i64: 1, 10, 16, 128>}, {pipeline_mode = #tpu.pipeline_mode<synchronous>, transform_indices = @transform_3, window_bounds = array<i64: 9, 128, 128>}, {pipeline_mode = #tpu.pipeline_mode<synchronous>, transform_indices = @transform_4, window_bounds = array<i64: 1, 128>}, {transform_indices = @transform_5, window_bounds = array<i64: 128, 128>}, {pipeline_mode = #tpu.pipeline_mode<synchronous>, transform_indices = @transform_6, window_bounds = array<i64: 1, 128>}, {pipeline_mode = #tpu.pipeline_mode<synchronous>, transform_indices = @transform_7, window_bounds = array<i64: 1, 128>}]} {
    %c0_i32 = arith.constant 0 : i32
    %0 = arith.cmpi eq, %arg0, %c0_i32 : i32
    %1 = arith.extui %0 : i1 to i32
    %c0_i32_0 = arith.constant 0 : i32
    %2 = arith.cmpi ne, %1, %c0_i32_0 : i32
    scf.if %2 {
      %cst_78 = arith.constant 0.000000e+00 : f32
      %83 = vector.broadcast %cst_78 : f32 to vector<1x128xf32>
      %c0_79 = arith.constant 0 : index
      %c0_80 = arith.constant 0 : index
      %84 = vector.load %arg7[%c0_79, %c0_80] : memref<1x128xf32, #tpu.memory_space<vmem>>, vector<1x128xf32>
      tpu.vector_store %arg7[%c0_79, %c0_80], %83 {strides = array<i32>} : memref<1x128xf32, #tpu.memory_space<vmem>>, vector<1x128xf32>,
      %cst_81 = arith.constant 0.000000e+00 : f32
      %85 = vector.broadcast %cst_81 : f32 to vector<1x128xf32>
      %c0_82 = arith.constant 0 : index
      %c0_83 = arith.constant 0 : index
      %86 = vector.load %arg8[%c0_82, %c0_83] : memref<1x128xf32, #tpu.memory_space<vmem>>, vector<1x128xf32>
      tpu.vector_store %arg8[%c0_82, %c0_83], %85 {strides = array<i32>} : memref<1x128xf32, #tpu.memory_space<vmem>>, vector<1x128xf32>,
    } else {
    }
    %cst = arith.constant 0.000000e+00 : f32
    %3 = vector.broadcast %cst : f32 to vector<128x128xf32>
    %c0 = arith.constant 0 : index
    %c0_1 = arith.constant 0 : index
    %c0_2 = arith.constant 0 : index
    %c0_3 = arith.constant 0 : index
    %4 = vector.load %arg1[%c0, %c0_1, %c0_2, %c0_3] : memref<1x10x16x128xbf16, #tpu.memory_space<vmem>>, vector<1x8x16x128xbf16>
    %5 = vector.shape_cast %4 : vector<1x8x16x128xbf16> to vector<8x16x128xbf16>
    %6 = vector.shape_cast %5 : vector<8x16x128xbf16> to vector<128x128xbf16>
    %c0_4 = arith.constant 0 : index
    %c0_5 = arith.constant 0 : index
    %c0_6 = arith.constant 0 : index
    %7 = vector.load %arg4[%c0_4, %c0_5, %c0_6] : memref<9x128x128xbf16, #tpu.memory_space<vmem>>, vector<1x128x128xbf16>
    %8 = vector.shape_cast %7 : vector<1x128x128xbf16> to vector<128x128xbf16>
    %cst_7 = arith.constant dense<0.000000e+00> : vector<128x128xf32>
    %9 = tpu.matmul %6, %8, %cst_7 {dimension_numbers = #tpu.dot_dimension_numbers<[1], [0], [0], [1], [0, 0, 1, 1], [], []>} : vector<128x128xbf16>, vector<128x128xbf16>, vector<128x128xf32> -> vector<128x128xf32>
    %10 = arith.addf %3, %9 : vector<128x128xf32>
    %c0_8 = arith.constant 0 : index
    %c1 = arith.constant 1 : index
    %c0_9 = arith.constant 0 : index
    %c0_10 = arith.constant 0 : index
    %11 = vector.load %arg1[%c0_8, %c1, %c0_9, %c0_10] : memref<1x10x16x128xbf16, #tpu.memory_space<vmem>>, vector<1x8x16x128xbf16>
    %12 = vector.shape_cast %11 : vector<1x8x16x128xbf16> to vector<8x16x128xbf16>
    %13 = vector.shape_cast %12 : vector<8x16x128xbf16> to vector<128x128xbf16>
    %c3 = arith.constant 3 : index
    %c0_11 = arith.constant 0 : index
    %c0_12 = arith.constant 0 : index
    %14 = vector.load %arg4[%c3, %c0_11, %c0_12] : memref<9x128x128xbf16, #tpu.memory_space<vmem>>, vector<1x128x128xbf16>
    %15 = vector.shape_cast %14 : vector<1x128x128xbf16> to vector<128x128xbf16>
    %cst_13 = arith.constant dense<0.000000e+00> : vector<128x128xf32>
    %16 = tpu.matmul %13, %15, %cst_13 {dimension_numbers = #tpu.dot_dimension_numbers<[1], [0], [0], [1], [0, 0, 1, 1], [], []>} : vector<128x128xbf16>, vector<128x128xbf16>, vector<128x128xf32> -> vector<128x128xf32>
    %17 = arith.addf %10, %16 : vector<128x128xf32>
    %c0_14 = arith.constant 0 : index
    %c2 = arith.constant 2 : index
    %c0_15 = arith.constant 0 : index
    %c0_16 = arith.constant 0 : index
    %18 = vector.load %arg1[%c0_14, %c2, %c0_15, %c0_16] : memref<1x10x16x128xbf16, #tpu.memory_space<vmem>>, vector<1x8x16x128xbf16>
    %19 = vector.shape_cast %18 : vector<1x8x16x128xbf16> to vector<8x16x128xbf16>
    %20 = vector.shape_cast %19 : vector<8x16x128xbf16> to vector<128x128xbf16>
    %c6 = arith.constant 6 : index
    %c0_17 = arith.constant 0 : index
    %c0_18 = arith.constant 0 : index
    %21 = vector.load %arg4[%c6, %c0_17, %c0_18] : memref<9x128x128xbf16, #tpu.memory_space<vmem>>, vector<1x128x128xbf16>
    %22 = vector.shape_cast %21 : vector<1x128x128xbf16> to vector<128x128xbf16>
    %cst_19 = arith.constant dense<0.000000e+00> : vector<128x128xf32>
    %23 = tpu.matmul %20, %22, %cst_19 {dimension_numbers = #tpu.dot_dimension_numbers<[1], [0], [0], [1], [0, 0, 1, 1], [], []>} : vector<128x128xbf16>, vector<128x128xbf16>, vector<128x128xf32> -> vector<128x128xf32>
    %24 = arith.addf %17, %23 : vector<128x128xf32>
    %c0_20 = arith.constant 0 : index
    %c0_21 = arith.constant 0 : index
    %c0_22 = arith.constant 0 : index
    %c0_23 = arith.constant 0 : index
    %25 = vector.load %arg2[%c0_20, %c0_21, %c0_22, %c0_23] : memref<1x10x16x128xbf16, #tpu.memory_space<vmem>>, vector<1x8x16x128xbf16>
    %26 = vector.shape_cast %25 : vector<1x8x16x128xbf16> to vector<8x16x128xbf16>
    %27 = vector.shape_cast %26 : vector<8x16x128xbf16> to vector<128x128xbf16>
    %c1_24 = arith.constant 1 : index
    %c0_25 = arith.constant 0 : index
    %c0_26 = arith.constant 0 : index
    %28 = vector.load %arg4[%c1_24, %c0_25, %c0_26] : memref<9x128x128xbf16, #tpu.memory_space<vmem>>, vector<1x128x128xbf16>
    %29 = vector.shape_cast %28 : vector<1x128x128xbf16> to vector<128x128xbf16>
    %cst_27 = arith.constant dense<0.000000e+00> : vector<128x128xf32>
    %30 = tpu.matmul %27, %29, %cst_27 {dimension_numbers = #tpu.dot_dimension_numbers<[1], [0], [0], [1], [0, 0, 1, 1], [], []>} : vector<128x128xbf16>, vector<128x128xbf16>, vector<128x128xf32> -> vector<128x128xf32>
    %31 = arith.addf %24, %30 : vector<128x128xf32>
    %c0_28 = arith.constant 0 : index
    %c1_29 = arith.constant 1 : index
    %c0_30 = arith.constant 0 : index
    %c0_31 = arith.constant 0 : index
    %32 = vector.load %arg2[%c0_28, %c1_29, %c0_30, %c0_31] : memref<1x10x16x128xbf16, #tpu.memory_space<vmem>>, vector<1x8x16x128xbf16>
    %33 = vector.shape_cast %32 : vector<1x8x16x128xbf16> to vector<8x16x128xbf16>
    %34 = vector.shape_cast %33 : vector<8x16x128xbf16> to vector<128x128xbf16>
    %c4 = arith.constant 4 : index
    %c0_32 = arith.constant 0 : index
    %c0_33 = arith.constant 0 : index
    %35 = vector.load %arg4[%c4, %c0_32, %c0_33] : memref<9x128x128xbf16, #tpu.memory_space<vmem>>, vector<1x128x128xbf16>
    %36 = vector.shape_cast %35 : vector<1x128x128xbf16> to vector<128x128xbf16>
    %cst_34 = arith.constant dense<0.000000e+00> : vector<128x128xf32>
    %37 = tpu.matmul %34, %36, %cst_34 {dimension_numbers = #tpu.dot_dimension_numbers<[1], [0], [0], [1], [0, 0, 1, 1], [], []>} : vector<128x128xbf16>, vector<128x128xbf16>, vector<128x128xf32> -> vector<128x128xf32>
    %38 = arith.addf %31, %37 : vector<128x128xf32>
    %c0_35 = arith.constant 0 : index
    %c2_36 = arith.constant 2 : index
    %c0_37 = arith.constant 0 : index
    %c0_38 = arith.constant 0 : index
    %39 = vector.load %arg2[%c0_35, %c2_36, %c0_37, %c0_38] : memref<1x10x16x128xbf16, #tpu.memory_space<vmem>>, vector<1x8x16x128xbf16>
    %40 = vector.shape_cast %39 : vector<1x8x16x128xbf16> to vector<8x16x128xbf16>
    %41 = vector.shape_cast %40 : vector<8x16x128xbf16> to vector<128x128xbf16>
    %c7 = arith.constant 7 : index
    %c0_39 = arith.constant 0 : index
    %c0_40 = arith.constant 0 : index
    %42 = vector.load %arg4[%c7, %c0_39, %c0_40] : memref<9x128x128xbf16, #tpu.memory_space<vmem>>, vector<1x128x128xbf16>
    %43 = vector.shape_cast %42 : vector<1x128x128xbf16> to vector<128x128xbf16>
    %cst_41 = arith.constant dense<0.000000e+00> : vector<128x128xf32>
    %44 = tpu.matmul %41, %43, %cst_41 {dimension_numbers = #tpu.dot_dimension_numbers<[1], [0], [0], [1], [0, 0, 1, 1], [], []>} : vector<128x128xbf16>, vector<128x128xbf16>, vector<128x128xf32> -> vector<128x128xf32>
    %45 = arith.addf %38, %44 : vector<128x128xf32>
    %c0_42 = arith.constant 0 : index
    %c0_43 = arith.constant 0 : index
    %c0_44 = arith.constant 0 : index
    %c0_45 = arith.constant 0 : index
    %46 = vector.load %arg3[%c0_42, %c0_43, %c0_44, %c0_45] : memref<1x10x16x128xbf16, #tpu.memory_space<vmem>>, vector<1x8x16x128xbf16>
    %47 = vector.shape_cast %46 : vector<1x8x16x128xbf16> to vector<8x16x128xbf16>
    %48 = vector.shape_cast %47 : vector<8x16x128xbf16> to vector<128x128xbf16>
    %c2_46 = arith.constant 2 : index
    %c0_47 = arith.constant 0 : index
    %c0_48 = arith.constant 0 : index
    %49 = vector.load %arg4[%c2_46, %c0_47, %c0_48] : memref<9x128x128xbf16, #tpu.memory_space<vmem>>, vector<1x128x128xbf16>
    %50 = vector.shape_cast %49 : vector<1x128x128xbf16> to vector<128x128xbf16>
    %cst_49 = arith.constant dense<0.000000e+00> : vector<128x128xf32>
    %51 = tpu.matmul %48, %50, %cst_49 {dimension_numbers = #tpu.dot_dimension_numbers<[1], [0], [0], [1], [0, 0, 1, 1], [], []>} : vector<128x128xbf16>, vector<128x128xbf16>, vector<128x128xf32> -> vector<128x128xf32>
    %52 = arith.addf %45, %51 : vector<128x128xf32>
    %c0_50 = arith.constant 0 : index
    %c1_51 = arith.constant 1 : index
    %c0_52 = arith.constant 0 : index
    %c0_53 = arith.constant 0 : index
    %53 = vector.load %arg3[%c0_50, %c1_51, %c0_52, %c0_53] : memref<1x10x16x128xbf16, #tpu.memory_space<vmem>>, vector<1x8x16x128xbf16>
    %54 = vector.shape_cast %53 : vector<1x8x16x128xbf16> to vector<8x16x128xbf16>
    %55 = vector.shape_cast %54 : vector<8x16x128xbf16> to vector<128x128xbf16>
    %c5 = arith.constant 5 : index
    %c0_54 = arith.constant 0 : index
    %c0_55 = arith.constant 0 : index
    %56 = vector.load %arg4[%c5, %c0_54, %c0_55] : memref<9x128x128xbf16, #tpu.memory_space<vmem>>, vector<1x128x128xbf16>
    %57 = vector.shape_cast %56 : vector<1x128x128xbf16> to vector<128x128xbf16>
    %cst_56 = arith.constant dense<0.000000e+00> : vector<128x128xf32>
    %58 = tpu.matmul %55, %57, %cst_56 {dimension_numbers = #tpu.dot_dimension_numbers<[1], [0], [0], [1], [0, 0, 1, 1], [], []>} : vector<128x128xbf16>, vector<128x128xbf16>, vector<128x128xf32> -> vector<128x128xf32>
    %59 = arith.addf %52, %58 : vector<128x128xf32>
    %c0_57 = arith.constant 0 : index
    %c2_58 = arith.constant 2 : index
    %c0_59 = arith.constant 0 : index
    %c0_60 = arith.constant 0 : index
    %60 = vector.load %arg3[%c0_57, %c2_58, %c0_59, %c0_60] : memref<1x10x16x128xbf16, #tpu.memory_space<vmem>>, vector<1x8x16x128xbf16>
    %61 = vector.shape_cast %60 : vector<1x8x16x128xbf16> to vector<8x16x128xbf16>
    %62 = vector.shape_cast %61 : vector<8x16x128xbf16> to vector<128x128xbf16>
    %c8 = arith.constant 8 : index
    %c0_61 = arith.constant 0 : index
    %c0_62 = arith.constant 0 : index
    %63 = vector.load %arg4[%c8, %c0_61, %c0_62] : memref<9x128x128xbf16, #tpu.memory_space<vmem>>, vector<1x128x128xbf16>
    %64 = vector.shape_cast %63 : vector<1x128x128xbf16> to vector<128x128xbf16>
    %cst_63 = arith.constant dense<0.000000e+00> : vector<128x128xf32>
    %65 = tpu.matmul %62, %64, %cst_63 {dimension_numbers = #tpu.dot_dimension_numbers<[1], [0], [0], [1], [0, 0, 1, 1], [], []>} : vector<128x128xbf16>, vector<128x128xbf16>, vector<128x128xf32> -> vector<128x128xf32>
    %66 = arith.addf %59, %65 : vector<128x128xf32>
    %c0_64 = arith.constant 0 : index
    %c0_65 = arith.constant 0 : index
    %67 = vector.load %arg5[%c0_64, %c0_65] : memref<1x128xf32, #tpu.memory_space<vmem>>, vector<1x128xf32>
    %68 = vector.broadcast %67 : vector<1x128xf32> to vector<128x128xf32>
    %69 = arith.addf %66, %68 : vector<128x128xf32>
    %70 = arith.truncf %69 : vector<128x128xf32> to vector<128x128xbf16>
    %c0_66 = arith.constant 0 : index
    %c0_67 = arith.constant 0 : index
    %71 = vector.load %arg6[%c0_66, %c0_67] : memref<128x128xbf16, #tpu.memory_space<vmem>>, vector<128x128xbf16>
    tpu.vector_store %arg6[%c0_66, %c0_67], %70 {strides = array<i32>} : memref<128x128xbf16, #tpu.memory_space<vmem>>, vector<128x128xbf16>,
    %c0_68 = arith.constant 0 : index
    %c0_69 = arith.constant 0 : index
    %72 = vector.load %arg7[%c0_68, %c0_69] : memref<1x128xf32, #tpu.memory_space<vmem>>, vector<1x128xf32>
    %cst_70 = arith.constant dense<0.000000e+00> : vector<128xf32>
    %73 = vector.multi_reduction <add>, %69, %cst_70 [0] : vector<128x128xf32> to vector<128xf32>
    %74 = vector.shape_cast %73 : vector<128xf32> to vector<1x128xf32>
    %75 = arith.addf %72, %74 : vector<1x128xf32>
    %c0_71 = arith.constant 0 : index
    %c0_72 = arith.constant 0 : index
    %76 = vector.load %arg7[%c0_71, %c0_72] : memref<1x128xf32, #tpu.memory_space<vmem>>, vector<1x128xf32>
    tpu.vector_store %arg7[%c0_71, %c0_72], %75 {strides = array<i32>} : memref<1x128xf32, #tpu.memory_space<vmem>>, vector<1x128xf32>,
    %c0_73 = arith.constant 0 : index
    %c0_74 = arith.constant 0 : index
    %77 = vector.load %arg8[%c0_73, %c0_74] : memref<1x128xf32, #tpu.memory_space<vmem>>, vector<1x128xf32>
    %78 = arith.mulf %69, %69 : vector<128x128xf32>
    %cst_75 = arith.constant dense<0.000000e+00> : vector<128xf32>
    %79 = vector.multi_reduction <add>, %78, %cst_75 [0] : vector<128x128xf32> to vector<128xf32>
    %80 = vector.shape_cast %79 : vector<128xf32> to vector<1x128xf32>
    %81 = arith.addf %77, %80 : vector<1x128xf32>
    %c0_76 = arith.constant 0 : index
    %c0_77 = arith.constant 0 : index
    %82 = vector.load %arg8[%c0_76, %c0_77] : memref<1x128xf32, #tpu.memory_space<vmem>>, vector<1x128xf32>
    tpu.vector_store %arg8[%c0_76, %c0_77], %81 {strides = array<i32>} : memref<1x128xf32, #tpu.memory_space<vmem>>, vector<1x128xf32>,
    return
  }
  func.func @transform_0(%arg0: i32) -> (i32, i32, i32, i32) {
    %c0_i32 = arith.constant 0 : i32
    %c0_i32_0 = arith.constant 0 : i32
    %c0_i32_1 = arith.constant 0 : i32
    %c0_i32_2 = arith.constant 0 : i32
    return %arg0, %c0_i32, %c0_i32_0, %c0_i32_1 : i32, i32, i32, i32
  }
  func.func @transform_1(%arg0: i32) -> (i32, i32, i32, i32) {
    %c0_i32 = arith.constant 0 : i32
    %c0_i32_0 = arith.constant 0 : i32
    %c0_i32_1 = arith.constant 0 : i32
    %c0_i32_2 = arith.constant 0 : i32
    return %arg0, %c0_i32, %c0_i32_0, %c0_i32_1 : i32, i32, i32, i32
  }
  func.func @transform_2(%arg0: i32) -> (i32, i32, i32, i32) {
    %c0_i32 = arith.constant 0 : i32
    %c0_i32_0 = arith.constant 0 : i32
    %c0_i32_1 = arith.constant 0 : i32
    %c0_i32_2 = arith.constant 0 : i32
    return %arg0, %c0_i32, %c0_i32_0, %c0_i32_1 : i32, i32, i32, i32
  }
  func.func @transform_3(%arg0: i32) -> (i32, i32, i32) {
    %c0_i32 = arith.constant 0 : i32
    %c0_i32_0 = arith.constant 0 : i32
    %c0_i32_1 = arith.constant 0 : i32
    %c0_i32_2 = arith.constant 0 : i32
    return %c0_i32, %c0_i32_0, %c0_i32_1 : i32, i32, i32
  }
  func.func @transform_4(%arg0: i32) -> (i32, i32) {
    %c0_i32 = arith.constant 0 : i32
    %c0_i32_0 = arith.constant 0 : i32
    %c0_i32_1 = arith.constant 0 : i32
    return %c0_i32, %c0_i32_0 : i32, i32
  }
  func.func @transform_5(%arg0: i32) -> (i32, i32) {
    %c0_i32 = arith.constant 0 : i32
    %c0_i32_0 = arith.constant 0 : i32
    return %arg0, %c0_i32 : i32, i32
  }
  func.func @transform_6(%arg0: i32) -> (i32, i32) {
    %c0_i32 = arith.constant 0 : i32
    %c0_i32_0 = arith.constant 0 : i32
    %c0_i32_1 = arith.constant 0 : i32
    return %c0_i32, %c0_i32_0 : i32, i32
  }
  func.func @transform_7(%arg0: i32) -> (i32, i32) {
    %c0_i32 = arith.constant 0 : i32
    %c0_i32_0 = arith.constant 0 : i32
    %c0_i32_1 = arith.constant 0 : i32
    return %c0_i32, %c0_i32_0 : i32, i32
  }
}

module attributes {stable_mosaic.version = 11 : i64} {
  func.func @_bn_relu_kernel(%arg0: i32, %arg1: memref<512x128xbf16, #tpu.memory_space<vmem>>, %arg2: memref<1x128xf32, #tpu.memory_space<vmem>>, %arg3: memref<1x128xf32, #tpu.memory_space<vmem>>, %arg4: memref<512x128xbf16, #tpu.memory_space<vmem>>) attributes {dimension_semantics = [#tpu.dimension_semantics<parallel>], iteration_bounds = array<i64: 1>, scalar_prefetch = 0 : i64, scratch_operands = 0 : i64, tpu.core_type = #tpu.core_type<tc>, window_params = [{transform_indices = @transform_0, window_bounds = array<i64: 512, 128>}, {pipeline_mode = #tpu.pipeline_mode<synchronous>, transform_indices = @transform_1, window_bounds = array<i64: 1, 128>}, {pipeline_mode = #tpu.pipeline_mode<synchronous>, transform_indices = @transform_2, window_bounds = array<i64: 1, 128>}, {transform_indices = @transform_3, window_bounds = array<i64: 512, 128>}]} {
    %c0 = arith.constant 0 : index
    %c0_0 = arith.constant 0 : index
    %0 = vector.load %arg1[%c0, %c0_0] : memref<512x128xbf16, #tpu.memory_space<vmem>>, vector<512x128xbf16>
    %1 = arith.extf %0 : vector<512x128xbf16> to vector<512x128xf32>
    %c0_1 = arith.constant 0 : index
    %c0_2 = arith.constant 0 : index
    %2 = vector.load %arg2[%c0_1, %c0_2] : memref<1x128xf32, #tpu.memory_space<vmem>>, vector<1x128xf32>
    %3 = vector.broadcast %2 : vector<1x128xf32> to vector<512x128xf32>
    %4 = arith.mulf %1, %3 : vector<512x128xf32>
    %c0_3 = arith.constant 0 : index
    %c0_4 = arith.constant 0 : index
    %5 = vector.load %arg3[%c0_3, %c0_4] : memref<1x128xf32, #tpu.memory_space<vmem>>, vector<1x128xf32>
    %6 = vector.broadcast %5 : vector<1x128xf32> to vector<512x128xf32>
    %7 = arith.addf %4, %6 : vector<512x128xf32>
    %cst = arith.constant 0.000000e+00 : f32
    %8 = vector.broadcast %cst : f32 to vector<512x128xf32>
    %9 = arith.maximumf %7, %8 : vector<512x128xf32>
    %10 = arith.truncf %9 : vector<512x128xf32> to vector<512x128xbf16>
    %c0_5 = arith.constant 0 : index
    %c0_6 = arith.constant 0 : index
    %11 = vector.load %arg4[%c0_5, %c0_6] : memref<512x128xbf16, #tpu.memory_space<vmem>>, vector<512x128xbf16>
    tpu.vector_store %arg4[%c0_5, %c0_6], %10 {strides = array<i32>} : memref<512x128xbf16, #tpu.memory_space<vmem>>, vector<512x128xbf16>,
    return
  }
  func.func @transform_0(%arg0: i32) -> (i32, i32) {
    %c0_i32 = arith.constant 0 : i32
    %c0_i32_0 = arith.constant 0 : i32
    return %arg0, %c0_i32 : i32, i32
  }
  func.func @transform_1(%arg0: i32) -> (i32, i32) {
    %c0_i32 = arith.constant 0 : i32
    %c0_i32_0 = arith.constant 0 : i32
    %c0_i32_1 = arith.constant 0 : i32
    return %c0_i32, %c0_i32_0 : i32, i32
  }
  func.func @transform_2(%arg0: i32) -> (i32, i32) {
    %c0_i32 = arith.constant 0 : i32
    %c0_i32_0 = arith.constant 0 : i32
    %c0_i32_1 = arith.constant 0 : i32
    return %c0_i32, %c0_i32_0 : i32, i32
  }
  func.func @transform_3(%arg0: i32) -> (i32, i32) {
    %c0_i32 = arith.constant 0 : i32
    %c0_i32_0 = arith.constant 0 : i32
    return %arg0, %c0_i32 : i32, i32
  }
}

module attributes {stable_mosaic.version = 11 : i64} {
  func.func @_bn_relu_kernel(%arg0: i32, %arg1: memref<512x128xbf16, #tpu.memory_space<vmem>>, %arg2: memref<1x128xf32, #tpu.memory_space<vmem>>, %arg3: memref<1x128xf32, #tpu.memory_space<vmem>>, %arg4: memref<512x128xf32, #tpu.memory_space<vmem>>) attributes {dimension_semantics = [#tpu.dimension_semantics<parallel>], iteration_bounds = array<i64: 1>, scalar_prefetch = 0 : i64, scratch_operands = 0 : i64, tpu.core_type = #tpu.core_type<tc>, window_params = [{transform_indices = @transform_0, window_bounds = array<i64: 512, 128>}, {pipeline_mode = #tpu.pipeline_mode<synchronous>, transform_indices = @transform_1, window_bounds = array<i64: 1, 128>}, {pipeline_mode = #tpu.pipeline_mode<synchronous>, transform_indices = @transform_2, window_bounds = array<i64: 1, 128>}, {transform_indices = @transform_3, window_bounds = array<i64: 512, 128>}]} {
    %c0 = arith.constant 0 : index
    %c0_0 = arith.constant 0 : index
    %0 = vector.load %arg1[%c0, %c0_0] : memref<512x128xbf16, #tpu.memory_space<vmem>>, vector<512x128xbf16>
    %1 = arith.extf %0 : vector<512x128xbf16> to vector<512x128xf32>
    %c0_1 = arith.constant 0 : index
    %c0_2 = arith.constant 0 : index
    %2 = vector.load %arg2[%c0_1, %c0_2] : memref<1x128xf32, #tpu.memory_space<vmem>>, vector<1x128xf32>
    %3 = vector.broadcast %2 : vector<1x128xf32> to vector<512x128xf32>
    %4 = arith.mulf %1, %3 : vector<512x128xf32>
    %c0_3 = arith.constant 0 : index
    %c0_4 = arith.constant 0 : index
    %5 = vector.load %arg3[%c0_3, %c0_4] : memref<1x128xf32, #tpu.memory_space<vmem>>, vector<1x128xf32>
    %6 = vector.broadcast %5 : vector<1x128xf32> to vector<512x128xf32>
    %7 = arith.addf %4, %6 : vector<512x128xf32>
    %cst = arith.constant 0.000000e+00 : f32
    %8 = vector.broadcast %cst : f32 to vector<512x128xf32>
    %9 = arith.maximumf %7, %8 : vector<512x128xf32>
    %c0_5 = arith.constant 0 : index
    %c0_6 = arith.constant 0 : index
    %10 = vector.load %arg4[%c0_5, %c0_6] : memref<512x128xf32, #tpu.memory_space<vmem>>, vector<512x128xf32>
    tpu.vector_store %arg4[%c0_5, %c0_6], %9 {strides = array<i32>} : memref<512x128xf32, #tpu.memory_space<vmem>>, vector<512x128xf32>,
    return
  }
  func.func @transform_0(%arg0: i32) -> (i32, i32) {
    %c0_i32 = arith.constant 0 : i32
    %c0_i32_0 = arith.constant 0 : i32
    return %arg0, %c0_i32 : i32, i32
  }
  func.func @transform_1(%arg0: i32) -> (i32, i32) {
    %c0_i32 = arith.constant 0 : i32
    %c0_i32_0 = arith.constant 0 : i32
    %c0_i32_1 = arith.constant 0 : i32
    return %c0_i32, %c0_i32_0 : i32, i32
  }
  func.func @transform_2(%arg0: i32) -> (i32, i32) {
    %c0_i32 = arith.constant 0 : i32
    %c0_i32_0 = arith.constant 0 : i32
    %c0_i32_1 = arith.constant 0 : i32
    return %c0_i32, %c0_i32_0 : i32, i32
  }
  func.func @transform_3(%arg0: i32) -> (i32, i32) {
    %c0_i32 = arith.constant 0 : i32
    %c0_i32_0 = arith.constant 0 : i32
    return %arg0, %c0_i32 : i32, i32
  }
}

</mosaic_0001>

<llo_original>
// kernel: double_conv.5
$region0: #{double_conv.5}
  #allocation0 [shape = 'u32[]', space=smem, size = 0x4, offset = 0x4, fixed_abs, tag = 'smem constant byte address 0x4 - core index']
  #allocation1 [shape = 'u32[144,128]{1,0:T(1,128)}', space=vmem, size = 0x12000, scoped, tag = 'internal scratch']
  %s0 = inlined_call_operand.hbm [shape: bf16[512,128], index: 0, kind: input, shape index: {}]
  %s1 = inlined_call_operand.hbm [shape: f32[1,128], index: 1, kind: input, shape index: {}]
  %s2 = inlined_call_operand.hbm [shape: f32[1,128], index: 2, kind: input, shape index: {}]
  %s3 = inlined_call_operand.hbm [shape: bf16[512,128], index: 3, kind: output, shape index: {}]
  %s4 = sld [smem:[#allocation0]]
  $region34: #{double_conv.5} parent=0
    _
  %s6 = ssub.s32 1, %s4
  %s7 = scalar_select 0, %s6, %s4
  $region1: #{double_conv.5} parent=0
    #allocation2 [shape = 'u8[131072]{0}', space=vmem, size = 0x20000, scoped, tag = 'input window, operand 0, single buffered']
    #allocation3 [shape = 's32[1]{0}', space=sflag, size = 0x4, scoped, tag = 'scoped memory for double_conv.5']
    #allocation4 [shape = 's32[1]{0}', space=sflag, size = 0x4, scoped, tag = 'scoped memory for double_conv.5']
    #allocation5 [shape = 'u8[512]{0}', space=vmem, size = 0x400, scoped, tag = 'input window, operand 1, single buffered']
    #allocation6 [shape = 's32[1]{0}', space=sflag, size = 0x4, scoped, tag = 'scoped memory for double_conv.5']
    #allocation7 [shape = 'u8[512]{0}', space=vmem, size = 0x400, scoped, tag = 'input window, operand 2, single buffered']
    #allocation8 [shape = 'u8[131072]{0}', space=vmem, size = 0x20000, scoped, tag = 'output window, operand 0, single buffered']
    %8 = vsyncpa [#allocation3], 0
    %9 = vsyncpa [#allocation6], 0
    %10 = vsyncpa [#allocation4], 0
    // Predicated region
    $region2: #{double_conv.5} parent=1 // pred_check
      _
    $region3: #{double_conv.5} parent=1 // pred_check_branch
      %12 = sbr.rel (0) target = $region5
    $region4: #{double_conv.5} parent=1 // pred_region
      %s14 = ssub.s32 4096, 4096
      %15 = vsyncadd [#allocation3], %s14
      %s16 = sshll.u32 [#allocation2], 4
      %s17 = int_to_ptr.vmem [resolvable:$true] %s16
      %22 = dma.hbm_to_vmem [thread:$0]  %s0, 4096, %s17, [#allocation3], 64, 64, 4
    $region5: #{double_conv.5} parent=1 // pred_fallthru
      _
    // Predicated region
    $region6: #{double_conv.5} parent=1 // pred_check
      _
    $region7: #{double_conv.5} parent=1 // pred_check_branch
      %24 = sbr.rel (0) target = $region9
    $region8: #{double_conv.5} parent=1 // pred_region
      %s26 = ssub.s32 16, 16
      %27 = vsyncadd [#allocation6], %s26
      %s29 = sshll.u32 [#allocation5], 4
      %s30 = int_to_ptr.vmem [resolvable:$true] %s29
      %32 = dma.hbm_to_vmem [thread:$0]  %s1, 16, %s30, [#allocation6]
    $region9: #{double_conv.5} parent=1 // pred_fallthru
      _
    // Predicated region
    $region10: #{double_conv.5} parent=1 // pred_check
      _
    $region11: #{double_conv.5} parent=1 // pred_check_branch
      %34 = sbr.rel (0) target = $region13
    $region12: #{double_conv.5} parent=1 // pred_region
      %s36 = ssub.s32 16, 16
      %37 = vsyncadd [#allocation6], %s36
      %s39 = sshll.u32 [#allocation7], 4
      %s40 = int_to_ptr.vmem [resolvable:$true] %s39
      %42 = dma.hbm_to_vmem [thread:$0]  %s2, 16, %s40, [#allocation6]
    $region13: #{double_conv.5} parent=1 // pred_fallthru
      _
    // Predicated region
    $region14: #{double_conv.5} parent=1 // pred_check
      _
    $region15: #{double_conv.5} parent=1 // pred_check_branch
      %44 = sbr.rel (0) target = $region17
    $region16: #{double_conv.5} parent=1 // pred_region
      %45 = dma.done [#allocation3], 4096
    $region17: #{double_conv.5} parent=1 // pred_fallthru
      _
    // Predicated region
    $region18: #{double_conv.5} parent=1 // pred_check
      _
    $region19: #{double_conv.5} parent=1 // pred_check_branch
      %47 = sbr.rel (0) target = $region21
    $region20: #{double_conv.5} parent=1 // pred_region
      %48 = dma.done [#allocation6], 16
    $region21: #{double_conv.5} parent=1 // pred_fallthru
      _
    // Predicated region
    $region22: #{double_conv.5} parent=1 // pred_check
      _
    $region23: #{double_conv.5} parent=1 // pred_check_branch
      %50 = sbr.rel (0) target = $region25
    $region24: #{double_conv.5} parent=1 // pred_region
      %51 = dma.done [#allocation6], 16
    $region25: #{double_conv.5} parent=1 // pred_fallthru
      _
    %v52 = vld [vmem:[#allocation2] sm:$0xf]
    %v53 = vld [vmem:[#allocation2 + $0x4] sm:$0xf]
    %v54 = vld [vmem:[#allocation2 + $0x8] sm:$0xf]
    %v55 = vld [vmem:[#allocation2 + $0xc] sm:$0xf]
    %v56 = vld [vmem:[#allocation2 + $0x10] sm:$0xf]
    %v57 = vld [vmem:[#allocation2 + $0x14] sm:$0xf]
    %v58 = vld [vmem:[#allocation2 + $0x18] sm:$0xf]
    %v59 = vld [vmem:[#allocation2 + $0x1c] sm:$0xf]
    %v60 = vld [vmem:[#allocation2 + $0x20] sm:$0xf]
    %v61 = vld [vmem:[#allocation2 + $0x24] sm:$0xf]
    %v62 = vld [vmem:[#allocation2 + $0x28] sm:$0xf]
    %v63 = vld [vmem:[#allocation2 + $0x2c] sm:$0xf]
    %v64 = vld [vmem:[#allocation2 + $0x30] sm:$0xf]
    %v65 = vld [vmem:[#allocation2 + $0x34] sm:$0xf]
    %v66 = vld [vmem:[#allocation2 + $0x38] sm:$0xf]
    %v67 = vld [vmem:[#allocation2 + $0x3c] sm:$0xf]
    %v68 = vld [vmem:[#allocation2 + $0x40] sm:$0xf]
    %v69 = vld [vmem:[#allocation2 + $0x44] sm:$0xf]
    %v70 = vld [vmem:[#allocation2 + $0x48] sm:$0xf]
    %v71 = vld [vmem:[#allocation2 + $0x4c] sm:$0xf]
    %v72 = vld [vmem:[#allocation2 + $0x50] sm:$0xf]
    %v73 = vld [vmem:[#allocation2 + $0x54] sm:$0xf]
    %v74 = vld [vmem:[#allocation2 + $0x58] sm:$0xf]
    %v75 = vld [vmem:[#allocation2 + $0x5c] sm:$0xf]
    %v76 = vld [vmem:[#allocation2 + $0x60] sm:$0xf]
    %v77 = vld [vmem:[#allocation2 + $0x64] sm:$0xf]
    %v78 = vld [vmem:[#allocation2 + $0x68] sm:$0xf]
    %v79 = vld [vmem:[#allocation2 + $0x6c] sm:$0xf]
    %v80 = vld [vmem:[#allocation2 + $0x70] sm:$0xf]
    %v81 = vld [vmem:[#allocation2 + $0x74] sm:$0xf]
    %v82 = vld [vmem:[#allocation2 + $0x78] sm:$0xf]
    %v83 = vld [vmem:[#allocation2 + $0x7c] sm:$0xf]
    %v84 = vld [vmem:[#allocation2 + $0x80] sm:$0xf]
    %v85 = vld [vmem:[#allocation2 + $0x84] sm:$0xf]
    %v86 = vld [vmem:[#allocation2 + $0x88] sm:$0xf]
    %v87 = vld [vmem:[#allocation2 + $0x8c] sm:$0xf]
    %v88 = vld [vmem:[#allocation2 + $0x90] sm:$0xf]
    %v89 = vld [vmem:[#allocation2 + $0x94] sm:$0xf]
    %v90 = vld [vmem:[#allocation2 + $0x98] sm:$0xf]
    %v91 = vld [vmem:[#allocation2 + $0x9c] sm:$0xf]
    %v92 = vld [vmem:[#allocation2 + $0xa0] sm:$0xf]
    %v93 = vld [vmem:[#allocation2 + $0xa4] sm:$0xf]
    %v94 = vld [vmem:[#allocation2 + $0xa8] sm:$0xf]
    %v95 = vld [vmem:[#allocation2 + $0xac] sm:$0xf]
    %v96 = vld [vmem:[#allocation2 + $0xb0] sm:$0xf]
    %v97 = vld [vmem:[#allocation2 + $0xb4] sm:$0xf]
    %v98 = vld [vmem:[#allocation2 + $0xb8] sm:$0xf]
    %v99 = vld [vmem:[#allocation2 + $0xbc] sm:$0xf]
    %v100 = vld [vmem:[#allocation2 + $0xc0] sm:$0xf]
    %v101 = vld [vmem:[#allocation2 + $0xc4] sm:$0xf]
    %v102 = vld [vmem:[#allocation2 + $0xc8] sm:$0xf]
    %v103 = vld [vmem:[#allocation2 + $0xcc] sm:$0xf]
    %v104 = vld [vmem:[#allocation2 + $0xd0] sm:$0xf]
    %v105 = vld [vmem:[#allocation2 + $0xd4] sm:$0xf]
    %v106 = vld [vmem:[#allocation2 + $0xd8] sm:$0xf]
    %v107 = vld [vmem:[#allocation2 + $0xdc] sm:$0xf]
    %v108 = vld [vmem:[#allocation2 + $0xe0] sm:$0xf]
    %v109 = vld [vmem:[#allocation2 + $0xe4] sm:$0xf]
    %v110 = vld [vmem:[#allocation2 + $0xe8] sm:$0xf]
    %v111 = vld [vmem:[#allocation2 + $0xec] sm:$0xf]
    %v112 = vld [vmem:[#allocation2 + $0xf0] sm:$0xf]
    %v113 = vld [vmem:[#allocation2 + $0xf4] sm:$0xf]
    %v114 = vld [vmem:[#allocation2 + $0xf8] sm:$0xf]
    %v115 = vld [vmem:[#allocation2 + $0xfc] sm:$0xf]
    %v116 = vunpack.c.l.bf16 %v52
    %v117 = vunpack.c.l.bf16 %v53
    %v118 = vunpack.c.l.bf16 %v54
    %v119 = vunpack.c.l.bf16 %v55
    %v120 = vunpack.c.l.bf16 %v56
    %v121 = vunpack.c.l.bf16 %v57
    %v122 = vunpack.c.l.bf16 %v58
    %v123 = vunpack.c.l.bf16 %v59
    %v124 = vunpack.c.l.bf16 %v60
    %v125 = vunpack.c.l.bf16 %v61
    %v126 = vunpack.c.l.bf16 %v62
    %v127 = vunpack.c.l.bf16 %v63
    %v128 = vunpack.c.l.bf16 %v64
    %v129 = vunpack.c.l.bf16 %v65
    %v130 = vunpack.c.l.bf16 %v66
    %v131 = vunpack.c.l.bf16 %v67
    %v132 = vunpack.c.l.bf16 %v68
    %v133 = vunpack.c.l.bf16 %v69
    %v134 = vunpack.c.l.bf16 %v70
    %v135 = vunpack.c.l.bf16 %v71
    %v136 = vunpack.c.l.bf16 %v72
    %v137 = vunpack.c.l.bf16 %v73
    %v138 = vunpack.c.l.bf16 %v74
    %v139 = vunpack.c.l.bf16 %v75
    %v140 = vunpack.c.l.bf16 %v76
    %v141 = vunpack.c.l.bf16 %v77
    %v142 = vunpack.c.l.bf16 %v78
    %v143 = vunpack.c.l.bf16 %v79
    %v144 = vunpack.c.l.bf16 %v80
    %v145 = vunpack.c.l.bf16 %v81
    %v146 = vunpack.c.l.bf16 %v82
    %v147 = vunpack.c.l.bf16 %v83
    %v148 = vunpack.c.l.bf16 %v84
    %v149 = vunpack.c.l.bf16 %v85
    %v150 = vunpack.c.l.bf16 %v86
    %v151 = vunpack.c.l.bf16 %v87
    %v152 = vunpack.c.l.bf16 %v88
    %v153 = vunpack.c.l.bf16 %v89
    %v154 = vunpack.c.l.bf16 %v90
    %v155 = vunpack.c.l.bf16 %v91
    %v156 = vunpack.c.l.bf16 %v92
    %v157 = vunpack.c.l.bf16 %v93
    %v158 = vunpack.c.l.bf16 %v94
    %v159 = vunpack.c.l.bf16 %v95
    %v160 = vunpack.c.l.bf16 %v96
    %v161 = vunpack.c.l.bf16 %v97
    %v162 = vunpack.c.l.bf16 %v98
    %v163 = vunpack.c.l.bf16 %v99
    %v164 = vunpack.c.l.bf16 %v100
    %v165 = vunpack.c.l.bf16 %v101
    %v166 = vunpack.c.l.bf16 %v102
    %v167 = vunpack.c.l.bf16 %v103
    %v168 = vunpack.c.l.bf16 %v104
    %v169 = vunpack.c.l.bf16 %v105
    %v170 = vunpack.c.l.bf16 %v106
    %v171 = vunpack.c.l.bf16 %v107
    %v172 = vunpack.c.l.bf16 %v108
    %v173 = vunpack.c.l.bf16 %v109
    %v174 = vunpack.c.l.bf16 %v110
    %v175 = vunpack.c.l.bf16 %v111
    %v176 = vunpack.c.l.bf16 %v112
    %v177 = vunpack.c.l.bf16 %v113
    %v178 = vunpack.c.l.bf16 %v114
    %v179 = vunpack.c.l.bf16 %v115
    %v180 = vld [vmem:[#allocation5] sm:$0x1]
    %v182 = vlaneseq
    %v183 = vshrl.u32 %v182, 7
    %v184 = vsub.s32 0, %v183
    %v185 = vrot.slane %v180, %v184
    %v187 = vmul.f32 %v116, %v185
    %v188 = vmul.f32 %v117, %v185
    %v189 = vmul.f32 %v118, %v185
    %v190 = vmul.f32 %v119, %v185
    %v191 = vmul.f32 %v120, %v185
    %v192 = vmul.f32 %v121, %v185
    %v193 = vmul.f32 %v122, %v185
    %v194 = vmul.f32 %v123, %v185
    %v195 = vmul.f32 %v124, %v185
    %v196 = vmul.f32 %v125, %v185
    %v197 = vmul.f32 %v126, %v185
    %v198 = vmul.f32 %v127, %v185
    %v199 = vmul.f32 %v128, %v185
    %v200 = vmul.f32 %v129, %v185
    %v201 = vmul.f32 %v130, %v185
    %v202 = vmul.f32 %v131, %v185
    %v203 = vmul.f32 %v132, %v185
    %v204 = vmul.f32 %v133, %v185
    %v205 = vmul.f32 %v134, %v185
    %v206 = vmul.f32 %v135, %v185
    %v207 = vmul.f32 %v136, %v185
    %v208 = vmul.f32 %v137, %v185
    %v209 = vmul.f32 %v138, %v185
    %v210 = vmul.f32 %v139, %v185
    %v211 = vmul.f32 %v140, %v185
    %v212 = vmul.f32 %v141, %v185
    %v213 = vmul.f32 %v142, %v185
    %v214 = vmul.f32 %v143, %v185
    %v215 = vmul.f32 %v144, %v185
    %v216 = vmul.f32 %v145, %v185
    %v217 = vmul.f32 %v146, %v185
    %v218 = vmul.f32 %v147, %v185
    %v219 = vmul.f32 %v148, %v185
    %v220 = vmul.f32 %v149, %v185
    %v221 = vmul.f32 %v150, %v185
    %v222 = vmul.f32 %v151, %v185
    %v223 = vmul.f32 %v152, %v185
    %v224 = vmul.f32 %v153, %v185
    %v225 = vmul.f32 %v154, %v185
    %v226 = vmul.f32 %v155, %v185
    %v227 = vmul.f32 %v156, %v185
    %v228 = vmul.f32 %v157, %v185
    %v229 = vmul.f32 %v158, %v185
    %v230 = vmul.f32 %v159, %v185
    %v231 = vmul.f32 %v160, %v185
    %v232 = vmul.f32 %v161, %v185
    %v233 = vmul.f32 %v162, %v185
    %v234 = vmul.f32 %v163, %v185
    %v235 = vmul.f32 %v164, %v185
    %v236 = vmul.f32 %v165, %v185
    %v237 = vmul.f32 %v166, %v185
    %v238 = vmul.f32 %v167, %v185
    %v239 = vmul.f32 %v168, %v185
    %v240 = vmul.f32 %v169, %v185
    %v241 = vmul.f32 %v170, %v185
    %v242 = vmul.f32 %v171, %v185
    %v243 = vmul.f32 %v172, %v185
    %v244 = vmul.f32 %v173, %v185
    %v245 = vmul.f32 %v174, %v185
    %v246 = vmul.f32 %v175, %v185
    %v247 = vmul.f32 %v176, %v185
    %v248 = vmul.f32 %v177, %v185
    %v249 = vmul.f32 %v178, %v185
    %v250 = vmul.f32 %v179, %v185
    %v251 = vld [vmem:[#allocation7] sm:$0x1]
    %v253 = vlaneseq
    %v254 = vshrl.u32 %v253, 7
    %v255 = vsub.s32 0, %v254
    %v256 = vrot.slane %v251, %v255
    %v258 = vadd.f32 %v187, %v256
    %v259 = vadd.f32 %v188, %v256
    %v260 = vadd.f32 %v189, %v256
    %v261 = vadd.f32 %v190, %v256
    %v262 = vadd.f32 %v191, %v256
    %v263 = vadd.f32 %v192, %v256
    %v264 = vadd.f32 %v193, %v256
    %v265 = vadd.f32 %v194, %v256
    %v266 = vadd.f32 %v195, %v256
    %v267 = vadd.f32 %v196, %v256
    %v268 = vadd.f32 %v197, %v256
    %v269 = vadd.f32 %v198, %v256
    %v270 = vadd.f32 %v199, %v256
    %v271 = vadd.f32 %v200, %v256
    %v272 = vadd.f32 %v201, %v256
    %v273 = vadd.f32 %v202, %v256
    %v274 = vadd.f32 %v203, %v256
    %v275 = vadd.f32 %v204, %v256
    %v276 = vadd.f32 %v205, %v256
    %v277 = vadd.f32 %v206, %v256
    %v278 = vadd.f32 %v207, %v256
    %v279 = vadd.f32 %v208, %v256
    %v280 = vadd.f32 %v209, %v256
    %v281 = vadd.f32 %v210, %v256
    %v282 = vadd.f32 %v211, %v256
    %v283 = vadd.f32 %v212, %v256
    %v284 = vadd.f32 %v213, %v256
    %v285 = vadd.f32 %v214, %v256
    %v286 = vadd.f32 %v215, %v256
    %v287 = vadd.f32 %v216, %v256
    %v288 = vadd.f32 %v217, %v256
    %v289 = vadd.f32 %v218, %v256
    %v290 = vadd.f32 %v219, %v256
    %v291 = vadd.f32 %v220, %v256
    %v292 = vadd.f32 %v221, %v256
    %v293 = vadd.f32 %v222, %v256
    %v294 = vadd.f32 %v223, %v256
    %v295 = vadd.f32 %v224, %v256
    %v296 = vadd.f32 %v225, %v256
    %v297 = vadd.f32 %v226, %v256
    %v298 = vadd.f32 %v227, %v256
    %v299 = vadd.f32 %v228, %v256
    %v300 = vadd.f32 %v229, %v256
    %v301 = vadd.f32 %v230, %v256
    %v302 = vadd.f32 %v231, %v256
    %v303 = vadd.f32 %v232, %v256
    %v304 = vadd.f32 %v233, %v256
    %v305 = vadd.f32 %v234, %v256
    %v306 = vadd.f32 %v235, %v256
    %v307 = vadd.f32 %v236, %v256
    %v308 = vadd.f32 %v237, %v256
    %v309 = vadd.f32 %v238, %v256
    %v310 = vadd.f32 %v239, %v256
    %v311 = vadd.f32 %v240, %v256
    %v312 = vadd.f32 %v241, %v256
    %v313 = vadd.f32 %v242, %v256
    %v314 = vadd.f32 %v243, %v256
    %v315 = vadd.f32 %v244, %v256
    %v316 = vadd.f32 %v245, %v256
    %v317 = vadd.f32 %v246, %v256
    %v318 = vadd.f32 %v247, %v256
    %v319 = vadd.f32 %v248, %v256
    %v320 = vadd.f32 %v249, %v256
    %v321 = vadd.f32 %v250, %v256
    %v322 = vmax.f32 %v258, 0.0
    %v323 = vmax.f32 %v259, 0.0
    %v324 = vmax.f32 %v260, 0.0
    %v325 = vmax.f32 %v261, 0.0
    %v326 = vmax.f32 %v262, 0.0
    %v327 = vmax.f32 %v263, 0.0
    %v328 = vmax.f32 %v264, 0.0
    %v329 = vmax.f32 %v265, 0.0
    %v330 = vmax.f32 %v266, 0.0
    %v331 = vmax.f32 %v267, 0.0
    %v332 = vmax.f32 %v268, 0.0
    %v333 = vmax.f32 %v269, 0.0
    %v334 = vmax.f32 %v270, 0.0
    %v335 = vmax.f32 %v271, 0.0
    %v336 = vmax.f32 %v272, 0.0
    %v337 = vmax.f32 %v273, 0.0
    %v338 = vmax.f32 %v274, 0.0
    %v339 = vmax.f32 %v275, 0.0
    %v340 = vmax.f32 %v276, 0.0
    %v341 = vmax.f32 %v277, 0.0
    %v342 = vmax.f32 %v278, 0.0
    %v343 = vmax.f32 %v279, 0.0
    %v344 = vmax.f32 %v280, 0.0
    %v345 = vmax.f32 %v281, 0.0
    %v346 = vmax.f32 %v282, 0.0
    %v347 = vmax.f32 %v283, 0.0
    %v348 = vmax.f32 %v284, 0.0
    %v349 = vmax.f32 %v285, 0.0
    %v350 = vmax.f32 %v286, 0.0
    %v351 = vmax.f32 %v287, 0.0
    %v352 = vmax.f32 %v288, 0.0
    %v353 = vmax.f32 %v289, 0.0
    %v354 = vmax.f32 %v290, 0.0
    %v355 = vmax.f32 %v291, 0.0
    %v356 = vmax.f32 %v292, 0.0
    %v357 = vmax.f32 %v293, 0.0
    %v358 = vmax.f32 %v294, 0.0
    %v359 = vmax.f32 %v295, 0.0
    %v360 = vmax.f32 %v296, 0.0
    %v361 = vmax.f32 %v297, 0.0
    %v362 = vmax.f32 %v298, 0.0
    %v363 = vmax.f32 %v299, 0.0
    %v364 = vmax.f32 %v300, 0.0
    %v365 = vmax.f32 %v301, 0.0
    %v366 = vmax.f32 %v302, 0.0
    %v367 = vmax.f32 %v303, 0.0
    %v368 = vmax.f32 %v304, 0.0
    %v369 = vmax.f32 %v305, 0.0
    %v370 = vmax.f32 %v306, 0.0
    %v371 = vmax.f32 %v307, 0.0
    %v372 = vmax.f32 %v308, 0.0
    %v373 = vmax.f32 %v309, 0.0
    %v374 = vmax.f32 %v310, 0.0
    %v375 = vmax.f32 %v311, 0.0
    %v376 = vmax.f32 %v312, 0.0
    %v377 = vmax.f32 %v313, 0.0
    %v378 = vmax.f32 %v314, 0.0
    %v379 = vmax.f32 %v315, 0.0
    %v380 = vmax.f32 %v316, 0.0
    %v381 = vmax.f32 %v317, 0.0
    %v382 = vmax.f32 %v318, 0.0
    %v383 = vmax.f32 %v319, 0.0
    %v384 = vmax.f32 %v320, 0.0
    %v385 = vmax.f32 %v321, 0.0
    %v386 = vpack.c.bf16 %v323, %v322
    %v387 = vpack.c.bf16 %v325, %v324
    %v388 = vpack.c.bf16 %v327, %v326
    %v389 = vpack.c.bf16 %v329, %v328
    %v390 = vpack.c.bf16 %v331, %v330
    %v391 = vpack.c.bf16 %v333, %v332
    %v392 = vpack.c.bf16 %v335, %v334
    %v393 = vpack.c.bf16 %v337, %v336
    %v394 = vpack.c.bf16 %v339, %v338
    %v395 = vpack.c.bf16 %v341, %v340
    %v396 = vpack.c.bf16 %v343, %v342
    %v397 = vpack.c.bf16 %v345, %v344
    %v398 = vpack.c.bf16 %v347, %v346
    %v399 = vpack.c.bf16 %v349, %v348
    %v400 = vpack.c.bf16 %v351, %v350
    %v401 = vpack.c.bf16 %v353, %v352
    %v402 = vpack.c.bf16 %v355, %v354
    %v403 = vpack.c.bf16 %v357, %v356
    %v404 = vpack.c.bf16 %v359, %v358
    %v405 = vpack.c.bf16 %v361, %v360
    %v406 = vpack.c.bf16 %v363, %v362
    %v407 = vpack.c.bf16 %v365, %v364
    %v408 = vpack.c.bf16 %v367, %v366
    %v409 = vpack.c.bf16 %v369, %v368
    %v410 = vpack.c.bf16 %v371, %v370
    %v411 = vpack.c.bf16 %v373, %v372
    %v412 = vpack.c.bf16 %v375, %v374
    %v413 = vpack.c.bf16 %v377, %v376
    %v414 = vpack.c.bf16 %v379, %v378
    %v415 = vpack.c.bf16 %v381, %v380
    %v416 = vpack.c.bf16 %v383, %v382
    %v417 = vpack.c.bf16 %v385, %v384
    %v450 = vunpack.c.l.b16 %v386
    %v451 = vunpack.c.h.b16 %v386
    %v452 = vunpack.c.l.b16 %v387
    %v453 = vunpack.c.h.b16 %v387
    %v454 = vunpack.c.l.b16 %v388
    %v455 = vunpack.c.h.b16 %v388
    %v456 = vunpack.c.l.b16 %v389
    %v457 = vunpack.c.h.b16 %v389
    %v458 = vunpack.c.l.b16 %v390
    %v459 = vunpack.c.h.b16 %v390
    %v460 = vunpack.c.l.b16 %v391
    %v461 = vunpack.c.h.b16 %v391
    %v462 = vunpack.c.l.b16 %v392
    %v463 = vunpack.c.h.b16 %v392
    %v464 = vunpack.c.l.b16 %v393
    %v465 = vunpack.c.h.b16 %v393
    %v466 = vunpack.c.l.b16 %v394
    %v467 = vunpack.c.h.b16 %v394
    %v468 = vunpack.c.l.b16 %v395
    %v469 = vunpack.c.h.b16 %v395
    %v470 = vunpack.c.l.b16 %v396
    %v471 = vunpack.c.h.b16 %v396
    %v472 = vunpack.c.l.b16 %v397
    %v473 = vunpack.c.h.b16 %v397
    %v474 = vunpack.c.l.b16 %v398
    %v475 = vunpack.c.h.b16 %v398
    %v476 = vunpack.c.l.b16 %v399
    %v477 = vunpack.c.h.b16 %v399
    %v478 = vunpack.c.l.b16 %v400
    %v479 = vunpack.c.h.b16 %v400
    %v480 = vunpack.c.l.b16 %v401
    %v481 = vunpack.c.h.b16 %v401
    %v482 = vunpack.c.l.b16 %v402
    %v483 = vunpack.c.h.b16 %v402
    %v484 = vunpack.c.l.b16 %v403
    %v485 = vunpack.c.h.b16 %v403
    %v486 = vunpack.c.l.b16 %v404
    %v487 = vunpack.c.h.b16 %v404
    %v488 = vunpack.c.l.b16 %v405
    %v489 = vunpack.c.h.b16 %v405
    %v490 = vunpack.c.l.b16 %v406
    %v491 = vunpack.c.h.b16 %v406
    %v492 = vunpack.c.l.b16 %v407
    %v493 = vunpack.c.h.b16 %v407
    %v494 = vunpack.c.l.b16 %v408
    %v495 = vunpack.c.h.b16 %v408
    %v496 = vunpack.c.l.b16 %v409
    %v497 = vunpack.c.h.b16 %v409
    %v498 = vunpack.c.l.b16 %v410
    %v499 = vunpack.c.h.b16 %v410
    %v500 = vunpack.c.l.b16 %v411
    %v501 = vunpack.c.h.b16 %v411
    %v502 = vunpack.c.l.b16 %v412
    %v503 = vunpack.c.h.b16 %v412
    %v504 = vunpack.c.l.b16 %v413
    %v505 = vunpack.c.h.b16 %v413
    %v506 = vunpack.c.l.b16 %v414
    %v507 = vunpack.c.h.b16 %v414
    %v508 = vunpack.c.l.b16 %v415
    %v509 = vunpack.c.h.b16 %v415
    %v510 = vunpack.c.l.b16 %v416
    %v511 = vunpack.c.h.b16 %v416
    %v512 = vunpack.c.l.b16 %v417
    %v513 = vunpack.c.h.b16 %v417
    %v514 = vpack.c.b16 %v450, %v450
    %v515 = vpack.c.b16 %v451, %v451
    %v516 = vpack.c.b16 %v452, %v452
    %v517 = vpack.c.b16 %v453, %v453
    %v518 = vpack.c.b16 %v454, %v454
    %v519 = vpack.c.b16 %v455, %v455
    %v520 = vpack.c.b16 %v456, %v456
    %v521 = vpack.c.b16 %v457, %v457
    %v522 = vpack.c.b16 %v458, %v458
    %v523 = vpack.c.b16 %v459, %v459
    %v524 = vpack.c.b16 %v460, %v460
    %v525 = vpack.c.b16 %v461, %v461
    %v526 = vpack.c.b16 %v462, %v462
    %v527 = vpack.c.b16 %v463, %v463
    %v528 = vpack.c.b16 %v464, %v464
    %v529 = vpack.c.b16 %v465, %v465
    %v530 = vpack.c.b16 %v466, %v466
    %v531 = vpack.c.b16 %v467, %v467
    %v532 = vpack.c.b16 %v468, %v468
    %v533 = vpack.c.b16 %v469, %v469
    %v534 = vpack.c.b16 %v470, %v470
    %v535 = vpack.c.b16 %v471, %v471
    %v536 = vpack.c.b16 %v472, %v472
    %v537 = vpack.c.b16 %v473, %v473
    %v538 = vpack.c.b16 %v474, %v474
    %v539 = vpack.c.b16 %v475, %v475
    %v540 = vpack.c.b16 %v476, %v476
    %v541 = vpack.c.b16 %v477, %v477
    %v542 = vpack.c.b16 %v478, %v478
    %v543 = vpack.c.b16 %v479, %v479
    %v544 = vpack.c.b16 %v480, %v480
    %v545 = vpack.c.b16 %v481, %v481
    %v546 = vpack.c.b16 %v482, %v482
    %v547 = vpack.c.b16 %v483, %v483
    %v548 = vpack.c.b16 %v484, %v484
    %v549 = vpack.c.b16 %v485, %v485
    %v550 = vpack.c.b16 %v486, %v486
    %v551 = vpack.c.b16 %v487, %v487
    %v552 = vpack.c.b16 %v488, %v488
    %v553 = vpack.c.b16 %v489, %v489
    %v554 = vpack.c.b16 %v490, %v490
    %v555 = vpack.c.b16 %v491, %v491
    %v556 = vpack.c.b16 %v492, %v492
    %v557 = vpack.c.b16 %v493, %v493
    %v558 = vpack.c.b16 %v494, %v494
    %v559 = vpack.c.b16 %v495, %v495
    %v560 = vpack.c.b16 %v496, %v496
    %v561 = vpack.c.b16 %v497, %v497
    %v562 = vpack.c.b16 %v498, %v498
    %v563 = vpack.c.b16 %v499, %v499
    %v564 = vpack.c.b16 %v500, %v500
    %v565 = vpack.c.b16 %v501, %v501
    %v566 = vpack.c.b16 %v502, %v502
    %v567 = vpack.c.b16 %v503, %v503
    %v568 = vpack.c.b16 %v504, %v504
    %v569 = vpack.c.b16 %v505, %v505
    %v570 = vpack.c.b16 %v506, %v506
    %v571 = vpack.c.b16 %v507, %v507
    %v572 = vpack.c.b16 %v508, %v508
    %v573 = vpack.c.b16 %v509, %v509
    %v574 = vpack.c.b16 %v510, %v510
    %v575 = vpack.c.b16 %v511, %v511
    %v576 = vpack.c.b16 %v512, %v512
    %v577 = vpack.c.b16 %v513, %v513
    %642 = vst [vmem:[#allocation8] sm:$0xf] %v514
    %643 = vst [vmem:[#allocation8 + $0x4] sm:$0xf] %v515
    %644 = vst [vmem:[#allocation8 + $0x8] sm:$0xf] %v516
    %645 = vst [vmem:[#allocation8 + $0xc] sm:$0xf] %v517
    %646 = vst [vmem:[#allocation8 + $0x10] sm:$0xf] %v518
    %647 = vst [vmem:[#allocation8 + $0x14] sm:$0xf] %v519
    %648 = vst [vmem:[#allocation8 + $0x18] sm:$0xf] %v520
    %649 = vst [vmem:[#allocation8 + $0x1c] sm:$0xf] %v521
    %650 = vst [vmem:[#allocation8 + $0x20] sm:$0xf] %v522
    %651 = vst [vmem:[#allocation8 + $0x24] sm:$0xf] %v523
    %652 = vst [vmem:[#allocation8 + $0x28] sm:$0xf] %v524
    %653 = vst [vmem:[#allocation8 + $0x2c] sm:$0xf] %v525
    %654 = vst [vmem:[#allocation8 + $0x30] sm:$0xf] %v526
    %655 = vst [vmem:[#allocation8 + $0x34] sm:$0xf] %v527
    %656 = vst [vmem:[#allocation8 + $0x38] sm:$0xf] %v528
    %657 = vst [vmem:[#allocation8 + $0x3c] sm:$0xf] %v529
    %658 = vst [vmem:[#allocation8 + $0x40] sm:$0xf] %v530
    %659 = vst [vmem:[#allocation8 + $0x44] sm:$0xf] %v531
    %660 = vst [vmem:[#allocation8 + $0x48] sm:$0xf] %v532
    %661 = vst [vmem:[#allocation8 + $0x4c] sm:$0xf] %v533
    %662 = vst [vmem:[#allocation8 + $0x50] sm:$0xf] %v534
    %663 = vst [vmem:[#allocation8 + $0x54] sm:$0xf] %v535
    %664 = vst [vmem:[#allocation8 + $0x58] sm:$0xf] %v536
    %665 = vst [vmem:[#allocation8 + $0x5c] sm:$0xf] %v537
    %666 = vst [vmem:[#allocation8 + $0x60] sm:$0xf] %v538
    %667 = vst [vmem:[#allocation8 + $0x64] sm:$0xf] %v539
    %668 = vst [vmem:[#allocation8 + $0x68] sm:$0xf] %v540
    %669 = vst [vmem:[#allocation8 + $0x6c] sm:$0xf] %v541
    %670 = vst [vmem:[#allocation8 + $0x70] sm:$0xf] %v542
    %671 = vst [vmem:[#allocation8 + $0x74] sm:$0xf] %v543
    %672 = vst [vmem:[#allocation8 + $0x78] sm:$0xf] %v544
    %673 = vst [vmem:[#allocation8 + $0x7c] sm:$0xf] %v545
    %674 = vst [vmem:[#allocation8 + $0x80] sm:$0xf] %v546
    %675 = vst [vmem:[#allocation8 + $0x84] sm:$0xf] %v547
    %676 = vst [vmem:[#allocation8 + $0x88] sm:$0xf] %v548
    %677 = vst [vmem:[#allocation8 + $0x8c] sm:$0xf] %v549
    %678 = vst [vmem:[#allocation8 + $0x90] sm:$0xf] %v550
    %679 = vst [vmem:[#allocation8 + $0x94] sm:$0xf] %v551
    %680 = vst [vmem:[#allocation8 + $0x98] sm:$0xf] %v552
    %681 = vst [vmem:[#allocation8 + $0x9c] sm:$0xf] %v553
    %682 = vst [vmem:[#allocation8 + $0xa0] sm:$0xf] %v554
    %683 = vst [vmem:[#allocation8 + $0xa4] sm:$0xf] %v555
    %684 = vst [vmem:[#allocation8 + $0xa8] sm:$0xf] %v556
    %685 = vst [vmem:[#allocation8 + $0xac] sm:$0xf] %v557
    %686 = vst [vmem:[#allocation8 + $0xb0] sm:$0xf] %v558
    %687 = vst [vmem:[#allocation8 + $0xb4] sm:$0xf] %v559
    %688 = vst [vmem:[#allocation8 + $0xb8] sm:$0xf] %v560
    %689 = vst [vmem:[#allocation8 + $0xbc] sm:$0xf] %v561
    %690 = vst [vmem:[#allocation8 + $0xc0] sm:$0xf] %v562
    %691 = vst [vmem:[#allocation8 + $0xc4] sm:$0xf] %v563
    %692 = vst [vmem:[#allocation8 + $0xc8] sm:$0xf] %v564
    %693 = vst [vmem:[#allocation8 + $0xcc] sm:$0xf] %v565
    %694 = vst [vmem:[#allocation8 + $0xd0] sm:$0xf] %v566
    %695 = vst [vmem:[#allocation8 + $0xd4] sm:$0xf] %v567
    %696 = vst [vmem:[#allocation8 + $0xd8] sm:$0xf] %v568
    %697 = vst [vmem:[#allocation8 + $0xdc] sm:$0xf] %v569
    %698 = vst [vmem:[#allocation8 + $0xe0] sm:$0xf] %v570
    %699 = vst [vmem:[#allocation8 + $0xe4] sm:$0xf] %v571
    %700 = vst [vmem:[#allocation8 + $0xe8] sm:$0xf] %v572
    %701 = vst [vmem:[#allocation8 + $0xec] sm:$0xf] %v573
    %702 = vst [vmem:[#allocation8 + $0xf0] sm:$0xf] %v574
    %703 = vst [vmem:[#allocation8 + $0xf4] sm:$0xf] %v575
    %704 = vst [vmem:[#allocation8 + $0xf8] sm:$0xf] %v576
    %705 = vst [vmem:[#allocation8 + $0xfc] sm:$0xf] %v577
    // Predicated region
    $region26: #{double_conv.5} parent=1 // pred_check
      _
    $region27: #{double_conv.5} parent=1 // pred_check_branch
      %707 = sbr.rel (0) target = $region29
    $region28: #{double_conv.5} parent=1 // pred_region
      %s709 = ssub.s32 4096, 4096
      %710 = vsyncadd [#allocation4], %s709
      %s711 = sshll.u32 [#allocation8], 4
      %s712 = int_to_ptr.vmem [resolvable:$true] %s711
      %717 = dma.vmem_to_hbm [thread:$0]  %s712, 4096, %s3, [#allocation4], 64, 64, 4
    $region29: #{double_conv.5} parent=1 // pred_fallthru
      _
    // Predicated region
    $region30: #{double_conv.5} parent=1 // pred_check
      _
    $region31: #{double_conv.5} parent=1 // pred_check_branch
      %719 = sbr.rel (0) target = $region33
    $region32: #{double_conv.5} parent=1 // pred_region
      %720 = dma.done [#allocation4], 4096
    $region33: #{double_conv.5} parent=1 // pred_fallthru
      _
    %721 = vsyncpa [#allocation3], 1
    %722 = vsyncpa [#allocation6], 1
    %723 = vsyncpa [#allocation4], 1

// kernel: double_conv.4
$region0: #{double_conv.4}
  #allocation0 [shape = 'u32[]', space=smem, size = 0x4, offset = 0x4, fixed_abs, tag = 'smem constant byte address 0x4 - core index']
  #allocation1 [shape = 'u32[144,128]{1,0:T(1,128)}', space=vmem, size = 0x12000, scoped, tag = 'internal scratch']
  %s0 = inlined_call_operand.hbm [shape: bf16[4,10,16,128], index: 0, kind: input, shape index: {}]
  %s1 = inlined_call_operand.hbm [shape: bf16[4,10,16,128], index: 1, kind: input, shape index: {}]
  %s2 = inlined_call_operand.hbm [shape: bf16[4,10,16,128], index: 2, kind: input, shape index: {}]
  %s3 = inlined_call_operand.hbm [shape: bf16[9,128,128], index: 3, kind: input, shape index: {}]
  %s4 = inlined_call_operand.hbm [shape: f32[1,128], index: 4, kind: input, shape index: {}]
  %s5 = inlined_call_operand.hbm [shape: bf16[512,128], index: 5, kind: output, shape index: {0}]
  %s6 = inlined_call_operand.hbm [shape: f32[1,128], index: 6, kind: output, shape index: {1}]
  %s7 = inlined_call_operand.hbm [shape: f32[1,128], index: 7, kind: output, shape index: {2}]
  %8 = xla_tuple %s5, %s6, %s7
  %s9 = sld [smem:[#allocation0]]
  $region93: #{double_conv.4} parent=0
    _
  %s11 = ssub.s32 1, %s9
  %s12 = scalar_select 0, %s11, %s9
  $region1: #{double_conv.4} parent=0
    #allocation2 [shape = 'u8[81920]{0}', space=vmem, size = 0x14000, scoped, tag = 'input window, operand 0']
    #allocation3 [shape = 's32[2]{0}', space=sflag, size = 0x8, scoped, tag = 'scoped memory for double_conv.4']
    #allocation4 [shape = 's32[2]{0}', space=sflag, size = 0x8, scoped, tag = 'scoped memory for double_conv.4']
    #allocation5 [shape = 'u8[81920]{0}', space=vmem, size = 0x14000, scoped, tag = 'input window, operand 1']
    #allocation6 [shape = 's32[2]{0}', space=sflag, size = 0x8, scoped, tag = 'scoped memory for double_conv.4']
    #allocation7 [shape = 'u8[81920]{0}', space=vmem, size = 0x14000, scoped, tag = 'input window, operand 2']
    #allocation8 [shape = 'u8[294912]{0}', space=vmem, size = 0x48000, scoped, tag = 'input window, operand 3, single buffered']
    #allocation9 [shape = 's32[1]{0}', space=sflag, size = 0x4, scoped, tag = 'scoped memory for double_conv.4']
    #allocation10 [shape = 'u8[512]{0}', space=vmem, size = 0x400, scoped, tag = 'input window, operand 4, single buffered']
    #allocation11 [shape = 'u8[65536]{0}', space=vmem, size = 0x10000, scoped, tag = 'output window, operand 0']
    #allocation12 [shape = 'u8[512]{0}', space=vmem, size = 0x400, scoped, tag = 'output window, operand 1, single buffered']
    #allocation13 [shape = 's32[1]{0}', space=sflag, size = 0x4, scoped, tag = 'scoped memory for double_conv.4']
    #allocation14 [shape = 'u8[512]{0}', space=vmem, size = 0x400, scoped, tag = 'output window, operand 2, single buffered']
    %13 = vsyncpa [#allocation3], 0
    %s14 = scalar_lea.sflag [#allocation3], 1
    %15 = vsyncpa %s14, 0
    %16 = vsyncpa [#allocation6], 0
    %s17 = scalar_lea.sflag [#allocation6], 1
    %18 = vsyncpa %s17, 0
    %19 = vsyncpa [#allocation9], 0
    %20 = vsyncpa [#allocation4], 0
    %s21 = scalar_lea.sflag [#allocation4], 1
    %22 = vsyncpa %s21, 0
    %23 = vsyncpa [#allocation13], 0
    loop: start=0, step=1, limit=6
    $region2: #{double_conv.4} parent=1 // loop_pre_header
      _
    $region3: #{double_conv.4} parent=1 // loop_header
      %s25 = sphi 0, %s29
      %p26 = scmp.ge.s32.totalorder %s25, 6
      %s35 = sphi 0, %s37
      %s38 = sphi 0, %s35
      %s39 = sphi 0, %s38
      %s55 = sphi 0, %s39
      %s61 = sphi 0, %s63
      %s64 = sphi 0, %s61
      %s65 = sphi 0, %s64
      %s81 = sphi 0, %s65
      %s87 = sphi 0, %s89
      %s90 = sphi 0, %s87
      %s91 = sphi 0, %s90
      %s107 = sphi 0, %s91
      %s111 = sphi 0, %s111
      %s113 = sphi 0, %s111
      %s114 = sphi 0, %s113
      %s128 = sphi 0, %s114
      %s132 = sphi 0, %s132
      %s134 = sphi 0, %s132
      %s135 = sphi 0, %s134
      %s149 = sphi 0, %s135
      %s155 = sphi 0, %s157
      %s158 = sphi 0, %s155
      %s159 = sphi 0, %s158
      %s175 = sphi 0, %s159
      %s179 = sphi 0, %s179
      %s181 = sphi 0, %s179
      %s182 = sphi 0, %s181
      %s196 = sphi 0, %s182
      %s200 = sphi 0, %s200
      %s202 = sphi 0, %s200
      %s203 = sphi 0, %s202
      %s217 = sphi 0, %s203
    $region4: #{double_conv.4} parent=1 // loop_header_branch
      %28 = sbr.rel (%p26) target = $region8
    $region5: #{double_conv.4} parent=1 // loop_body
      %s30 = ssub.s32 %s25, 1
      %s31 = ssub.s32 %s25, 2
      %s32 = sadd.s32 %s25, 1
      %s33 = ssub.s32 %s25, %s32
      %p34 = scmp.eq.s32.totalorder %s33, 0
      %s36 = sadd.s32 %s35, 1
      %s37 = scalar_select %p34, %s35, %s36
      %p40 = pneg %p34
      %p41 = scmp.eq.s32.totalorder %s25, 3
      %p42 = por %p40, %p41
      %p43 = scmp.ne.s32.totalorder %s35, %s38
      %p44 = scmp.eq.s32.totalorder %s25, 0
      %p45 = por %p43, %p44
      %p46 = scmp.ne.s32.totalorder %s35, %s38
      %p47 = scmp.eq.s32.totalorder %s30, 3
      %p48 = por %p46, %p47
      %p49 = scmp.ne.s32.totalorder %s38, %s39
      %p50 = scmp.eq.s32.totalorder %s30, 0
      %p51 = por %p49, %p50
      %p52 = scmp.ne.s32.totalorder %s38, %s39
      %p53 = scmp.eq.s32.totalorder %s31, 3
      %p54 = por %p52, %p53
      %p56 = scmp.ne.s32.totalorder %s39, %s55
      %p57 = scmp.eq.s32.totalorder %s31, 0
      %p58 = por %p56, %p57
      %s59 = ssub.s32 %s25, %s32
      %p60 = scmp.eq.s32.totalorder %s59, 0
      %s62 = sadd.s32 %s61, 1
      %s63 = scalar_select %p60, %s61, %s62
      %p66 = pneg %p60
      %p67 = scmp.eq.s32.totalorder %s25, 3
      %p68 = por %p66, %p67
      %p69 = scmp.ne.s32.totalorder %s61, %s64
      %p70 = scmp.eq.s32.totalorder %s25, 0
      %p71 = por %p69, %p70
      %p72 = scmp.ne.s32.totalorder %s61, %s64
      %p73 = scmp.eq.s32.totalorder %s30, 3
      %p74 = por %p72, %p73
      %p75 = scmp.ne.s32.totalorder %s64, %s65
      %p76 = scmp.eq.s32.totalorder %s30, 0
      %p77 = por %p75, %p76
      %p78 = scmp.ne.s32.totalorder %s64, %s65
      %p79 = scmp.eq.s32.totalorder %s31, 3
      %p80 = por %p78, %p79
      %p82 = scmp.ne.s32.totalorder %s65, %s81
      %p83 = scmp.eq.s32.totalorder %s31, 0
      %p84 = por %p82, %p83
      %s85 = ssub.s32 %s25, %s32
      %p86 = scmp.eq.s32.totalorder %s85, 0
      %s88 = sadd.s32 %s87, 1
      %s89 = scalar_select %p86, %s87, %s88
      %p92 = pneg %p86
      %p93 = scmp.eq.s32.totalorder %s25, 3
      %p94 = por %p92, %p93
      %p95 = scmp.ne.s32.totalorder %s87, %s90
      %p96 = scmp.eq.s32.totalorder %s25, 0
      %p97 = por %p95, %p96
      %p98 = scmp.ne.s32.totalorder %s87, %s90
      %p99 = scmp.eq.s32.totalorder %s30, 3
      %p100 = por %p98, %p99
      %p101 = scmp.ne.s32.totalorder %s90, %s91
      %p102 = scmp.eq.s32.totalorder %s30, 0
      %p103 = por %p101, %p102
      %p104 = scmp.ne.s32.totalorder %s90, %s91
      %p105 = scmp.eq.s32.totalorder %s31, 3
      %p106 = por %p104, %p105
      %p108 = scmp.ne.s32.totalorder %s91, %s107
      %p109 = scmp.eq.s32.totalorder %s31, 0
      %p110 = por %p108, %p109
      %s112 = sadd.s32 %s111, 1
      %p115 = scmp.eq.s32.totalorder %s25, 3
      %p116 = scmp.ne.s32.totalorder %s111, %s113
      %p117 = scmp.eq.s32.totalorder %s25, 0
      %p118 = por %p116, %p117
      %p119 = scmp.ne.s32.totalorder %s111, %s113
      %p120 = scmp.eq.s32.totalorder %s30, 3
      %p121 = por %p119, %p120
      %p122 = scmp.ne.s32.totalorder %s113, %s114
      %p123 = scmp.eq.s32.totalorder %s30, 0
      %p124 = por %p122, %p123
      %p125 = scmp.ne.s32.totalorder %s113, %s114
      %p126 = scmp.eq.s32.totalorder %s31, 3
      %p127 = por %p125, %p126
      %p129 = scmp.ne.s32.totalorder %s114, %s128
      %p130 = scmp.eq.s32.totalorder %s31, 0
      %p131 = por %p129, %p130
      %s133 = sadd.s32 %s132, 1
      %p136 = scmp.eq.s32.totalorder %s25, 3
      %p137 = scmp.ne.s32.totalorder %s132, %s134
      %p138 = scmp.eq.s32.totalorder %s25, 0
      %p139 = por %p137, %p138
      %p140 = scmp.ne.s32.totalorder %s132, %s134
      %p141 = scmp.eq.s32.totalorder %s30, 3
      %p142 = por %p140, %p141
      %p143 = scmp.ne.s32.totalorder %s134, %s135
      %p144 = scmp.eq.s32.totalorder %s30, 0
      %p145 = por %p143, %p144
      %p146 = scmp.ne.s32.totalorder %s134, %s135
      %p147 = scmp.eq.s32.totalorder %s31, 3
      %p148 = por %p146, %p147
      %p150 = scmp.ne.s32.totalorder %s135, %s149
      %p151 = scmp.eq.s32.totalorder %s31, 0
      %p152 = por %p150, %p151
      %s153 = ssub.s32 %s25, %s32
      %p154 = scmp.eq.s32.totalorder %s153, 0
      %s156 = sadd.s32 %s155, 1
      %s157 = scalar_select %p154, %s155, %s156
      %p160 = pneg %p154
      %p161 = scmp.eq.s32.totalorder %s25, 3
      %p162 = por %p160, %p161
      %p163 = scmp.ne.s32.totalorder %s155, %s158
      %p164 = scmp.eq.s32.totalorder %s25, 0
      %p165 = por %p163, %p164
      %p166 = scmp.ne.s32.totalorder %s155, %s158
      %p167 = scmp.eq.s32.totalorder %s30, 3
      %p168 = por %p166, %p167
      %p169 = scmp.ne.s32.totalorder %s158, %s159
      %p170 = scmp.eq.s32.totalorder %s30, 0
      %p171 = por %p169, %p170
      %p172 = scmp.ne.s32.totalorder %s158, %s159
      %p173 = scmp.eq.s32.totalorder %s31, 3
      %p174 = por %p172, %p173
      %p176 = scmp.ne.s32.totalorder %s159, %s175
      %p177 = scmp.eq.s32.totalorder %s31, 0
      %p178 = por %p176, %p177
      %s180 = sadd.s32 %s179, 1
      %p183 = scmp.eq.s32.totalorder %s25, 3
      %p184 = scmp.ne.s32.totalorder %s179, %s181
      %p185 = scmp.eq.s32.totalorder %s25, 0
      %p186 = por %p184, %p185
      %p187 = scmp.ne.s32.totalorder %s179, %s181
      %p188 = scmp.eq.s32.totalorder %s30, 3
      %p189 = por %p187, %p188
      %p190 = scmp.ne.s32.totalorder %s181, %s182
      %p191 = scmp.eq.s32.totalorder %s30, 0
      %p192 = por %p190, %p191
      %p193 = scmp.ne.s32.totalorder %s181, %s182
      %p194 = scmp.eq.s32.totalorder %s31, 3
      %p195 = por %p193, %p194
      %p197 = scmp.ne.s32.totalorder %s182, %s196
      %p198 = scmp.eq.s32.totalorder %s31, 0
      %p199 = por %p197, %p198
      %s201 = sadd.s32 %s200, 1
      %p204 = scmp.eq.s32.totalorder %s25, 3
      %p205 = scmp.ne.s32.totalorder %s200, %s202
      %p206 = scmp.eq.s32.totalorder %s25, 0
      %p207 = por %p205, %p206
      %p208 = scmp.ne.s32.totalorder %s200, %s202
      %p209 = scmp.eq.s32.totalorder %s30, 3
      %p210 = por %p208, %p209
      %p211 = scmp.ne.s32.totalorder %s202, %s203
      %p212 = scmp.eq.s32.totalorder %s30, 0
      %p213 = por %p211, %p212
      %p214 = scmp.ne.s32.totalorder %s202, %s203
      %p215 = scmp.eq.s32.totalorder %s31, 3
      %p216 = por %p214, %p215
      %p218 = scmp.ne.s32.totalorder %s203, %s217
      %p219 = scmp.eq.s32.totalorder %s31, 0
      %p220 = por %p218, %p219
      %p221 = scmp.le.s32.totalorder 1, %s25
      %p222 = scmp.lt.s32.totalorder %s25, 5
      %p223 = pnand %p221, %p222
      %p224 = pneg %p223
      // Predicated region
      $region9: #{double_conv.4} parent=5 // pred_check
        _
      $region10: #{double_conv.4} parent=5 // pred_check_branch
        %226 = sbr.rel (%p223) target = $region12
      $region11: #{double_conv.4} parent=5 // pred_region
        %s227 = ssub.s32 %s25, 1
        // Predicated region
        $region13: #{double_conv.4} parent=11 // pred_check
          %p228 = pneg %p124
        $region14: #{double_conv.4} parent=11 // pred_check_branch
          %230 = sbr.rel (%p228) target = $region16
        $region15: #{double_conv.4} parent=11 // pred_region
          %s232 = ssub.s32 9216, 9216
          %233 = vsyncadd [#allocation9], %s232
          %s234 = sshll.u32 [#allocation8], 4
          %s235 = int_to_ptr.vmem [resolvable:$true] %s234
          %240 = dma.hbm_to_vmem [thread:$0]  %s3, 9216, %s235, [#allocation9], 64, 64, 4
        $region16: #{double_conv.4} parent=11 // pred_fallthru
          _
        // Predicated region
        $region17: #{double_conv.4} parent=11 // pred_check
          %p241 = pneg %p145
        $region18: #{double_conv.4} parent=11 // pred_check_branch
          %243 = sbr.rel (%p241) target = $region20
        $region19: #{double_conv.4} parent=11 // pred_region
          %s245 = ssub.s32 16, 16
          %246 = vsyncadd [#allocation9], %s245
          %s248 = sshll.u32 [#allocation10], 4
          %s249 = int_to_ptr.vmem [resolvable:$true] %s248
          %251 = dma.hbm_to_vmem [thread:$0]  %s4, 16, %s249, [#allocation9]
        $region20: #{double_conv.4} parent=11 // pred_fallthru
          _
      $region12: #{double_conv.4} parent=5 // pred_fallthru
        _
      %p252 = scmp.lt.s32.totalorder %s25, 4
      // Predicated region
      $region21: #{double_conv.4} parent=5 // pred_check
        %p253 = pneg %p252
      $region22: #{double_conv.4} parent=5 // pred_check_branch
        %255 = sbr.rel (%p253) target = $region24
      $region23: #{double_conv.4} parent=5 // pred_region
        // Predicated region
        $region25: #{double_conv.4} parent=23 // pred_check
          %p256 = pneg %p45
        $region26: #{double_conv.4} parent=23 // pred_check_branch
          %258 = sbr.rel (%p256) target = $region28
        $region27: #{double_conv.4} parent=23 // pred_region
          %s259 = sand.u32 %s35, 1
          %s260 = scalar_lea.sflag [#allocation3], %s259
          %s261 = sand.u32 %s35, 1
          %s262 = smul.addr %s261, 80
          %s263 = scalar_lea.vmem [#allocation2], %s262
          %s265 = ssub.s32 1280, 1280
          %266 = vsyncadd %s260, %s265
          %s267 = smul.addr %s25, 20
          %s268 = smul.addr %s267, 64
          %s269 = scalar_lea.hbm %s0, %s268
          %s270 = sshll.u32 %s263, 4
          %s271 = int_to_ptr.vmem [resolvable:$true] %s270
          %276 = dma.hbm_to_vmem [thread:$0]  %s269, 1280, %s271, %s260, 64, 64, 4
        $region28: #{double_conv.4} parent=23 // pred_fallthru
          _
        // Predicated region
        $region29: #{double_conv.4} parent=23 // pred_check
          %p277 = pneg %p71
        $region30: #{double_conv.4} parent=23 // pred_check_branch
          %279 = sbr.rel (%p277) target = $region32
        $region31: #{double_conv.4} parent=23 // pred_region
          %s280 = sand.u32 %s25, 1
          %s281 = scalar_lea.sflag [#allocation6], %s280
          %s282 = sand.u32 %s61, 1
          %s283 = smul.addr %s282, 80
          %s284 = scalar_lea.vmem [#allocation5], %s283
          %s286 = ssub.s32 1280, 1280
          %287 = vsyncadd %s281, %s286
          %s288 = smul.addr %s25, 20
          %s289 = smul.addr %s288, 64
          %s290 = scalar_lea.hbm %s1, %s289
          %s291 = sshll.u32 %s284, 4
          %s292 = int_to_ptr.vmem [resolvable:$true] %s291
          %297 = dma.hbm_to_vmem [thread:$0]  %s290, 1280, %s292, %s281, 64, 64, 4
        $region32: #{double_conv.4} parent=23 // pred_fallthru
          _
        // Predicated region
        $region33: #{double_conv.4} parent=23 // pred_check
          %p298 = pneg %p97
        $region34: #{double_conv.4} parent=23 // pred_check_branch
          %300 = sbr.rel (%p298) target = $region36
        $region35: #{double_conv.4} parent=23 // pred_region
          %s301 = sand.u32 %s25, 1
          %s302 = scalar_lea.sflag [#allocation6], %s301
          %s303 = sand.u32 %s87, 1
          %s304 = smul.addr %s303, 80
          %s305 = scalar_lea.vmem [#allocation7], %s304
          %s307 = ssub.s32 1280, 1280
          %308 = vsyncadd %s302, %s307
          %s309 = smul.addr %s25, 20
          %s310 = smul.addr %s309, 64
          %s311 = scalar_lea.hbm %s2, %s310
          %s312 = sshll.u32 %s305, 4
          %s313 = int_to_ptr.vmem [resolvable:$true] %s312
          %318 = dma.hbm_to_vmem [thread:$0]  %s311, 1280, %s313, %s302, 64, 64, 4
        $region36: #{double_conv.4} parent=23 // pred_fallthru
          _
      $region24: #{double_conv.4} parent=5 // pred_fallthru
        _
      %p319 = scmp.le.s32.totalorder 1, %s25
      %p320 = scmp.lt.s32.totalorder %s25, 5
      %p321 = pnand %p319, %p320
      %p322 = pneg %p321
      // Predicated region
      $region37: #{double_conv.4} parent=5 // pred_check
        _
      $region38: #{double_conv.4} parent=5 // pred_check_branch
        %324 = sbr.rel (%p321) target = $region40
      $region39: #{double_conv.4} parent=5 // pred_region
        %s325 = ssub.s32 %s25, 1
        %s326 = sand.u32 %s38, 1
        %s327 = scalar_lea.sflag [#allocation3], %s326
        %s328 = sand.u32 %s38, 1
        %s329 = smul.addr %s328, 80
        %s330 = scalar_lea.vmem [#allocation2], %s329
        // Predicated region
        $region41: #{double_conv.4} parent=39 // pred_check
          %p331 = pneg %p51
        $region42: #{double_conv.4} parent=39 // pred_check_branch
          %333 = sbr.rel (%p331) target = $region44
        $region43: #{double_conv.4} parent=39 // pred_region
          %334 = dma.done %s327, 1280
        $region44: #{double_conv.4} parent=39 // pred_fallthru
          _
        %s335 = sand.u32 %s30, 1
        %s336 = scalar_lea.sflag [#allocation6], %s335
        %s337 = sand.u32 %s64, 1
        %s338 = smul.addr %s337, 80
        %s339 = scalar_lea.vmem [#allocation5], %s338
        // Predicated region
        $region45: #{double_conv.4} parent=39 // pred_check
          %p340 = pneg %p77
        $region46: #{double_conv.4} parent=39 // pred_check_branch
          %342 = sbr.rel (%p340) target = $region48
        $region47: #{double_conv.4} parent=39 // pred_region
          %343 = dma.done %s336, 1280
        $region48: #{double_conv.4} parent=39 // pred_fallthru
          _
        %s344 = sand.u32 %s30, 1
        %s345 = scalar_lea.sflag [#allocation6], %s344
        %s346 = sand.u32 %s90, 1
        %s347 = smul.addr %s346, 80
        %s348 = scalar_lea.vmem [#allocation7], %s347
        // Predicated region
        $region49: #{double_conv.4} parent=39 // pred_check
          %p349 = pneg %p103
        $region50: #{double_conv.4} parent=39 // pred_check_branch
          %351 = sbr.rel (%p349) target = $region52
        $region51: #{double_conv.4} parent=39 // pred_region
          %352 = dma.done %s345, 1280
        $region52: #{double_conv.4} parent=39 // pred_fallthru
          _
        // Predicated region
        $region53: #{double_conv.4} parent=39 // pred_check
          %p353 = pneg %p124
        $region54: #{double_conv.4} parent=39 // pred_check_branch
          %355 = sbr.rel (%p353) target = $region56
        $region55: #{double_conv.4} parent=39 // pred_region
          %356 = dma.done [#allocation9], 9216
        $region56: #{double_conv.4} parent=39 // pred_fallthru
          _
        // Predicated region
        $region57: #{double_conv.4} parent=39 // pred_check
          %p357 = pneg %p145
        $region58: #{double_conv.4} parent=39 // pred_check_branch
          %359 = sbr.rel (%p357) target = $region60
        $region59: #{double_conv.4} parent=39 // pred_region
          %360 = dma.done [#allocation9], 16
        $region60: #{double_conv.4} parent=39 // pred_fallthru
          _
        %s361 = sand.u32 %s38, 1
        %s362 = scalar_lea.sflag [#allocation3], %s361
        %s363 = sand.u32 %s38, 1
        %s364 = smul.addr %s363, 80
        %s365 = scalar_lea.vmem [#allocation2], %s364
        %p366 = pneg %p51
        %p367 = pneg %p48
        %s368 = sand.u32 %s30, 1
        %s369 = scalar_lea.sflag [#allocation6], %s368
        %s370 = sand.u32 %s64, 1
        %s371 = smul.addr %s370, 80
        %s372 = scalar_lea.vmem [#allocation5], %s371
        %p373 = pneg %p77
        %p374 = pneg %p74
        %s375 = sand.u32 %s30, 1
        %s376 = scalar_lea.sflag [#allocation6], %s375
        %s377 = sand.u32 %s90, 1
        %s378 = smul.addr %s377, 80
        %s379 = scalar_lea.vmem [#allocation7], %s378
        %p380 = pneg %p103
        %p381 = pneg %p100
        %p382 = pneg %p124
        %p383 = pneg %p121
        %p384 = pneg %p145
        %p385 = pneg %p142
        %p386 = pneg %p171
        %p387 = pneg %p168
        %s388 = sand.u32 %s158, 1
        %s389 = scalar_lea.sflag [#allocation4], %s388
        %s390 = sand.u32 %s158, 1
        %s391 = smul.addr %s390, 64
        %s392 = scalar_lea.vmem [#allocation11], %s391
        %p393 = pneg %p192
        %p394 = pneg %p189
        %p395 = pneg %p213
        %p396 = pneg %p210
        %s397 = smul.u32 16, %s30
        %p399 = scmp.eq.s32.totalorder %s30, 0
        // Predicated region
        $region61: #{double_conv.4} parent=39 // pred_check
          %p400 = pneg %p399
        $region62: #{double_conv.4} parent=39 // pred_check_branch
          %402 = sbr.rel (%p400) target = $region64
        $region63: #{double_conv.4} parent=39 // pred_region
          %403 = vst [vmem:[#allocation12] sm:$0x1] 0.0
          %404 = vst [vmem:[#allocation14] sm:$0x1] 0.0
        $region64: #{double_conv.4} parent=39 // pred_fallthru
          _
        %v405 = vld [vmem:[%s330] sm:$0xf]
        %v406 = vld [vmem:[%s330 + $0x4] sm:$0xf]
        %v407 = vld [vmem:[%s330 + $0x8] sm:$0xf]
        %v408 = vld [vmem:[%s330 + $0xc] sm:$0xf]
        %v409 = vld [vmem:[%s330 + $0x10] sm:$0xf]
        %v410 = vld [vmem:[%s330 + $0x14] sm:$0xf]
        %v411 = vld [vmem:[%s330 + $0x18] sm:$0xf]
        %v412 = vld [vmem:[%s330 + $0x1c] sm:$0xf]
        %v413 = vld [vmem:[%s330 + $0x20] sm:$0xf]
        %v414 = vld [vmem:[%s330 + $0x24] sm:$0xf]
        %v415 = vld [vmem:[%s330 + $0x28] sm:$0xf]
        %v416 = vld [vmem:[%s330 + $0x2c] sm:$0xf]
        %v417 = vld [vmem:[%s330 + $0x30] sm:$0xf]
        %v418 = vld [vmem:[%s330 + $0x34] sm:$0xf]
        %v419 = vld [vmem:[%s330 + $0x38] sm:$0xf]
        %v420 = vld [vmem:[%s330 + $0x3c] sm:$0xf]
        %v421 = vld [vmem:[#allocation8] sm:$0xf]
        %v422 = vld [vmem:[#allocation8 + $0x4] sm:$0xf]
        %v423 = vld [vmem:[#allocation8 + $0x8] sm:$0xf]
        %v424 = vld [vmem:[#allocation8 + $0xc] sm:$0xf]
        %v425 = vld [vmem:[#allocation8 + $0x10] sm:$0xf]
        %v426 = vld [vmem:[#allocation8 + $0x14] sm:$0xf]
        %v427 = vld [vmem:[#allocation8 + $0x18] sm:$0xf]
        %v428 = vld [vmem:[#allocation8 + $0x1c] sm:$0xf]
        %v429 = vld [vmem:[#allocation8 + $0x20] sm:$0xf]
        %v430 = vld [vmem:[#allocation8 + $0x24] sm:$0xf]
        %v431 = vld [vmem:[#allocation8 + $0x28] sm:$0xf]
        %v432 = vld [vmem:[#allocation8 + $0x2c] sm:$0xf]
        %v433 = vld [vmem:[#allocation8 + $0x30] sm:$0xf]
        %v434 = vld [vmem:[#allocation8 + $0x34] sm:$0xf]
        %v435 = vld [vmem:[#allocation8 + $0x38] sm:$0xf]
        %v436 = vld [vmem:[#allocation8 + $0x3c] sm:$0xf]
        %s437 = scalar_lea.vmem %s330, 8 [#allocation2]
        %v438 = vld [vmem:[%s437] sm:$0xf]
        %v439 = vld [vmem:[%s437 + $0x4] sm:$0xf]
        %v440 = vld [vmem:[%s437 + $0x8] sm:$0xf]
        %v441 = vld [vmem:[%s437 + $0xc] sm:$0xf]
        %v442 = vld [vmem:[%s437 + $0x10] sm:$0xf]
        %v443 = vld [vmem:[%s437 + $0x14] sm:$0xf]
        %v444 = vld [vmem:[%s437 + $0x18] sm:$0xf]
        %v445 = vld [vmem:[%s437 + $0x1c] sm:$0xf]
        %v446 = vld [vmem:[%s437 + $0x20] sm:$0xf]
        %v447 = vld [vmem:[%s437 + $0x24] sm:$0xf]
        %v448 = vld [vmem:[%s437 + $0x28] sm:$0xf]
        %v449 = vld [vmem:[%s437 + $0x2c] sm:$0xf]
        %v450 = vld [vmem:[%s437 + $0x30] sm:$0xf]
        %v451 = vld [vmem:[%s437 + $0x34] sm:$0xf]
        %v452 = vld [vmem:[%s437 + $0x38] sm:$0xf]
        %v453 = vld [vmem:[%s437 + $0x3c] sm:$0xf]
        %s454 = scalar_lea.vmem [#allocation8], 192
        %v455 = vld [vmem:[%s454] sm:$0xf]
        %v456 = vld [vmem:[%s454 + $0x4] sm:$0xf]
        %v457 = vld [vmem:[%s454 + $0x8] sm:$0xf]
        %v458 = vld [vmem:[%s454 + $0xc] sm:$0xf]
        %v459 = vld [vmem:[%s454 + $0x10] sm:$0xf]
        %v460 = vld [vmem:[%s454 + $0x14] sm:$0xf]
        %v461 = vld [vmem:[%s454 + $0x18] sm:$0xf]
        %v462 = vld [vmem:[%s454 + $0x1c] sm:$0xf]
        %v463 = vld [vmem:[%s454 + $0x20] sm:$0xf]
        %v464 = vld [vmem:[%s454 + $0x24] sm:$0xf]
        %v465 = vld [vmem:[%s454 + $0x28] sm:$0xf]
        %v466 = vld [vmem:[%s454 + $0x2c] sm:$0xf]
        %v467 = vld [vmem:[%s454 + $0x30] sm:$0xf]
        %v468 = vld [vmem:[%s454 + $0x34] sm:$0xf]
        %v469 = vld [vmem:[%s454 + $0x38] sm:$0xf]
        %v470 = vld [vmem:[%s454 + $0x3c] sm:$0xf]
        %v487 = vunpack.c.l.b16 %v438
        %v488 = vunpack.c.l.b16 %v439
        %v489 = vunpack.c.l.b16 %v440
        %v490 = vunpack.c.l.b16 %v441
        %v491 = vunpack.c.l.b16 %v442
        %v492 = vunpack.c.l.b16 %v443
        %v493 = vunpack.c.l.b16 %v444
        %v494 = vunpack.c.l.b16 %v445
        %v495 = vunpack.c.l.b16 %v446
        %v496 = vunpack.c.l.b16 %v447
        %v497 = vunpack.c.l.b16 %v448
        %v498 = vunpack.c.l.b16 %v449
        %v499 = vunpack.c.l.b16 %v450
        %v500 = vunpack.c.l.b16 %v451
        %v501 = vunpack.c.l.b16 %v452
        %v502 = vunpack.c.l.b16 %v453
        %v503 = vpack.c.b16 %v488, %v487
        %v504 = vpack.c.b16 %v490, %v489
        %v505 = vpack.c.b16 %v492, %v491
        %v506 = vpack.c.b16 %v494, %v493
        %v507 = vpack.c.b16 %v496, %v495
        %v508 = vpack.c.b16 %v498, %v497
        %v509 = vpack.c.b16 %v500, %v499
        %v510 = vpack.c.b16 %v502, %v501
        %v535 = vunpack.c.l.b16 %v455
        %v536 = vunpack.c.l.b16 %v456
        %v537 = vunpack.c.l.b16 %v457
        %v538 = vunpack.c.l.b16 %v458
        %v539 = vunpack.c.l.b16 %v459
        %v540 = vunpack.c.l.b16 %v460
        %v541 = vunpack.c.l.b16 %v461
        %v542 = vunpack.c.l.b16 %v462
        %v543 = vunpack.c.l.b16 %v463
        %v544 = vunpack.c.l.b16 %v464
        %v545 = vunpack.c.l.b16 %v465
        %v546 = vunpack.c.l.b16 %v466
        %v547 = vunpack.c.l.b16 %v467
        %v548 = vunpack.c.l.b16 %v468
        %v549 = vunpack.c.l.b16 %v469
        %v550 = vunpack.c.l.b16 %v470
        %v551 = vpack.c.b16 %v536, %v535
        %v552 = vpack.c.b16 %v538, %v537
        %v553 = vpack.c.b16 %v540, %v539
        %v554 = vpack.c.b16 %v542, %v541
        %v555 = vpack.c.b16 %v544, %v543
        %v556 = vpack.c.b16 %v546, %v545
        %v557 = vpack.c.b16 %v548, %v547
        %v558 = vpack.c.b16 %v550, %v549
        %567 = vmatprep.subr.bf16.mxu0 0
        %568 = vmatpush1.bf16.msra.mxu0 %v551
        %569 = vmatprep.subr.bf16.mxu0 0
        %570 = vmatpush1.bf16.msra.mxu0 %v552
        %571 = vmatprep.subr.bf16.mxu0 0
        %572 = vmatpush1.bf16.msra.mxu0 %v553
        %573 = vmatprep.subr.bf16.mxu0 0
        %574 = vmatpush1.bf16.msra.mxu0 %v554
        %575 = vmatprep.subr.bf16.mxu0 0
        %576 = vmatpush1.bf16.msra.mxu0 %v555
        %577 = vmatprep.subr.bf16.mxu0 0
        %578 = vmatpush1.bf16.msra.mxu0 %v556
        %579 = vmatprep.subr.bf16.mxu0 0
        %580 = vmatpush1.bf16.msra.mxu0 %v557
        %581 = vmatprep.subr.bf16.mxu0 0
        %582 = vmatpush1.bf16.msra.mxu0 %v558
        %583 = vmatprep.subr.bf16.mxu0 0
        %584 = vmatpush1.bf16.msra.mxu0 0
        %585 = vmatprep.subr.bf16.mxu0 0
        %586 = vmatpush1.bf16.msra.mxu0 0
        %587 = vmatprep.subr.bf16.mxu0 0
        %588 = vmatpush1.bf16.msra.mxu0 0
        %589 = vmatprep.subr.bf16.mxu0 0
        %590 = vmatpush1.bf16.msra.mxu0 0
        %591 = vmatprep.subr.bf16.mxu0 0
        %592 = vmatpush1.bf16.msra.mxu0 0
        %593 = vmatprep.subr.bf16.mxu0 0
        %594 = vmatpush1.bf16.msra.mxu0 0
        %595 = vmatprep.subr.bf16.mxu0 0
        %596 = vmatpush1.bf16.msra.mxu0 0
        %597 = vmatprep.subr.bf16.mxu0 0
        %598 = vmatpush1.bf16.msra.mxu0 0
        %599 = vmatprep.mubr.bf16.mxu0 0
        %600 = vmatmul.mubr.bf16.gmra.mrb[0].mxu0 %v503
        %v601 = vpop.f32.mrb[0].mxu0
        %v602 = vadd.f32 0.0, %v601
        %v603 = vpop.f32.mrb[0].mxu0
        %v604 = vpop.f32.mrb[0].mxu0
        %v605 = vadd.f32 0.0, %v604
        %v606 = vpop.f32.mrb[0].mxu0
        %607 = vmatprep.mubr.bf16.mxu0 0
        %608 = vmatmul.mubr.bf16.gmra.mrb[0].mxu0 %v504
        %v609 = vpop.f32.mrb[0].mxu0
        %v610 = vadd.f32 0.0, %v609
        %v611 = vpop.f32.mrb[0].mxu0
        %v612 = vpop.f32.mrb[0].mxu0
        %v613 = vadd.f32 0.0, %v612
        %v614 = vpop.f32.mrb[0].mxu0
        %615 = vmatprep.mubr.bf16.mxu0 0
        %616 = vmatmul.mubr.bf16.gmra.mrb[0].mxu0 %v505
        %v617 = vpop.f32.mrb[0].mxu0
        %v618 = vadd.f32 0.0, %v617
        %v619 = vpop.f32.mrb[0].mxu0
        %v620 = vpop.f32.mrb[0].mxu0
        %v621 = vadd.f32 0.0, %v620
        %v622 = vpop.f32.mrb[0].mxu0
        %623 = vmatprep.mubr.bf16.mxu0 0
        %624 = vmatmul.mubr.bf16.gmra.mrb[0].mxu0 %v506
        %v625 = vpop.f32.mrb[0].mxu0
        %v626 = vadd.f32 0.0, %v625
        %v627 = vpop.f32.mrb[0].mxu0
        %v628 = vpop.f32.mrb[0].mxu0
        %v629 = vadd.f32 0.0, %v628
        %v630 = vpop.f32.mrb[0].mxu0
        %631 = vmatprep.mubr.bf16.mxu0 0
        %632 = vmatmul.mubr.bf16.gmra.mrb[0].mxu0 %v507
        %v633 = vpop.f32.mrb[0].mxu0
        %v634 = vadd.f32 0.0, %v633
        %v635 = vpop.f32.mrb[0].mxu0
        %v636 = vpop.f32.mrb[0].mxu0
        %v637 = vadd.f32 0.0, %v636
        %v638 = vpop.f32.mrb[0].mxu0
        %639 = vmatprep.mubr.bf16.mxu0 0
        %640 = vmatmul.mubr.bf16.gmra.mrb[0].mxu0 %v508
        %v641 = vpop.f32.mrb[0].mxu0
        %v642 = vadd.f32 0.0, %v641
        %v643 = vpop.f32.mrb[0].mxu0
        %v644 = vpop.f32.mrb[0].mxu0
        %v645 = vadd.f32 0.0, %v644
        %v646 = vpop.f32.mrb[0].mxu0
        %647 = vmatprep.mubr.bf16.mxu0 0
        %648 = vmatmul.mubr.bf16.gmra.mrb[0].mxu0 %v509
        %v649 = vpop.f32.mrb[0].mxu0
        %v650 = vadd.f32 0.0, %v649
        %v651 = vpop.f32.mrb[0].mxu0
        %v652 = vpop.f32.mrb[0].mxu0
        %v653 = vadd.f32 0.0, %v652
        %v654 = vpop.f32.mrb[0].mxu0
        %655 = vmatprep.mubr.bf16.mxu0 0
        %656 = vmatmul.mubr.bf16.gmra.mrb[0].mxu0 %v510
        %v657 = vpop.f32.mrb[0].mxu0
        %v658 = vadd.f32 0.0, %v657
        %v659 = vpop.f32.mrb[0].mxu0
        %v660 = vpop.f32.mrb[0].mxu0
        %v661 = vadd.f32 0.0, %v660
        %v662 = vpop.f32.mrb[0].mxu0
        %663 = vdwg.mxu0
        %v680 = vunpack.c.l.b16 %v405
        %v681 = vunpack.c.l.b16 %v406
        %v682 = vunpack.c.l.b16 %v407
        %v683 = vunpack.c.l.b16 %v408
        %v684 = vunpack.c.l.b16 %v409
        %v685 = vunpack.c.l.b16 %v410
        %v686 = vunpack.c.l.b16 %v411
        %v687 = vunpack.c.l.b16 %v412
        %v688 = vunpack.c.l.b16 %v413
        %v689 = vunpack.c.l.b16 %v414
        %v690 = vunpack.c.l.b16 %v415
        %v691 = vunpack.c.l.b16 %v416
        %v692 = vunpack.c.l.b16 %v417
        %v693 = vunpack.c.l.b16 %v418
        %v694 = vunpack.c.l.b16 %v419
        %v695 = vunpack.c.l.b16 %v420
        %v696 = vpack.c.b16 %v681, %v680
        %v697 = vpack.c.b16 %v683, %v682
        %v698 = vpack.c.b16 %v685, %v684
        %v699 = vpack.c.b16 %v687, %v686
        %v700 = vpack.c.b16 %v689, %v688
        %v701 = vpack.c.b16 %v691, %v690
        %v702 = vpack.c.b16 %v693, %v692
        %v703 = vpack.c.b16 %v695, %v694
        %v728 = vunpack.c.l.b16 %v421
        %v729 = vunpack.c.l.b16 %v422
        %v730 = vunpack.c.l.b16 %v423
        %v731 = vunpack.c.l.b16 %v424
        %v732 = vunpack.c.l.b16 %v425
        %v733 = vunpack.c.l.b16 %v426
        %v734 = vunpack.c.l.b16 %v427
        %v735 = vunpack.c.l.b16 %v428
        %v736 = vunpack.c.l.b16 %v429
        %v737 = vunpack.c.l.b16 %v430
        %v738 = vunpack.c.l.b16 %v431
        %v739 = vunpack.c.l.b16 %v432
        %v740 = vunpack.c.l.b16 %v433
        %v741 = vunpack.c.l.b16 %v434
        %v742 = vunpack.c.l.b16 %v435
        %v743 = vunpack.c.l.b16 %v436
        %v744 = vpack.c.b16 %v729, %v728
        %v745 = vpack.c.b16 %v731, %v730
        %v746 = vpack.c.b16 %v733, %v732
        %v747 = vpack.c.b16 %v735, %v734
        %v748 = vpack.c.b16 %v737, %v736
        %v749 = vpack.c.b16 %v739, %v738
        %v750 = vpack.c.b16 %v741, %v740
        %v751 = vpack.c.b16 %v743, %v742
        %760 = vmatprep.subr.bf16.mxu0 0
        %761 = vmatpush1.bf16.msra.mxu0 %v744
        %762 = vmatprep.subr.bf16.mxu0 0
        %763 = vmatpush1.bf16.msra.mxu0 %v745
        %764 = vmatprep.subr.bf16.mxu0 0
        %765 = vmatpush1.bf16.msra.mxu0 %v746
        %766 = vmatprep.subr.bf16.mxu0 0
        %767 = vmatpush1.bf16.msra.mxu0 %v747
        %768 = vmatprep.subr.bf16.mxu0 0
        %769 = vmatpush1.bf16.msra.mxu0 %v748
        %770 = vmatprep.subr.bf16.mxu0 0
        %771 = vmatpush1.bf16.msra.mxu0 %v749
        %772 = vmatprep.subr.bf16.mxu0 0
        %773 = vmatpush1.bf16.msra.mxu0 %v750
        %774 = vmatprep.subr.bf16.mxu0 0
        %775 = vmatpush1.bf16.msra.mxu0 %v751
        %776 = vmatprep.subr.bf16.mxu0 0
        %777 = vmatpush1.bf16.msra.mxu0 0
        %778 = vmatprep.subr.bf16.mxu0 0
        %779 = vmatpush1.bf16.msra.mxu0 0
        %780 = vmatprep.subr.bf16.mxu0 0
        %781 = vmatpush1.bf16.msra.mxu0 0
        %782 = vmatprep.subr.bf16.mxu0 0
        %783 = vmatpush1.bf16.msra.mxu0 0
        %784 = vmatprep.subr.bf16.mxu0 0
        %785 = vmatpush1.bf16.msra.mxu0 0
        %786 = vmatprep.subr.bf16.mxu0 0
        %787 = vmatpush1.bf16.msra.mxu0 0
        %788 = vmatprep.subr.bf16.mxu0 0
        %789 = vmatpush1.bf16.msra.mxu0 0
        %790 = vmatprep.subr.bf16.mxu0 0
        %791 = vmatpush1.bf16.msra.mxu0 0
        %792 = vmatprep.mubr.bf16.mxu0 0
        %793 = vmatmul.mubr.bf16.gmra.mrb[0].mxu0 %v696
        %v794 = vpop.f32.mrb[0].mxu0
        %v795 = vadd.f32 %v602, %v794
        %v796 = vpop.f32.mrb[0].mxu0
        %v797 = vpop.f32.mrb[0].mxu0
        %v798 = vadd.f32 %v605, %v797
        %v799 = vpop.f32.mrb[0].mxu0
        %800 = vmatprep.mubr.bf16.mxu0 0
        %801 = vmatmul.mubr.bf16.gmra.mrb[0].mxu0 %v697
        %v802 = vpop.f32.mrb[0].mxu0
        %v803 = vadd.f32 %v610, %v802
        %v804 = vpop.f32.mrb[0].mxu0
        %v805 = vpop.f32.mrb[0].mxu0
        %v806 = vadd.f32 %v613, %v805
        %v807 = vpop.f32.mrb[0].mxu0
        %808 = vmatprep.mubr.bf16.mxu0 0
        %809 = vmatmul.mubr.bf16.gmra.mrb[0].mxu0 %v698
        %v810 = vpop.f32.mrb[0].mxu0
        %v811 = vadd.f32 %v618, %v810
        %v812 = vpop.f32.mrb[0].mxu0
        %v813 = vpop.f32.mrb[0].mxu0
        %v814 = vadd.f32 %v621, %v813
        %v815 = vpop.f32.mrb[0].mxu0
        %816 = vmatprep.mubr.bf16.mxu0 0
        %817 = vmatmul.mubr.bf16.gmra.mrb[0].mxu0 %v699
        %v818 = vpop.f32.mrb[0].mxu0
        %v819 = vadd.f32 %v626, %v818
        %v820 = vpop.f32.mrb[0].mxu0
        %v821 = vpop.f32.mrb[0].mxu0
        %v822 = vadd.f32 %v629, %v821
        %v823 = vpop.f32.mrb[0].mxu0
        %824 = vmatprep.mubr.bf16.mxu0 0
        %825 = vmatmul.mubr.bf16.gmra.mrb[0].mxu0 %v700
        %v826 = vpop.f32.mrb[0].mxu0
        %v827 = vadd.f32 %v634, %v826
        %v828 = vpop.f32.mrb[0].mxu0
        %v829 = vpop.f32.mrb[0].mxu0
        %v830 = vadd.f32 %v637, %v829
        %v831 = vpop.f32.mrb[0].mxu0
        %832 = vmatprep.mubr.bf16.mxu0 0
        %833 = vmatmul.mubr.bf16.gmra.mrb[0].mxu0 %v701
        %v834 = vpop.f32.mrb[0].mxu0
        %v835 = vadd.f32 %v642, %v834
        %v836 = vpop.f32.mrb[0].mxu0
        %v837 = vpop.f32.mrb[0].mxu0
        %v838 = vadd.f32 %v645, %v837
        %v839 = vpop.f32.mrb[0].mxu0
        %840 = vmatprep.mubr.bf16.mxu0 0
        %841 = vmatmul.mubr.bf16.gmra.mrb[0].mxu0 %v702
        %v842 = vpop.f32.mrb[0].mxu0
        %v843 = vadd.f32 %v650, %v842
        %v844 = vpop.f32.mrb[0].mxu0
        %v845 = vpop.f32.mrb[0].mxu0
        %v846 = vadd.f32 %v653, %v845
        %v847 = vpop.f32.mrb[0].mxu0
        %848 = vmatprep.mubr.bf16.mxu0 0
        %849 = vmatmul.mubr.bf16.gmra.mrb[0].mxu0 %v703
        %v850 = vpop.f32.mrb[0].mxu0
        %v851 = vadd.f32 %v658, %v850
        %v852 = vpop.f32.mrb[0].mxu0
        %v853 = vpop.f32.mrb[0].mxu0
        %v854 = vadd.f32 %v661, %v853
        %v855 = vpop.f32.mrb[0].mxu0
        %856 = vdwg.mxu0
        %s857 = scalar_lea.vmem %s330, 16 [#allocation2]
        %v858 = vld [vmem:[%s857] sm:$0xf]
        %v859 = vld [vmem:[%s857 + $0x4] sm:$0xf]
        %v860 = vld [vmem:[%s857 + $0x8] sm:$0xf]
        %v861 = vld [vmem:[%s857 + $0xc] sm:$0xf]
        %v862 = vld [vmem:[%s857 + $0x10] sm:$0xf]
        %v863 = vld [vmem:[%s857 + $0x14] sm:$0xf]
        %v864 = vld [vmem:[%s857 + $0x18] sm:$0xf]
        %v865 = vld [vmem:[%s857 + $0x1c] sm:$0xf]
        %v866 = vld [vmem:[%s857 + $0x20] sm:$0xf]
        %v867 = vld [vmem:[%s857 + $0x24] sm:$0xf]
        %v868 = vld [vmem:[%s857 + $0x28] sm:$0xf]
        %v869 = vld [vmem:[%s857 + $0x2c] sm:$0xf]
        %v870 = vld [vmem:[%s857 + $0x30] sm:$0xf]
        %v871 = vld [vmem:[%s857 + $0x34] sm:$0xf]
        %v872 = vld [vmem:[%s857 + $0x38] sm:$0xf]
        %v873 = vld [vmem:[%s857 + $0x3c] sm:$0xf]
        %s874 = scalar_lea.vmem [#allocation8], 384
        %v875 = vld [vmem:[%s874] sm:$0xf]
        %v876 = vld [vmem:[%s874 + $0x4] sm:$0xf]
        %v877 = vld [vmem:[%s874 + $0x8] sm:$0xf]
        %v878 = vld [vmem:[%s874 + $0xc] sm:$0xf]
        %v879 = vld [vmem:[%s874 + $0x10] sm:$0xf]
        %v880 = vld [vmem:[%s874 + $0x14] sm:$0xf]
        %v881 = vld [vmem:[%s874 + $0x18] sm:$0xf]
        %v882 = vld [vmem:[%s874 + $0x1c] sm:$0xf]
        %v883 = vld [vmem:[%s874 + $0x20] sm:$0xf]
        %v884 = vld [vmem:[%s874 + $0x24] sm:$0xf]
        %v885 = vld [vmem:[%s874 + $0x28] sm:$0xf]
        %v886 = vld [vmem:[%s874 + $0x2c] sm:$0xf]
        %v887 = vld [vmem:[%s874 + $0x30] sm:$0xf]
        %v888 = vld [vmem:[%s874 + $0x34] sm:$0xf]
        %v889 = vld [vmem:[%s874 + $0x38] sm:$0xf]
        %v890 = vld [vmem:[%s874 + $0x3c] sm:$0xf]
        %v907 = vunpack.c.l.b16 %v858
        %v908 = vunpack.c.l.b16 %v859
        %v909 = vunpack.c.l.b16 %v860
        %v910 = vunpack.c.l.b16 %v861
        %v911 = vunpack.c.l.b16 %v862
        %v912 = vunpack.c.l.b16 %v863
        %v913 = vunpack.c.l.b16 %v864
        %v914 = vunpack.c.l.b16 %v865
        %v915 = vunpack.c.l.b16 %v866
        %v916 = vunpack.c.l.b16 %v867
        %v917 = vunpack.c.l.b16 %v868
        %v918 = vunpack.c.l.b16 %v869
        %v919 = vunpack.c.l.b16 %v870
        %v920 = vunpack.c.l.b16 %v871
        %v921 = vunpack.c.l.b16 %v872
        %v922 = vunpack.c.l.b16 %v873
        %v923 = vpack.c.b16 %v908, %v907
        %v924 = vpack.c.b16 %v910, %v909
        %v925 = vpack.c.b16 %v912, %v911
        %v926 = vpack.c.b16 %v914, %v913
        %v927 = vpack.c.b16 %v916, %v915
        %v928 = vpack.c.b16 %v918, %v917
        %v929 = vpack.c.b16 %v920, %v919
        %v930 = vpack.c.b16 %v922, %v921
        %v955 = vunpack.c.l.b16 %v875
        %v956 = vunpack.c.l.b16 %v876
        %v957 = vunpack.c.l.b16 %v877
        %v958 = vunpack.c.l.b16 %v878
        %v959 = vunpack.c.l.b16 %v879
        %v960 = vunpack.c.l.b16 %v880
        %v961 = vunpack.c.l.b16 %v881
        %v962 = vunpack.c.l.b16 %v882
        %v963 = vunpack.c.l.b16 %v883
        %v964 = vunpack.c.l.b16 %v884
        %v965 = vunpack.c.l.b16 %v885
        %v966 = vunpack.c.l.b16 %v886
        %v967 = vunpack.c.l.b16 %v887
        %v968 = vunpack.c.l.b16 %v888
        %v969 = vunpack.c.l.b16 %v889
        %v970 = vunpack.c.l.b16 %v890
        %v971 = vpack.c.b16 %v956, %v955
        %v972 = vpack.c.b16 %v958, %v957
        %v973 = vpack.c.b16 %v960, %v959
        %v974 = vpack.c.b16 %v962, %v961
        %v975 = vpack.c.b16 %v964, %v963
        %v976 = vpack.c.b16 %v966, %v965
        %v977 = vpack.c.b16 %v968, %v967
        %v978 = vpack.c.b16 %v970, %v969
        %987 = vmatprep.subr.bf16.mxu0 0
        %988 = vmatpush1.bf16.msra.mxu0 %v971
        %989 = vmatprep.subr.bf16.mxu0 0
        %990 = vmatpush1.bf16.msra.mxu0 %v972
        %991 = vmatprep.subr.bf16.mxu0 0
        %992 = vmatpush1.bf16.msra.mxu0 %v973
        %993 = vmatprep.subr.bf16.mxu0 0
        %994 = vmatpush1.bf16.msra.mxu0 %v974
        %995 = vmatprep.subr.bf16.mxu0 0
        %996 = vmatpush1.bf16.msra.mxu0 %v975
        %997 = vmatprep.subr.bf16.mxu0 0
        %998 = vmatpush1.bf16.msra.mxu0 %v976
        %999 = vmatprep.subr.bf16.mxu0 0
        %1000 = vmatpush1.bf16.msra.mxu0 %v977
        %1001 = vmatprep.subr.bf16.mxu0 0
        %1002 = vmatpush1.bf16.msra.mxu0 %v978
        %1003 = vmatprep.subr.bf16.mxu0 0
        %1004 = vmatpush1.bf16.msra.mxu0 0
        %1005 = vmatprep.subr.bf16.mxu0 0
        %1006 = vmatpush1.bf16.msra.mxu0 0
        %1007 = vmatprep.subr.bf16.mxu0 0
        %1008 = vmatpush1.bf16.msra.mxu0 0
        %1009 = vmatprep.subr.bf16.mxu0 0
        %1010 = vmatpush1.bf16.msra.mxu0 0
        %1011 = vmatprep.subr.bf16.mxu0 0
        %1012 = vmatpush1.bf16.msra.mxu0 0
        %1013 = vmatprep.subr.bf16.mxu0 0
        %1014 = vmatpush1.bf16.msra.mxu0 0
        %1015 = vmatprep.subr.bf16.mxu0 0
        %1016 = vmatpush1.bf16.msra.mxu0 0
        %1017 = vmatprep.subr.bf16.mxu0 0
        %1018 = vmatpush1.bf16.msra.mxu0 0
        %1019 = vmatprep.mubr.bf16.mxu0 0
        %1020 = vmatmul.mubr.bf16.gmra.mrb[0].mxu0 %v923
        %v1021 = vpop.f32.mrb[0].mxu0
        %v1022 = vadd.f32 0.0, %v1021
        %v1023 = vpop.f32.mrb[0].mxu0
        %v1024 = vpop.f32.mrb[0].mxu0
        %v1025 = vadd.f32 0.0, %v1024
        %v1026 = vpop.f32.mrb[0].mxu0
        %1027 = vmatprep.mubr.bf16.mxu0 0
        %1028 = vmatmul.mubr.bf16.gmra.mrb[0].mxu0 %v924
        %v1029 = vpop.f32.mrb[0].mxu0
        %v1030 = vadd.f32 0.0, %v1029
        %v1031 = vpop.f32.mrb[0].mxu0
        %v1032 = vpop.f32.mrb[0].mxu0
        %v1033 = vadd.f32 0.0, %v1032
        %v1034 = vpop.f32.mrb[0].mxu0
        %1035 = vmatprep.mubr.bf16.mxu0 0
        %1036 = vmatmul.mubr.bf16.gmra.mrb[0].mxu0 %v925
        %v1037 = vpop.f32.mrb[0].mxu0
        %v1038 = vadd.f32 0.0, %v1037
        %v1039 = vpop.f32.mrb[0].mxu0
        %v1040 = vpop.f32.mrb[0].mxu0
        %v1041 = vadd.f32 0.0, %v1040
        %v1042 = vpop.f32.mrb[0].mxu0
        %1043 = vmatprep.mubr.bf16.mxu0 0
        %1044 = vmatmul.mubr.bf16.gmra.mrb[0].mxu0 %v926
        %v1045 = vpop.f32.mrb[0].mxu0
        %v1046 = vadd.f32 0.0, %v1045
        %v1047 = vpop.f32.mrb[0].mxu0
        %v1048 = vpop.f32.mrb[0].mxu0
        %v1049 = vadd.f32 0.0, %v1048
        %v1050 = vpop.f32.mrb[0].mxu0
        %1051 = vmatprep.mubr.bf16.mxu0 0
        %1052 = vmatmul.mubr.bf16.gmra.mrb[0].mxu0 %v927
        %v1053 = vpop.f32.mrb[0].mxu0
        %v1054 = vadd.f32 0.0, %v1053
        %v1055 = vpop.f32.mrb[0].mxu0
        %v1056 = vpop.f32.mrb[0].mxu0
        %v1057 = vadd.f32 0.0, %v1056
        %v1058 = vpop.f32.mrb[0].mxu0
        %1059 = vmatprep.mubr.bf16.mxu0 0
        %1060 = vmatmul.mubr.bf16.gmra.mrb[0].mxu0 %v928
        %v1061 = vpop.f32.mrb[0].mxu0
        %v1062 = vadd.f32 0.0, %v1061
        %v1063 = vpop.f32.mrb[0].mxu0
        %v1064 = vpop.f32.mrb[0].mxu0
        %v1065 = vadd.f32 0.0, %v1064
        %v1066 = vpop.f32.mrb[0].mxu0
        %1067 = vmatprep.mubr.bf16.mxu0 0
        %1068 = vmatmul.mubr.bf16.gmra.mrb[0].mxu0 %v929
        %v1069 = vpop.f32.mrb[0].mxu0
        %v1070 = vadd.f32 0.0, %v1069
        %v1071 = vpop.f32.mrb[0].mxu0
        %v1072 = vpop.f32.mrb[0].mxu0
        %v1073 = vadd.f32 0.0, %v1072
        %v1074 = vpop.f32.mrb[0].mxu0
        %1075 = vmatprep.mubr.bf16.mxu0 0
        %1076 = vmatmul.mubr.bf16.gmra.mrb[0].mxu0 %v930
        %v1077 = vpop.f32.mrb[0].mxu0
        %v1078 = vadd.f32 0.0, %v1077
        %v1079 = vpop.f32.mrb[0].mxu0
        %v1080 = vpop.f32.mrb[0].mxu0
        %v1081 = vadd.f32 0.0, %v1080
        %v1082 = vpop.f32.mrb[0].mxu0
        %1083 = vdwg.mxu0
        %v1084 = vadd.f32 %v795, %v1022
        %v1085 = vadd.f32 %v798, %v1025
        %v1086 = vadd.f32 %v803, %v1030
        %v1087 = vadd.f32 %v806, %v1033
        %v1088 = vadd.f32 %v811, %v1038
        %v1089 = vadd.f32 %v814, %v1041
        %v1090 = vadd.f32 %v819, %v1046
        %v1091 = vadd.f32 %v822, %v1049
        %v1092 = vadd.f32 %v827, %v1054
        %v1093 = vadd.f32 %v830, %v1057
        %v1094 = vadd.f32 %v835, %v1062
        %v1095 = vadd.f32 %v838, %v1065
        %v1096 = vadd.f32 %v843, %v1070
        %v1097 = vadd.f32 %v846, %v1073
        %v1098 = vadd.f32 %v851, %v1078
        %v1099 = vadd.f32 %v854, %v1081
        %v1100 = vld [vmem:[%s339] sm:$0xf]
        %v1101 = vld [vmem:[%s339 + $0x4] sm:$0xf]
        %v1102 = vld [vmem:[%s339 + $0x8] sm:$0xf]
        %v1103 = vld [vmem:[%s339 + $0xc] sm:$0xf]
        %v1104 = vld [vmem:[%s339 + $0x10] sm:$0xf]
        %v1105 = vld [vmem:[%s339 + $0x14] sm:$0xf]
        %v1106 = vld [vmem:[%s339 + $0x18] sm:$0xf]
        %v1107 = vld [vmem:[%s339 + $0x1c] sm:$0xf]
        %v1108 = vld [vmem:[%s339 + $0x20] sm:$0xf]
        %v1109 = vld [vmem:[%s339 + $0x24] sm:$0xf]
        %v1110 = vld [vmem:[%s339 + $0x28] sm:$0xf]
        %v1111 = vld [vmem:[%s339 + $0x2c] sm:$0xf]
        %v1112 = vld [vmem:[%s339 + $0x30] sm:$0xf]
        %v1113 = vld [vmem:[%s339 + $0x34] sm:$0xf]
        %v1114 = vld [vmem:[%s339 + $0x38] sm:$0xf]
        %v1115 = vld [vmem:[%s339 + $0x3c] sm:$0xf]
        %s1116 = scalar_lea.vmem [#allocation8], 64
        %v1117 = vld [vmem:[%s1116] sm:$0xf]
        %v1118 = vld [vmem:[%s1116 + $0x4] sm:$0xf]
        %v1119 = vld [vmem:[%s1116 + $0x8] sm:$0xf]
        %v1120 = vld [vmem:[%s1116 + $0xc] sm:$0xf]
        %v1121 = vld [vmem:[%s1116 + $0x10] sm:$0xf]
        %v1122 = vld [vmem:[%s1116 + $0x14] sm:$0xf]
        %v1123 = vld [vmem:[%s1116 + $0x18] sm:$0xf]
        %v1124 = vld [vmem:[%s1116 + $0x1c] sm:$0xf]
        %v1125 = vld [vmem:[%s1116 + $0x20] sm:$0xf]
        %v1126 = vld [vmem:[%s1116 + $0x24] sm:$0xf]
        %v1127 = vld [vmem:[%s1116 + $0x28] sm:$0xf]
        %v1128 = vld [vmem:[%s1116 + $0x2c] sm:$0xf]
        %v1129 = vld [vmem:[%s1116 + $0x30] sm:$0xf]
        %v1130 = vld [vmem:[%s1116 + $0x34] sm:$0xf]
        %v1131 = vld [vmem:[%s1116 + $0x38] sm:$0xf]
        %v1132 = vld [vmem:[%s1116 + $0x3c] sm:$0xf]
        %v1149 = vunpack.c.l.b16 %v1100
        %v1150 = vunpack.c.l.b16 %v1101
        %v1151 = vunpack.c.l.b16 %v1102
        %v1152 = vunpack.c.l.b16 %v1103
        %v1153 = vunpack.c.l.b16 %v1104
        %v1154 = vunpack.c.l.b16 %v1105
        %v1155 = vunpack.c.l.b16 %v1106
        %v1156 = vunpack.c.l.b16 %v1107
        %v1157 = vunpack.c.l.b16 %v1108
        %v1158 = vunpack.c.l.b16 %v1109
        %v1159 = vunpack.c.l.b16 %v1110
        %v1160 = vunpack.c.l.b16 %v1111
        %v1161 = vunpack.c.l.b16 %v1112
        %v1162 = vunpack.c.l.b16 %v1113
        %v1163 = vunpack.c.l.b16 %v1114
        %v1164 = vunpack.c.l.b16 %v1115
        %v1165 = vpack.c.b16 %v1150, %v1149
        %v1166 = vpack.c.b16 %v1152, %v1151
        %v1167 = vpack.c.b16 %v1154, %v1153
        %v1168 = vpack.c.b16 %v1156, %v1155
        %v1169 = vpack.c.b16 %v1158, %v1157
        %v1170 = vpack.c.b16 %v1160, %v1159
        %v1171 = vpack.c.b16 %v1162, %v1161
        %v1172 = vpack.c.b16 %v1164, %v1163
        %v1197 = vunpack.c.l.b16 %v1117
        %v1198 = vunpack.c.l.b16 %v1118
        %v1199 = vunpack.c.l.b16 %v1119
        %v1200 = vunpack.c.l.b16 %v1120
        %v1201 = vunpack.c.l.b16 %v1121
        %v1202 = vunpack.c.l.b16 %v1122
        %v1203 = vunpack.c.l.b16 %v1123
        %v1204 = vunpack.c.l.b16 %v1124
        %v1205 = vunpack.c.l.b16 %v1125
        %v1206 = vunpack.c.l.b16 %v1126
        %v1207 = vunpack.c.l.b16 %v1127
        %v1208 = vunpack.c.l.b16 %v1128
        %v1209 = vunpack.c.l.b16 %v1129
        %v1210 = vunpack.c.l.b16 %v1130
        %v1211 = vunpack.c.l.b16 %v1131
        %v1212 = vunpack.c.l.b16 %v1132
        %v1213 = vpack.c.b16 %v1198, %v1197
        %v1214 = vpack.c.b16 %v1200, %v1199
        %v1215 = vpack.c.b16 %v1202, %v1201
        %v1216 = vpack.c.b16 %v1204, %v1203
        %v1217 = vpack.c.b16 %v1206, %v1205
        %v1218 = vpack.c.b16 %v1208, %v1207
        %v1219 = vpack.c.b16 %v1210, %v1209
        %v1220 = vpack.c.b16 %v1212, %v1211
        %1229 = vmatprep.subr.bf16.mxu0 0
        %1230 = vmatpush1.bf16.msra.mxu0 %v1213
        %1231 = vmatprep.subr.bf16.mxu0 0
        %1232 = vmatpush1.bf16.msra.mxu0 %v1214
        %1233 = vmatprep.subr.bf16.mxu0 0
        %1234 = vmatpush1.bf16.msra.mxu0 %v1215
        %1235 = vmatprep.subr.bf16.mxu0 0
        %1236 = vmatpush1.bf16.msra.mxu0 %v1216
        %1237 = vmatprep.subr.bf16.mxu0 0
        %1238 = vmatpush1.bf16.msra.mxu0 %v1217
        %1239 = vmatprep.subr.bf16.mxu0 0
        %1240 = vmatpush1.bf16.msra.mxu0 %v1218
        %1241 = vmatprep.subr.bf16.mxu0 0
        %1242 = vmatpush1.bf16.msra.mxu0 %v1219
        %1243 = vmatprep.subr.bf16.mxu0 0
        %1244 = vmatpush1.bf16.msra.mxu0 %v1220
        %1245 = vmatprep.subr.bf16.mxu0 0
        %1246 = vmatpush1.bf16.msra.mxu0 0
        %1247 = vmatprep.subr.bf16.mxu0 0
        %1248 = vmatpush1.bf16.msra.mxu0 0
        %1249 = vmatprep.subr.bf16.mxu0 0
        %1250 = vmatpush1.bf16.msra.mxu0 0
        %1251 = vmatprep.subr.bf16.mxu0 0
        %1252 = vmatpush1.bf16.msra.mxu0 0
        %1253 = vmatprep.subr.bf16.mxu0 0
        %1254 = vmatpush1.bf16.msra.mxu0 0
        %1255 = vmatprep.subr.bf16.mxu0 0
        %1256 = vmatpush1.bf16.msra.mxu0 0
        %1257 = vmatprep.subr.bf16.mxu0 0
        %1258 = vmatpush1.bf16.msra.mxu0 0
        %1259 = vmatprep.subr.bf16.mxu0 0
        %1260 = vmatpush1.bf16.msra.mxu0 0
        %1261 = vmatprep.mubr.bf16.mxu0 0
        %1262 = vmatmul.mubr.bf16.gmra.mrb[0].mxu0 %v1165
        %v1263 = vpop.f32.mrb[0].mxu0
        %v1264 = vadd.f32 0.0, %v1263
        %v1265 = vpop.f32.mrb[0].mxu0
        %v1266 = vpop.f32.mrb[0].mxu0
        %v1267 = vadd.f32 0.0, %v1266
        %v1268 = vpop.f32.mrb[0].mxu0
        %1269 = vmatprep.mubr.bf16.mxu0 0
        %1270 = vmatmul.mubr.bf16.gmra.mrb[0].mxu0 %v1166
        %v1271 = vpop.f32.mrb[0].mxu0
        %v1272 = vadd.f32 0.0, %v1271
        %v1273 = vpop.f32.mrb[0].mxu0
        %v1274 = vpop.f32.mrb[0].mxu0
        %v1275 = vadd.f32 0.0, %v1274
        %v1276 = vpop.f32.mrb[0].mxu0
        %1277 = vmatprep.mubr.bf16.mxu0 0
        %1278 = vmatmul.mubr.bf16.gmra.mrb[0].mxu0 %v1167
        %v1279 = vpop.f32.mrb[0].mxu0
        %v1280 = vadd.f32 0.0, %v1279
        %v1281 = vpop.f32.mrb[0].mxu0
        %v1282 = vpop.f32.mrb[0].mxu0
        %v1283 = vadd.f32 0.0, %v1282
        %v1284 = vpop.f32.mrb[0].mxu0
        %1285 = vmatprep.mubr.bf16.mxu0 0
        %1286 = vmatmul.mubr.bf16.gmra.mrb[0].mxu0 %v1168
        %v1287 = vpop.f32.mrb[0].mxu0
        %v1288 = vadd.f32 0.0, %v1287
        %v1289 = vpop.f32.mrb[0].mxu0
        %v1290 = vpop.f32.mrb[0].mxu0
        %v1291 = vadd.f32 0.0, %v1290
        %v1292 = vpop.f32.mrb[0].mxu0
        %1293 = vmatprep.mubr.bf16.mxu0 0
        %1294 = vmatmul.mubr.bf16.gmra.mrb[0].mxu0 %v1169
        %v1295 = vpop.f32.mrb[0].mxu0
        %v1296 = vadd.f32 0.0, %v1295
        %v1297 = vpop.f32.mrb[0].mxu0
        %v1298 = vpop.f32.mrb[0].mxu0
        %v1299 = vadd.f32 0.0, %v1298
        %v1300 = vpop.f32.mrb[0].mxu0
        %1301 = vmatprep.mubr.bf16.mxu0 0
        %1302 = vmatmul.mubr.bf16.gmra.mrb[0].mxu0 %v1170
        %v1303 = vpop.f32.mrb[0].mxu0
        %v1304 = vadd.f32 0.0, %v1303
        %v1305 = vpop.f32.mrb[0].mxu0
        %v1306 = vpop.f32.mrb[0].mxu0
        %v1307 = vadd.f32 0.0, %v1306
        %v1308 = vpop.f32.mrb[0].mxu0
        %1309 = vmatprep.mubr.bf16.mxu0 0
        %1310 = vmatmul.mubr.bf16.gmra.mrb[0].mxu0 %v1171
        %v1311 = vpop.f32.mrb[0].mxu0
        %v1312 = vadd.f32 0.0, %v1311
        %v1313 = vpop.f32.mrb[0].mxu0
        %v1314 = vpop.f32.mrb[0].mxu0
        %v1315 = vadd.f32 0.0, %v1314
        %v1316 = vpop.f32.mrb[0].mxu0
        %1317 = vmatprep.mubr.bf16.mxu0 0
        %1318 = vmatmul.mubr.bf16.gmra.mrb[0].mxu0 %v1172
        %v1319 = vpop.f32.mrb[0].mxu0
        %v1320 = vadd.f32 0.0, %v1319
        %v1321 = vpop.f32.mrb[0].mxu0
        %v1322 = vpop.f32.mrb[0].mxu0
        %v1323 = vadd.f32 0.0, %v1322
        %v1324 = vpop.f32.mrb[0].mxu0
        %1325 = vdwg.mxu0
        %v1326 = vadd.f32 %v1084, %v1264
        %v1327 = vadd.f32 %v1085, %v1267
        %v1328 = vadd.f32 %v1086, %v1272
        %v1329 = vadd.f32 %v1087, %v1275
        %v1330 = vadd.f32 %v1088, %v1280
        %v1331 = vadd.f32 %v1089, %v1283
        %v1332 = vadd.f32 %v1090, %v1288
        %v1333 = vadd.f32 %v1091, %v1291
        %v1334 = vadd.f32 %v1092, %v1296
        %v1335 = vadd.f32 %v1093, %v1299
        %v1336 = vadd.f32 %v1094, %v1304
        %v1337 = vadd.f32 %v1095, %v1307
        %v1338 = vadd.f32 %v1096, %v1312
        %v1339 = vadd.f32 %v1097, %v1315
        %v1340 = vadd.f32 %v1098, %v1320
        %v1341 = vadd.f32 %v1099, %v1323
        %s1342 = scalar_lea.vmem %s339, 8 [#allocation5]
        %v1343 = vld [vmem:[%s1342] sm:$0xf]
        %v1344 = vld [vmem:[%s1342 + $0x4] sm:$0xf]
        %v1345 = vld [vmem:[%s1342 + $0x8] sm:$0xf]
        %v1346 = vld [vmem:[%s1342 + $0xc] sm:$0xf]
        %v1347 = vld [vmem:[%s1342 + $0x10] sm:$0xf]
        %v1348 = vld [vmem:[%s1342 + $0x14] sm:$0xf]
        %v1349 = vld [vmem:[%s1342 + $0x18] sm:$0xf]
        %v1350 = vld [vmem:[%s1342 + $0x1c] sm:$0xf]
        %v1351 = vld [vmem:[%s1342 + $0x20] sm:$0xf]
        %v1352 = vld [vmem:[%s1342 + $0x24] sm:$0xf]
        %v1353 = vld [vmem:[%s1342 + $0x28] sm:$0xf]
        %v1354 = vld [vmem:[%s1342 + $0x2c] sm:$0xf]
        %v1355 = vld [vmem:[%s1342 + $0x30] sm:$0xf]
        %v1356 = vld [vmem:[%s1342 + $0x34] sm:$0xf]
        %v1357 = vld [vmem:[%s1342 + $0x38] sm:$0xf]
        %v1358 = vld [vmem:[%s1342 + $0x3c] sm:$0xf]
        %s1359 = scalar_lea.vmem [#allocation8], 256
        %v1360 = vld [vmem:[%s1359] sm:$0xf]
        %v1361 = vld [vmem:[%s1359 + $0x4] sm:$0xf]
        %v1362 = vld [vmem:[%s1359 + $0x8] sm:$0xf]
        %v1363 = vld [vmem:[%s1359 + $0xc] sm:$0xf]
        %v1364 = vld [vmem:[%s1359 + $0x10] sm:$0xf]
        %v1365 = vld [vmem:[%s1359 + $0x14] sm:$0xf]
        %v1366 = vld [vmem:[%s1359 + $0x18] sm:$0xf]
        %v1367 = vld [vmem:[%s1359 + $0x1c] sm:$0xf]
        %v1368 = vld [vmem:[%s1359 + $0x20] sm:$0xf]
        %v1369 = vld [vmem:[%s1359 + $0x24] sm:$0xf]
        %v1370 = vld [vmem:[%s1359 + $0x28] sm:$0xf]
        %v1371 = vld [vmem:[%s1359 + $0x2c] sm:$0xf]
        %v1372 = vld [vmem:[%s1359 + $0x30] sm:$0xf]
        %v1373 = vld [vmem:[%s1359 + $0x34] sm:$0xf]
        %v1374 = vld [vmem:[%s1359 + $0x38] sm:$0xf]
        %v1375 = vld [vmem:[%s1359 + $0x3c] sm:$0xf]
        %v1392 = vunpack.c.l.b16 %v1343
        %v1393 = vunpack.c.l.b16 %v1344
        %v1394 = vunpack.c.l.b16 %v1345
        %v1395 = vunpack.c.l.b16 %v1346
        %v1396 = vunpack.c.l.b16 %v1347
        %v1397 = vunpack.c.l.b16 %v1348
        %v1398 = vunpack.c.l.b16 %v1349
        %v1399 = vunpack.c.l.b16 %v1350
        %v1400 = vunpack.c.l.b16 %v1351
        %v1401 = vunpack.c.l.b16 %v1352
        %v1402 = vunpack.c.l.b16 %v1353
        %v1403 = vunpack.c.l.b16 %v1354
        %v1404 = vunpack.c.l.b16 %v1355
        %v1405 = vunpack.c.l.b16 %v1356
        %v1406 = vunpack.c.l.b16 %v1357
        %v1407 = vunpack.c.l.b16 %v1358
        %v1408 = vpack.c.b16 %v1393, %v1392
        %v1409 = vpack.c.b16 %v1395, %v1394
        %v1410 = vpack.c.b16 %v1397, %v1396
        %v1411 = vpack.c.b16 %v1399, %v1398
        %v1412 = vpack.c.b16 %v1401, %v1400
        %v1413 = vpack.c.b16 %v1403, %v1402
        %v1414 = vpack.c.b16 %v1405, %v1404
        %v1415 = vpack.c.b16 %v1407, %v1406
        %v1440 = vunpack.c.l.b16 %v1360
        %v1441 = vunpack.c.l.b16 %v1361
        %v1442 = vunpack.c.l.b16 %v1362
        %v1443 = vunpack.c.l.b16 %v1363
        %v1444 = vunpack.c.l.b16 %v1364
        %v1445 = vunpack.c.l.b16 %v1365
        %v1446 = vunpack.c.l.b16 %v1366
        %v1447 = vunpack.c.l.b16 %v1367
        %v1448 = vunpack.c.l.b16 %v1368
        %v1449 = vunpack.c.l.b16 %v1369
        %v1450 = vunpack.c.l.b16 %v1370
        %v1451 = vunpack.c.l.b16 %v1371
        %v1452 = vunpack.c.l.b16 %v1372
        %v1453 = vunpack.c.l.b16 %v1373
        %v1454 = vunpack.c.l.b16 %v1374
        %v1455 = vunpack.c.l.b16 %v1375
        %v1456 = vpack.c.b16 %v1441, %v1440
        %v1457 = vpack.c.b16 %v1443, %v1442
        %v1458 = vpack.c.b16 %v1445, %v1444
        %v1459 = vpack.c.b16 %v1447, %v1446
        %v1460 = vpack.c.b16 %v1449, %v1448
        %v1461 = vpack.c.b16 %v1451, %v1450
        %v1462 = vpack.c.b16 %v1453, %v1452
        %v1463 = vpack.c.b16 %v1455, %v1454
        %1472 = vmatprep.subr.bf16.mxu0 0
        %1473 = vmatpush1.bf16.msra.mxu0 %v1456
        %1474 = vmatprep.subr.bf16.mxu0 0
        %1475 = vmatpush1.bf16.msra.mxu0 %v1457
        %1476 = vmatprep.subr.bf16.mxu0 0
        %1477 = vmatpush1.bf16.msra.mxu0 %v1458
        %1478 = vmatprep.subr.bf16.mxu0 0
        %1479 = vmatpush1.bf16.msra.mxu0 %v1459
        %1480 = vmatprep.subr.bf16.mxu0 0
        %1481 = vmatpush1.bf16.msra.mxu0 %v1460
        %1482 = vmatprep.subr.bf16.mxu0 0
        %1483 = vmatpush1.bf16.msra.mxu0 %v1461
        %1484 = vmatprep.subr.bf16.mxu0 0
        %1485 = vmatpush1.bf16.msra.mxu0 %v1462
        %1486 = vmatprep.subr.bf16.mxu0 0
        %1487 = vmatpush1.bf16.msra.mxu0 %v1463
        %1488 = vmatprep.subr.bf16.mxu0 0
        %1489 = vmatpush1.bf16.msra.mxu0 0
        %1490 = vmatprep.subr.bf16.mxu0 0
        %1491 = vmatpush1.bf16.msra.mxu0 0
        %1492 = vmatprep.subr.bf16.mxu0 0
        %1493 = vmatpush1.bf16.msra.mxu0 0
        %1494 = vmatprep.subr.bf16.mxu0 0
        %1495 = vmatpush1.bf16.msra.mxu0 0
        %1496 = vmatprep.subr.bf16.mxu0 0
        %1497 = vmatpush1.bf16.msra.mxu0 0
        %1498 = vmatprep.subr.bf16.mxu0 0
        %1499 = vmatpush1.bf16.msra.mxu0 0
        %1500 = vmatprep.subr.bf16.mxu0 0
        %1501 = vmatpush1.bf16.msra.mxu0 0
        %1502 = vmatprep.subr.bf16.mxu0 0
        %1503 = vmatpush1.bf16.msra.mxu0 0
        %1504 = vmatprep.mubr.bf16.mxu0 0
        %1505 = vmatmul.mubr.bf16.gmra.mrb[0].mxu0 %v1408
        %v1506 = vpop.f32.mrb[0].mxu0
        %v1507 = vadd.f32 0.0, %v1506
        %v1508 = vpop.f32.mrb[0].mxu0
        %v1509 = vpop.f32.mrb[0].mxu0
        %v1510 = vadd.f32 0.0, %v1509
        %v1511 = vpop.f32.mrb[0].mxu0
        %1512 = vmatprep.mubr.bf16.mxu0 0
        %1513 = vmatmul.mubr.bf16.gmra.mrb[0].mxu0 %v1409
        %v1514 = vpop.f32.mrb[0].mxu0
        %v1515 = vadd.f32 0.0, %v1514
        %v1516 = vpop.f32.mrb[0].mxu0
        %v1517 = vpop.f32.mrb[0].mxu0
        %v1518 = vadd.f32 0.0, %v1517
        %v1519 = vpop.f32.mrb[0].mxu0
        %1520 = vmatprep.mubr.bf16.mxu0 0
        %1521 = vmatmul.mubr.bf16.gmra.mrb[0].mxu0 %v1410
        %v1522 = vpop.f32.mrb[0].mxu0
        %v1523 = vadd.f32 0.0, %v1522
        %v1524 = vpop.f32.mrb[0].mxu0
        %v1525 = vpop.f32.mrb[0].mxu0
        %v1526 = vadd.f32 0.0, %v1525
        %v1527 = vpop.f32.mrb[0].mxu0
        %1528 = vmatprep.mubr.bf16.mxu0 0
        %1529 = vmatmul.mubr.bf16.gmra.mrb[0].mxu0 %v1411
        %v1530 = vpop.f32.mrb[0].mxu0
        %v1531 = vadd.f32 0.0, %v1530
        %v1532 = vpop.f32.mrb[0].mxu0
        %v1533 = vpop.f32.mrb[0].mxu0
        %v1534 = vadd.f32 0.0, %v1533
        %v1535 = vpop.f32.mrb[0].mxu0
        %1536 = vmatprep.mubr.bf16.mxu0 0
        %1537 = vmatmul.mubr.bf16.gmra.mrb[0].mxu0 %v1412
        %v1538 = vpop.f32.mrb[0].mxu0
        %v1539 = vadd.f32 0.0, %v1538
        %v1540 = vpop.f32.mrb[0].mxu0
        %v1541 = vpop.f32.mrb[0].mxu0
        %v1542 = vadd.f32 0.0, %v1541
        %v1543 = vpop.f32.mrb[0].mxu0
        %1544 = vmatprep.mubr.bf16.mxu0 0
        %1545 = vmatmul.mubr.bf16.gmra.mrb[0].mxu0 %v1413
        %v1546 = vpop.f32.mrb[0].mxu0
        %v1547 = vadd.f32 0.0, %v1546
        %v1548 = vpop.f32.mrb[0].mxu0
        %v1549 = vpop.f32.mrb[0].mxu0
        %v1550 = vadd.f32 0.0, %v1549
        %v1551 = vpop.f32.mrb[0].mxu0
        %1552 = vmatprep.mubr.bf16.mxu0 0
        %1553 = vmatmul.mubr.bf16.gmra.mrb[0].mxu0 %v1414
        %v1554 = vpop.f32.mrb[0].mxu0
        %v1555 = vadd.f32 0.0, %v1554
        %v1556 = vpop.f32.mrb[0].mxu0
        %v1557 = vpop.f32.mrb[0].mxu0
        %v1558 = vadd.f32 0.0, %v1557
        %v1559 = vpop.f32.mrb[0].mxu0
        %1560 = vmatprep.mubr.bf16.mxu0 0
        %1561 = vmatmul.mubr.bf16.gmra.mrb[0].mxu0 %v1415
        %v1562 = vpop.f32.mrb[0].mxu0
        %v1563 = vadd.f32 0.0, %v1562
        %v1564 = vpop.f32.mrb[0].mxu0
        %v1565 = vpop.f32.mrb[0].mxu0
        %v1566 = vadd.f32 0.0, %v1565
        %v1567 = vpop.f32.mrb[0].mxu0
        %1568 = vdwg.mxu0
        %v1569 = vadd.f32 %v1326, %v1507
        %v1570 = vadd.f32 %v1327, %v1510
        %v1571 = vadd.f32 %v1328, %v1515
        %v1572 = vadd.f32 %v1329, %v1518
        %v1573 = vadd.f32 %v1330, %v1523
        %v1574 = vadd.f32 %v1331, %v1526
        %v1575 = vadd.f32 %v1332, %v1531
        %v1576 = vadd.f32 %v1333, %v1534
        %v1577 = vadd.f32 %v1334, %v1539
        %v1578 = vadd.f32 %v1335, %v1542
        %v1579 = vadd.f32 %v1336, %v1547
        %v1580 = vadd.f32 %v1337, %v1550
        %v1581 = vadd.f32 %v1338, %v1555
        %v1582 = vadd.f32 %v1339, %v1558
        %v1583 = vadd.f32 %v1340, %v1563
        %v1584 = vadd.f32 %v1341, %v1566
        %s1585 = scalar_lea.vmem %s339, 16 [#allocation5]
        %v1586 = vld [vmem:[%s1585] sm:$0xf]
        %v1587 = vld [vmem:[%s1585 + $0x4] sm:$0xf]
        %v1588 = vld [vmem:[%s1585 + $0x8] sm:$0xf]
        %v1589 = vld [vmem:[%s1585 + $0xc] sm:$0xf]
        %v1590 = vld [vmem:[%s1585 + $0x10] sm:$0xf]
        %v1591 = vld [vmem:[%s1585 + $0x14] sm:$0xf]
        %v1592 = vld [vmem:[%s1585 + $0x18] sm:$0xf]
        %v1593 = vld [vmem:[%s1585 + $0x1c] sm:$0xf]
        %v1594 = vld [vmem:[%s1585 + $0x20] sm:$0xf]
        %v1595 = vld [vmem:[%s1585 + $0x24] sm:$0xf]
        %v1596 = vld [vmem:[%s1585 + $0x28] sm:$0xf]
        %v1597 = vld [vmem:[%s1585 + $0x2c] sm:$0xf]
        %v1598 = vld [vmem:[%s1585 + $0x30] sm:$0xf]
        %v1599 = vld [vmem:[%s1585 + $0x34] sm:$0xf]
        %v1600 = vld [vmem:[%s1585 + $0x38] sm:$0xf]
        %v1601 = vld [vmem:[%s1585 + $0x3c] sm:$0xf]
        %s1602 = scalar_lea.vmem [#allocation8], 448
        %v1603 = vld [vmem:[%s1602] sm:$0xf]
        %v1604 = vld [vmem:[%s1602 + $0x4] sm:$0xf]
        %v1605 = vld [vmem:[%s1602 + $0x8] sm:$0xf]
        %v1606 = vld [vmem:[%s1602 + $0xc] sm:$0xf]
        %v1607 = vld [vmem:[%s1602 + $0x10] sm:$0xf]
        %v1608 = vld [vmem:[%s1602 + $0x14] sm:$0xf]
        %v1609 = vld [vmem:[%s1602 + $0x18] sm:$0xf]
        %v1610 = vld [vmem:[%s1602 + $0x1c] sm:$0xf]
        %v1611 = vld [vmem:[%s1602 + $0x20] sm:$0xf]
        %v1612 = vld [vmem:[%s1602 + $0x24] sm:$0xf]
        %v1613 = vld [vmem:[%s1602 + $0x28] sm:$0xf]
        %v1614 = vld [vmem:[%s1602 + $0x2c] sm:$0xf]
        %v1615 = vld [vmem:[%s1602 + $0x30] sm:$0xf]
        %v1616 = vld [vmem:[%s1602 + $0x34] sm:$0xf]
        %v1617 = vld [vmem:[%s1602 + $0x38] sm:$0xf]
        %v1618 = vld [vmem:[%s1602 + $0x3c] sm:$0xf]
        %v1635 = vunpack.c.l.b16 %v1586
        %v1636 = vunpack.c.l.b16 %v1587
        %v1637 = vunpack.c.l.b16 %v1588
        %v1638 = vunpack.c.l.b16 %v1589
        %v1639 = vunpack.c.l.b16 %v1590
        %v1640 = vunpack.c.l.b16 %v1591
        %v1641 = vunpack.c.l.b16 %v1592
        %v1642 = vunpack.c.l.b16 %v1593
        %v1643 = vunpack.c.l.b16 %v1594
        %v1644 = vunpack.c.l.b16 %v1595
        %v1645 = vunpack.c.l.b16 %v1596
        %v1646 = vunpack.c.l.b16 %v1597
        %v1647 = vunpack.c.l.b16 %v1598
        %v1648 = vunpack.c.l.b16 %v1599
        %v1649 = vunpack.c.l.b16 %v1600
        %v1650 = vunpack.c.l.b16 %v1601
        %v1651 = vpack.c.b16 %v1636, %v1635
        %v1652 = vpack.c.b16 %v1638, %v1637
        %v1653 = vpack.c.b16 %v1640, %v1639
        %v1654 = vpack.c.b16 %v1642, %v1641
        %v1655 = vpack.c.b16 %v1644, %v1643
        %v1656 = vpack.c.b16 %v1646, %v1645
        %v1657 = vpack.c.b16 %v1648, %v1647
        %v1658 = vpack.c.b16 %v1650, %v1649
        %v1683 = vunpack.c.l.b16 %v1603
        %v1684 = vunpack.c.l.b16 %v1604
        %v1685 = vunpack.c.l.b16 %v1605
        %v1686 = vunpack.c.l.b16 %v1606
        %v1687 = vunpack.c.l.b16 %v1607
        %v1688 = vunpack.c.l.b16 %v1608
        %v1689 = vunpack.c.l.b16 %v1609
        %v1690 = vunpack.c.l.b16 %v1610
        %v1691 = vunpack.c.l.b16 %v1611
        %v1692 = vunpack.c.l.b16 %v1612
        %v1693 = vunpack.c.l.b16 %v1613
        %v1694 = vunpack.c.l.b16 %v1614
        %v1695 = vunpack.c.l.b16 %v1615
        %v1696 = vunpack.c.l.b16 %v1616
        %v1697 = vunpack.c.l.b16 %v1617
        %v1698 = vunpack.c.l.b16 %v1618
        %v1699 = vpack.c.b16 %v1684, %v1683
        %v1700 = vpack.c.b16 %v1686, %v1685
        %v1701 = vpack.c.b16 %v1688, %v1687
        %v1702 = vpack.c.b16 %v1690, %v1689
        %v1703 = vpack.c.b16 %v1692, %v1691
        %v1704 = vpack.c.b16 %v1694, %v1693
        %v1705 = vpack.c.b16 %v1696, %v1695
        %v1706 = vpack.c.b16 %v1698, %v1697
        %1715 = vmatprep.subr.bf16.mxu0 0
        %1716 = vmatpush1.bf16.msra.mxu0 %v1699
        %1717 = vmatprep.subr.bf16.mxu0 0
        %1718 = vmatpush1.bf16.msra.mxu0 %v1700
        %1719 = vmatprep.subr.bf16.mxu0 0
        %1720 = vmatpush1.bf16.msra.mxu0 %v1701
        %1721 = vmatprep.subr.bf16.mxu0 0
        %1722 = vmatpush1.bf16.msra.mxu0 %v1702
        %1723 = vmatprep.subr.bf16.mxu0 0
        %1724 = vmatpush1.bf16.msra.mxu0 %v1703
        %1725 = vmatprep.subr.bf16.mxu0 0
        %1726 = vmatpush1.bf16.msra.mxu0 %v1704
        %1727 = vmatprep.subr.bf16.mxu0 0
        %1728 = vmatpush1.bf16.msra.mxu0 %v1705
        %1729 = vmatprep.subr.bf16.mxu0 0
        %1730 = vmatpush1.bf16.msra.mxu0 %v1706
        %1731 = vmatprep.subr.bf16.mxu0 0
        %1732 = vmatpush1.bf16.msra.mxu0 0
        %1733 = vmatprep.subr.bf16.mxu0 0
        %1734 = vmatpush1.bf16.msra.mxu0 0
        %1735 = vmatprep.subr.bf16.mxu0 0
        %1736 = vmatpush1.bf16.msra.mxu0 0
        %1737 = vmatprep.subr.bf16.mxu0 0
        %1738 = vmatpush1.bf16.msra.mxu0 0
        %1739 = vmatprep.subr.bf16.mxu0 0
        %1740 = vmatpush1.bf16.msra.mxu0 0
        %1741 = vmatprep.subr.bf16.mxu0 0
        %1742 = vmatpush1.bf16.msra.mxu0 0
        %1743 = vmatprep.subr.bf16.mxu0 0
        %1744 = vmatpush1.bf16.msra.mxu0 0
        %1745 = vmatprep.subr.bf16.mxu0 0
        %1746 = vmatpush1.bf16.msra.mxu0 0
        %1747 = vmatprep.mubr.bf16.mxu0 0
        %1748 = vmatmul.mubr.bf16.gmra.mrb[0].mxu0 %v1651
        %v1749 = vpop.f32.mrb[0].mxu0
        %v1750 = vadd.f32 0.0, %v1749
        %v1751 = vpop.f32.mrb[0].mxu0
        %v1752 = vpop.f32.mrb[0].mxu0
        %v1753 = vadd.f32 0.0, %v1752
        %v1754 = vpop.f32.mrb[0].mxu0
        %1755 = vmatprep.mubr.bf16.mxu0 0
        %1756 = vmatmul.mubr.bf16.gmra.mrb[0].mxu0 %v1652
        %v1757 = vpop.f32.mrb[0].mxu0
        %v1758 = vadd.f32 0.0, %v1757
        %v1759 = vpop.f32.mrb[0].mxu0
        %v1760 = vpop.f32.mrb[0].mxu0
        %v1761 = vadd.f32 0.0, %v1760
        %v1762 = vpop.f32.mrb[0].mxu0
        %1763 = vmatprep.mubr.bf16.mxu0 0
        %1764 = vmatmul.mubr.bf16.gmra.mrb[0].mxu0 %v1653
        %v1765 = vpop.f32.mrb[0].mxu0
        %v1766 = vadd.f32 0.0, %v1765
        %v1767 = vpop.f32.mrb[0].mxu0
        %v1768 = vpop.f32.mrb[0].mxu0
        %v1769 = vadd.f32 0.0, %v1768
        %v1770 = vpop.f32.mrb[0].mxu0
        %1771 = vmatprep.mubr.bf16.mxu0 0
        %1772 = vmatmul.mubr.bf16.gmra.mrb[0].mxu0 %v1654
        %v1773 = vpop.f32.mrb[0].mxu0
        %v1774 = vadd.f32 0.0, %v1773
        %v1775 = vpop.f32.mrb[0].mxu0
        %v1776 = vpop.f32.mrb[0].mxu0
        %v1777 = vadd.f32 0.0, %v1776
        %v1778 = vpop.f32.mrb[0].mxu0
        %1779 = vmatprep.mubr.bf16.mxu0 0
        %1780 = vmatmul.mubr.bf16.gmra.mrb[0].mxu0 %v1655
        %v1781 = vpop.f32.mrb[0].mxu0
        %v1782 = vadd.f32 0.0, %v1781
        %v1783 = vpop.f32.mrb[0].mxu0
        %v1784 = vpop.f32.mrb[0].mxu0
        %v1785 = vadd.f32 0.0, %v1784
        %v1786 = vpop.f32.mrb[0].mxu0
        %1787 = vmatprep.mubr.bf16.mxu0 0
        %1788 = vmatmul.mubr.bf16.gmra.mrb[0].mxu0 %v1656
        %v1789 = vpop.f32.mrb[0].mxu0
        %v1790 = vadd.f32 0.0, %v1789
        %v1791 = vpop.f32.mrb[0].mxu0
        %v1792 = vpop.f32.mrb[0].mxu0
        %v1793 = vadd.f32 0.0, %v1792
        %v1794 = vpop.f32.mrb[0].mxu0
        %1795 = vmatprep.mubr.bf16.mxu0 0
        %1796 = vmatmul.mubr.bf16.gmra.mrb[0].mxu0 %v1657
        %v1797 = vpop.f32.mrb[0].mxu0
        %v1798 = vadd.f32 0.0, %v1797
        %v1799 = vpop.f32.mrb[0].mxu0
        %v1800 = vpop.f32.mrb[0].mxu0
        %v1801 = vadd.f32 0.0, %v1800
        %v1802 = vpop.f32.mrb[0].mxu0
        %1803 = vmatprep.mubr.bf16.mxu0 0
        %1804 = vmatmul.mubr.bf16.gmra.mrb[0].mxu0 %v1658
        %v1805 = vpop.f32.mrb[0].mxu0
        %v1806 = vadd.f32 0.0, %v1805
        %v1807 = vpop.f32.mrb[0].mxu0
        %v1808 = vpop.f32.mrb[0].mxu0
        %v1809 = vadd.f32 0.0, %v1808
        %v1810 = vpop.f32.mrb[0].mxu0
        %1811 = vdwg.mxu0
        %v1812 = vadd.f32 %v1569, %v1750
        %v1813 = vadd.f32 %v1570, %v1753
        %v1814 = vadd.f32 %v1571, %v1758
        %v1815 = vadd.f32 %v1572, %v1761
        %v1816 = vadd.f32 %v1573, %v1766
        %v1817 = vadd.f32 %v1574, %v1769
        %v1818 = vadd.f32 %v1575, %v1774
        %v1819 = vadd.f32 %v1576, %v1777
        %v1820 = vadd.f32 %v1577, %v1782
        %v1821 = vadd.f32 %v1578, %v1785
        %v1822 = vadd.f32 %v1579, %v1790
        %v1823 = vadd.f32 %v1580, %v1793
        %v1824 = vadd.f32 %v1581, %v1798
        %v1825 = vadd.f32 %v1582, %v1801
        %v1826 = vadd.f32 %v1583, %v1806
        %v1827 = vadd.f32 %v1584, %v1809
        %v1828 = vld [vmem:[%s348] sm:$0xf]
        %v1829 = vld [vmem:[%s348 + $0x4] sm:$0xf]
        %v1830 = vld [vmem:[%s348 + $0x8] sm:$0xf]
        %v1831 = vld [vmem:[%s348 + $0xc] sm:$0xf]
        %v1832 = vld [vmem:[%s348 + $0x10] sm:$0xf]
        %v1833 = vld [vmem:[%s348 + $0x14] sm:$0xf]
        %v1834 = vld [vmem:[%s348 + $0x18] sm:$0xf]
        %v1835 = vld [vmem:[%s348 + $0x1c] sm:$0xf]
        %v1836 = vld [vmem:[%s348 + $0x20] sm:$0xf]
        %v1837 = vld [vmem:[%s348 + $0x24] sm:$0xf]
        %v1838 = vld [vmem:[%s348 + $0x28] sm:$0xf]
        %v1839 = vld [vmem:[%s348 + $0x2c] sm:$0xf]
        %v1840 = vld [vmem:[%s348 + $0x30] sm:$0xf]
        %v1841 = vld [vmem:[%s348 + $0x34] sm:$0xf]
        %v1842 = vld [vmem:[%s348 + $0x38] sm:$0xf]
        %v1843 = vld [vmem:[%s348 + $0x3c] sm:$0xf]
        %s1844 = scalar_lea.vmem [#allocation8], 128
        %v1845 = vld [vmem:[%s1844] sm:$0xf]
        %v1846 = vld [vmem:[%s1844 + $0x4] sm:$0xf]
        %v1847 = vld [vmem:[%s1844 + $0x8] sm:$0xf]
        %v1848 = vld [vmem:[%s1844 + $0xc] sm:$0xf]
        %v1849 = vld [vmem:[%s1844 + $0x10] sm:$0xf]
        %v1850 = vld [vmem:[%s1844 + $0x14] sm:$0xf]
        %v1851 = vld [vmem:[%s1844 + $0x18] sm:$0xf]
        %v1852 = vld [vmem:[%s1844 + $0x1c] sm:$0xf]
        %v1853 = vld [vmem:[%s1844 + $0x20] sm:$0xf]
        %v1854 = vld [vmem:[%s1844 + $0x24] sm:$0xf]
        %v1855 = vld [vmem:[%s1844 + $0x28] sm:$0xf]
        %v1856 = vld [vmem:[%s1844 + $0x2c] sm:$0xf]
        %v1857 = vld [vmem:[%s1844 + $0x30] sm:$0xf]
        %v1858 = vld [vmem:[%s1844 + $0x34] sm:$0xf]
        %v1859 = vld [vmem:[%s1844 + $0x38] sm:$0xf]
        %v1860 = vld [vmem:[%s1844 + $0x3c] sm:$0xf]
        %v1877 = vunpack.c.l.b16 %v1828
        %v1878 = vunpack.c.l.b16 %v1829
        %v1879 = vunpack.c.l.b16 %v1830
        %v1880 = vunpack.c.l.b16 %v1831
        %v1881 = vunpack.c.l.b16 %v1832
        %v1882 = vunpack.c.l.b16 %v1833
        %v1883 = vunpack.c.l.b16 %v1834
        %v1884 = vunpack.c.l.b16 %v1835
        %v1885 = vunpack.c.l.b16 %v1836
        %v1886 = vunpack.c.l.b16 %v1837
        %v1887 = vunpack.c.l.b16 %v1838
        %v1888 = vunpack.c.l.b16 %v1839
        %v1889 = vunpack.c.l.b16 %v1840
        %v1890 = vunpack.c.l.b16 %v1841
        %v1891 = vunpack.c.l.b16 %v1842
        %v1892 = vunpack.c.l.b16 %v1843
        %v1893 = vpack.c.b16 %v1878, %v1877
        %v1894 = vpack.c.b16 %v1880, %v1879
        %v1895 = vpack.c.b16 %v1882, %v1881
        %v1896 = vpack.c.b16 %v1884, %v1883
        %v1897 = vpack.c.b16 %v1886, %v1885
        %v1898 = vpack.c.b16 %v1888, %v1887
        %v1899 = vpack.c.b16 %v1890, %v1889
        %v1900 = vpack.c.b16 %v1892, %v1891
        %v1925 = vunpack.c.l.b16 %v1845
        %v1926 = vunpack.c.l.b16 %v1846
        %v1927 = vunpack.c.l.b16 %v1847
        %v1928 = vunpack.c.l.b16 %v1848
        %v1929 = vunpack.c.l.b16 %v1849
        %v1930 = vunpack.c.l.b16 %v1850
        %v1931 = vunpack.c.l.b16 %v1851
        %v1932 = vunpack.c.l.b16 %v1852
        %v1933 = vunpack.c.l.b16 %v1853
        %v1934 = vunpack.c.l.b16 %v1854
        %v1935 = vunpack.c.l.b16 %v1855
        %v1936 = vunpack.c.l.b16 %v1856
        %v1937 = vunpack.c.l.b16 %v1857
        %v1938 = vunpack.c.l.b16 %v1858
        %v1939 = vunpack.c.l.b16 %v1859
        %v1940 = vunpack.c.l.b16 %v1860
        %v1941 = vpack.c.b16 %v1926, %v1925
        %v1942 = vpack.c.b16 %v1928, %v1927
        %v1943 = vpack.c.b16 %v1930, %v1929
        %v1944 = vpack.c.b16 %v1932, %v1931
        %v1945 = vpack.c.b16 %v1934, %v1933
        %v1946 = vpack.c.b16 %v1936, %v1935
        %v1947 = vpack.c.b16 %v1938, %v1937
        %v1948 = vpack.c.b16 %v1940, %v1939
        %1957 = vmatprep.subr.bf16.mxu0 0
        %1958 = vmatpush1.bf16.msra.mxu0 %v1941
        %1959 = vmatprep.subr.bf16.mxu0 0
        %1960 = vmatpush1.bf16.msra.mxu0 %v1942
        %1961 = vmatprep.subr.bf16.mxu0 0
        %1962 = vmatpush1.bf16.msra.mxu0 %v1943
        %1963 = vmatprep.subr.bf16.mxu0 0
        %1964 = vmatpush1.bf16.msra.mxu0 %v1944
        %1965 = vmatprep.subr.bf16.mxu0 0
        %1966 = vmatpush1.bf16.msra.mxu0 %v1945
        %1967 = vmatprep.subr.bf16.mxu0 0
        %1968 = vmatpush1.bf16.msra.mxu0 %v1946
        %1969 = vmatprep.subr.bf16.mxu0 0
        %1970 = vmatpush1.bf16.msra.mxu0 %v1947
        %1971 = vmatprep.subr.bf16.mxu0 0
        %1972 = vmatpush1.bf16.msra.mxu0 %v1948
        %1973 = vmatprep.subr.bf16.mxu0 0
        %1974 = vmatpush1.bf16.msra.mxu0 0
        %1975 = vmatprep.subr.bf16.mxu0 0
        %1976 = vmatpush1.bf16.msra.mxu0 0
        %1977 = vmatprep.subr.bf16.mxu0 0
        %1978 = vmatpush1.bf16.msra.mxu0 0
        %1979 = vmatprep.subr.bf16.mxu0 0
        %1980 = vmatpush1.bf16.msra.mxu0 0
        %1981 = vmatprep.subr.bf16.mxu0 0
        %1982 = vmatpush1.bf16.msra.mxu0 0
        %1983 = vmatprep.subr.bf16.mxu0 0
        %1984 = vmatpush1.bf16.msra.mxu0 0
        %1985 = vmatprep.subr.bf16.mxu0 0
        %1986 = vmatpush1.bf16.msra.mxu0 0
        %1987 = vmatprep.subr.bf16.mxu0 0
        %1988 = vmatpush1.bf16.msra.mxu0 0
        %1989 = vmatprep.mubr.bf16.mxu0 0
        %1990 = vmatmul.mubr.bf16.gmra.mrb[0].mxu0 %v1893
        %v1991 = vpop.f32.mrb[0].mxu0
        %v1992 = vadd.f32 0.0, %v1991
        %v1993 = vpop.f32.mrb[0].mxu0
        %v1994 = vpop.f32.mrb[0].mxu0
        %v1995 = vadd.f32 0.0, %v1994
        %v1996 = vpop.f32.mrb[0].mxu0
        %1997 = vmatprep.mubr.bf16.mxu0 0
        %1998 = vmatmul.mubr.bf16.gmra.mrb[0].mxu0 %v1894
        %v1999 = vpop.f32.mrb[0].mxu0
        %v2000 = vadd.f32 0.0, %v1999
        %v2001 = vpop.f32.mrb[0].mxu0
        %v2002 = vpop.f32.mrb[0].mxu0
        %v2003 = vadd.f32 0.0, %v2002
        %v2004 = vpop.f32.mrb[0].mxu0
        %2005 = vmatprep.mubr.bf16.mxu0 0
        %2006 = vmatmul.mubr.bf16.gmra.mrb[0].mxu0 %v1895
        %v2007 = vpop.f32.mrb[0].mxu0
        %v2008 = vadd.f32 0.0, %v2007
        %v2009 = vpop.f32.mrb[0].mxu0
        %v2010 = vpop.f32.mrb[0].mxu0
        %v2011 = vadd.f32 0.0, %v2010
        %v2012 = vpop.f32.mrb[0].mxu0
        %2013 = vmatprep.mubr.bf16.mxu0 0
        %2014 = vmatmul.mubr.bf16.gmra.mrb[0].mxu0 %v1896
        %v2015 = vpop.f32.mrb[0].mxu0
        %v2016 = vadd.f32 0.0, %v2015
        %v2017 = vpop.f32.mrb[0].mxu0
        %v2018 = vpop.f32.mrb[0].mxu0
        %v2019 = vadd.f32 0.0, %v2018
        %v2020 = vpop.f32.mrb[0].mxu0
        %2021 = vmatprep.mubr.bf16.mxu0 0
        %2022 = vmatmul.mubr.bf16.gmra.mrb[0].mxu0 %v1897
        %v2023 = vpop.f32.mrb[0].mxu0
        %v2024 = vadd.f32 0.0, %v2023
        %v2025 = vpop.f32.mrb[0].mxu0
        %v2026 = vpop.f32.mrb[0].mxu0
        %v2027 = vadd.f32 0.0, %v2026
        %v2028 = vpop.f32.mrb[0].mxu0
        %2029 = vmatprep.mubr.bf16.mxu0 0
        %2030 = vmatmul.mubr.bf16.gmra.mrb[0].mxu0 %v1898
        %v2031 = vpop.f32.mrb[0].mxu0
        %v2032 = vadd.f32 0.0, %v2031
        %v2033 = vpop.f32.mrb[0].mxu0
        %v2034 = vpop.f32.mrb[0].mxu0
        %v2035 = vadd.f32 0.0, %v2034
        %v2036 = vpop.f32.mrb[0].mxu0
        %2037 = vmatprep.mubr.bf16.mxu0 0
        %2038 = vmatmul.mubr.bf16.gmra.mrb[0].mxu0 %v1899
        %v2039 = vpop.f32.mrb[0].mxu0
        %v2040 = vadd.f32 0.0, %v2039
        %v2041 = vpop.f32.mrb[0].mxu0
        %v2042 = vpop.f32.mrb[0].mxu0
        %v2043 = vadd.f32 0.0, %v2042
        %v2044 = vpop.f32.mrb[0].mxu0
        %2045 = vmatprep.mubr.bf16.mxu0 0
        %2046 = vmatmul.mubr.bf16.gmra.mrb[0].mxu0 %v1900
        %v2047 = vpop.f32.mrb[0].mxu0
        %v2048 = vadd.f32 0.0, %v2047
        %v2049 = vpop.f32.mrb[0].mxu0
        %v2050 = vpop.f32.mrb[0].mxu0
        %v2051 = vadd.f32 0.0, %v2050
        %v2052 = vpop.f32.mrb[0].mxu0
        %2053 = vdwg.mxu0
        %v2054 = vadd.f32 %v1812, %v1992
        %v2055 = vadd.f32 %v1813, %v1995
        %v2056 = vadd.f32 %v1814, %v2000
        %v2057 = vadd.f32 %v1815, %v2003
        %v2058 = vadd.f32 %v1816, %v2008
        %v2059 = vadd.f32 %v1817, %v2011
        %v2060 = vadd.f32 %v1818, %v2016
        %v2061 = vadd.f32 %v1819, %v2019
        %v2062 = vadd.f32 %v1820, %v2024
        %v2063 = vadd.f32 %v1821, %v2027
        %v2064 = vadd.f32 %v1822, %v2032
        %v2065 = vadd.f32 %v1823, %v2035
        %v2066 = vadd.f32 %v1824, %v2040
        %v2067 = vadd.f32 %v1825, %v2043
        %v2068 = vadd.f32 %v1826, %v2048
        %v2069 = vadd.f32 %v1827, %v2051
        %s2070 = scalar_lea.vmem %s348, 8 [#allocation7]
        %v2071 = vld [vmem:[%s2070] sm:$0xf]
        %v2072 = vld [vmem:[%s2070 + $0x4] sm:$0xf]
        %v2073 = vld [vmem:[%s2070 + $0x8] sm:$0xf]
        %v2074 = vld [vmem:[%s2070 + $0xc] sm:$0xf]
        %v2075 = vld [vmem:[%s2070 + $0x10] sm:$0xf]
        %v2076 = vld [vmem:[%s2070 + $0x14] sm:$0xf]
        %v2077 = vld [vmem:[%s2070 + $0x18] sm:$0xf]
        %v2078 = vld [vmem:[%s2070 + $0x1c] sm:$0xf]
        %v2079 = vld [vmem:[%s2070 + $0x20] sm:$0xf]
        %v2080 = vld [vmem:[%s2070 + $0x24] sm:$0xf]
        %v2081 = vld [vmem:[%s2070 + $0x28] sm:$0xf]
        %v2082 = vld [vmem:[%s2070 + $0x2c] sm:$0xf]
        %v2083 = vld [vmem:[%s2070 + $0x30] sm:$0xf]
        %v2084 = vld [vmem:[%s2070 + $0x34] sm:$0xf]
        %v2085 = vld [vmem:[%s2070 + $0x38] sm:$0xf]
        %v2086 = vld [vmem:[%s2070 + $0x3c] sm:$0xf]
        %s2087 = scalar_lea.vmem [#allocation8], 320
        %v2088 = vld [vmem:[%s2087] sm:$0xf]
        %v2089 = vld [vmem:[%s2087 + $0x4] sm:$0xf]
        %v2090 = vld [vmem:[%s2087 + $0x8] sm:$0xf]
        %v2091 = vld [vmem:[%s2087 + $0xc] sm:$0xf]
        %v2092 = vld [vmem:[%s2087 + $0x10] sm:$0xf]
        %v2093 = vld [vmem:[%s2087 + $0x14] sm:$0xf]
        %v2094 = vld [vmem:[%s2087 + $0x18] sm:$0xf]
        %v2095 = vld [vmem:[%s2087 + $0x1c] sm:$0xf]
        %v2096 = vld [vmem:[%s2087 + $0x20] sm:$0xf]
        %v2097 = vld [vmem:[%s2087 + $0x24] sm:$0xf]
        %v2098 = vld [vmem:[%s2087 + $0x28] sm:$0xf]
        %v2099 = vld [vmem:[%s2087 + $0x2c] sm:$0xf]
        %v2100 = vld [vmem:[%s2087 + $0x30] sm:$0xf]
        %v2101 = vld [vmem:[%s2087 + $0x34] sm:$0xf]
        %v2102 = vld [vmem:[%s2087 + $0x38] sm:$0xf]
        %v2103 = vld [vmem:[%s2087 + $0x3c] sm:$0xf]
        %v2120 = vunpack.c.l.b16 %v2071
        %v2121 = vunpack.c.l.b16 %v2072
        %v2122 = vunpack.c.l.b16 %v2073
        %v2123 = vunpack.c.l.b16 %v2074
        %v2124 = vunpack.c.l.b16 %v2075
        %v2125 = vunpack.c.l.b16 %v2076
        %v2126 = vunpack.c.l.b16 %v2077
        %v2127 = vunpack.c.l.b16 %v2078
        %v2128 = vunpack.c.l.b16 %v2079
        %v2129 = vunpack.c.l.b16 %v2080
        %v2130 = vunpack.c.l.b16 %v2081
        %v2131 = vunpack.c.l.b16 %v2082
        %v2132 = vunpack.c.l.b16 %v2083
        %v2133 = vunpack.c.l.b16 %v2084
        %v2134 = vunpack.c.l.b16 %v2085
        %v2135 = vunpack.c.l.b16 %v2086
        %v2136 = vpack.c.b16 %v2121, %v2120
        %v2137 = vpack.c.b16 %v2123, %v2122
        %v2138 = vpack.c.b16 %v2125, %v2124
        %v2139 = vpack.c.b16 %v2127, %v2126
        %v2140 = vpack.c.b16 %v2129, %v2128
        %v2141 = vpack.c.b16 %v2131, %v2130
        %v2142 = vpack.c.b16 %v2133, %v2132
        %v2143 = vpack.c.b16 %v2135, %v2134
        %v2168 = vunpack.c.l.b16 %v2088
        %v2169 = vunpack.c.l.b16 %v2089
        %v2170 = vunpack.c.l.b16 %v2090
        %v2171 = vunpack.c.l.b16 %v2091
        %v2172 = vunpack.c.l.b16 %v2092
        %v2173 = vunpack.c.l.b16 %v2093
        %v2174 = vunpack.c.l.b16 %v2094
        %v2175 = vunpack.c.l.b16 %v2095
        %v2176 = vunpack.c.l.b16 %v2096
        %v2177 = vunpack.c.l.b16 %v2097
        %v2178 = vunpack.c.l.b16 %v2098
        %v2179 = vunpack.c.l.b16 %v2099
        %v2180 = vunpack.c.l.b16 %v2100
        %v2181 = vunpack.c.l.b16 %v2101
        %v2182 = vunpack.c.l.b16 %v2102
        %v2183 = vunpack.c.l.b16 %v2103
        %v2184 = vpack.c.b16 %v2169, %v2168
        %v2185 = vpack.c.b16 %v2171, %v2170
        %v2186 = vpack.c.b16 %v2173, %v2172
        %v2187 = vpack.c.b16 %v2175, %v2174
        %v2188 = vpack.c.b16 %v2177, %v2176
        %v2189 = vpack.c.b16 %v2179, %v2178
        %v2190 = vpack.c.b16 %v2181, %v2180
        %v2191 = vpack.c.b16 %v2183, %v2182
        %2200 = vmatprep.subr.bf16.mxu0 0
        %2201 = vmatpush1.bf16.msra.mxu0 %v2184
        %2202 = vmatprep.subr.bf16.mxu0 0
        %2203 = vmatpush1.bf16.msra.mxu0 %v2185
        %2204 = vmatprep.subr.bf16.mxu0 0
        %2205 = vmatpush1.bf16.msra.mxu0 %v2186
        %2206 = vmatprep.subr.bf16.mxu0 0
        %2207 = vmatpush1.bf16.msra.mxu0 %v2187
        %2208 = vmatprep.subr.bf16.mxu0 0
        %2209 = vmatpush1.bf16.msra.mxu0 %v2188
        %2210 = vmatprep.subr.bf16.mxu0 0
        %2211 = vmatpush1.bf16.msra.mxu0 %v2189
        %2212 = vmatprep.subr.bf16.mxu0 0
        %2213 = vmatpush1.bf16.msra.mxu0 %v2190
        %2214 = vmatprep.subr.bf16.mxu0 0
        %2215 = vmatpush1.bf16.msra.mxu0 %v2191
        %2216 = vmatprep.subr.bf16.mxu0 0
        %2217 = vmatpush1.bf16.msra.mxu0 0
        %2218 = vmatprep.subr.bf16.mxu0 0
        %2219 = vmatpush1.bf16.msra.mxu0 0
        %2220 = vmatprep.subr.bf16.mxu0 0
        %2221 = vmatpush1.bf16.msra.mxu0 0
        %2222 = vmatprep.subr.bf16.mxu0 0
        %2223 = vmatpush1.bf16.msra.mxu0 0
        %2224 = vmatprep.subr.bf16.mxu0 0
        %2225 = vmatpush1.bf16.msra.mxu0 0
        %2226 = vmatprep.subr.bf16.mxu0 0
        %2227 = vmatpush1.bf16.msra.mxu0 0
        %2228 = vmatprep.subr.bf16.mxu0 0
        %2229 = vmatpush1.bf16.msra.mxu0 0
        %2230 = vmatprep.subr.bf16.mxu0 0
        %2231 = vmatpush1.bf16.msra.mxu0 0
        %2232 = vmatprep.mubr.bf16.mxu0 0
        %2233 = vmatmul.mubr.bf16.gmra.mrb[0].mxu0 %v2136
        %v2234 = vpop.f32.mrb[0].mxu0
        %v2235 = vadd.f32 0.0, %v2234
        %v2236 = vpop.f32.mrb[0].mxu0
        %v2237 = vpop.f32.mrb[0].mxu0
        %v2238 = vadd.f32 0.0, %v2237
        %v2239 = vpop.f32.mrb[0].mxu0
        %2240 = vmatprep.mubr.bf16.mxu0 0
        %2241 = vmatmul.mubr.bf16.gmra.mrb[0].mxu0 %v2137
        %v2242 = vpop.f32.mrb[0].mxu0
        %v2243 = vadd.f32 0.0, %v2242
        %v2244 = vpop.f32.mrb[0].mxu0
        %v2245 = vpop.f32.mrb[0].mxu0
        %v2246 = vadd.f32 0.0, %v2245
        %v2247 = vpop.f32.mrb[0].mxu0
        %2248 = vmatprep.mubr.bf16.mxu0 0
        %2249 = vmatmul.mubr.bf16.gmra.mrb[0].mxu0 %v2138
        %v2250 = vpop.f32.mrb[0].mxu0
        %v2251 = vadd.f32 0.0, %v2250
        %v2252 = vpop.f32.mrb[0].mxu0
        %v2253 = vpop.f32.mrb[0].mxu0
        %v2254 = vadd.f32 0.0, %v2253
        %v2255 = vpop.f32.mrb[0].mxu0
        %2256 = vmatprep.mubr.bf16.mxu0 0
        %2257 = vmatmul.mubr.bf16.gmra.mrb[0].mxu0 %v2139
        %v2258 = vpop.f32.mrb[0].mxu0
        %v2259 = vadd.f32 0.0, %v2258
        %v2260 = vpop.f32.mrb[0].mxu0
        %v2261 = vpop.f32.mrb[0].mxu0
        %v2262 = vadd.f32 0.0, %v2261
        %v2263 = vpop.f32.mrb[0].mxu0
        %2264 = vmatprep.mubr.bf16.mxu0 0
        %2265 = vmatmul.mubr.bf16.gmra.mrb[0].mxu0 %v2140
        %v2266 = vpop.f32.mrb[0].mxu0
        %v2267 = vadd.f32 0.0, %v2266
        %v2268 = vpop.f32.mrb[0].mxu0
        %v2269 = vpop.f32.mrb[0].mxu0
        %v2270 = vadd.f32 0.0, %v2269
        %v2271 = vpop.f32.mrb[0].mxu0
        %2272 = vmatprep.mubr.bf16.mxu0 0
        %2273 = vmatmul.mubr.bf16.gmra.mrb[0].mxu0 %v2141
        %v2274 = vpop.f32.mrb[0].mxu0
        %v2275 = vadd.f32 0.0, %v2274
        %v2276 = vpop.f32.mrb[0].mxu0
        %v2277 = vpop.f32.mrb[0].mxu0
        %v2278 = vadd.f32 0.0, %v2277
        %v2279 = vpop.f32.mrb[0].mxu0
        %2280 = vmatprep.mubr.bf16.mxu0 0
        %2281 = vmatmul.mubr.bf16.gmra.mrb[0].mxu0 %v2142
        %v2282 = vpop.f32.mrb[0].mxu0
        %v2283 = vadd.f32 0.0, %v2282
        %v2284 = vpop.f32.mrb[0].mxu0
        %v2285 = vpop.f32.mrb[0].mxu0
        %v2286 = vadd.f32 0.0, %v2285
        %v2287 = vpop.f32.mrb[0].mxu0
        %2288 = vmatprep.mubr.bf16.mxu0 0
        %2289 = vmatmul.mubr.bf16.gmra.mrb[0].mxu0 %v2143
        %v2290 = vpop.f32.mrb[0].mxu0
        %v2291 = vadd.f32 0.0, %v2290
        %v2292 = vpop.f32.mrb[0].mxu0
        %v2293 = vpop.f32.mrb[0].mxu0
        %v2294 = vadd.f32 0.0, %v2293
        %v2295 = vpop.f32.mrb[0].mxu0
        %2296 = vdwg.mxu0
        %v2297 = vadd.f32 %v2054, %v2235
        %v2298 = vadd.f32 %v2055, %v2238
        %v2299 = vadd.f32 %v2056, %v2243
        %v2300 = vadd.f32 %v2057, %v2246
        %v2301 = vadd.f32 %v2058, %v2251
        %v2302 = vadd.f32 %v2059, %v2254
        %v2303 = vadd.f32 %v2060, %v2259
        %v2304 = vadd.f32 %v2061, %v2262
        %v2305 = vadd.f32 %v2062, %v2267
        %v2306 = vadd.f32 %v2063, %v2270
        %v2307 = vadd.f32 %v2064, %v2275
        %v2308 = vadd.f32 %v2065, %v2278
        %v2309 = vadd.f32 %v2066, %v2283
        %v2310 = vadd.f32 %v2067, %v2286
        %v2311 = vadd.f32 %v2068, %v2291
        %v2312 = vadd.f32 %v2069, %v2294
        %s2313 = scalar_lea.vmem %s348, 16 [#allocation7]
        %v2314 = vld [vmem:[%s2313] sm:$0xf]
        %v2315 = vld [vmem:[%s2313 + $0x4] sm:$0xf]
        %v2316 = vld [vmem:[%s2313 + $0x8] sm:$0xf]
        %v2317 = vld [vmem:[%s2313 + $0xc] sm:$0xf]
        %v2318 = vld [vmem:[%s2313 + $0x10] sm:$0xf]
        %v2319 = vld [vmem:[%s2313 + $0x14] sm:$0xf]
        %v2320 = vld [vmem:[%s2313 + $0x18] sm:$0xf]
        %v2321 = vld [vmem:[%s2313 + $0x1c] sm:$0xf]
        %v2322 = vld [vmem:[%s2313 + $0x20] sm:$0xf]
        %v2323 = vld [vmem:[%s2313 + $0x24] sm:$0xf]
        %v2324 = vld [vmem:[%s2313 + $0x28] sm:$0xf]
        %v2325 = vld [vmem:[%s2313 + $0x2c] sm:$0xf]
        %v2326 = vld [vmem:[%s2313 + $0x30] sm:$0xf]
        %v2327 = vld [vmem:[%s2313 + $0x34] sm:$0xf]
        %v2328 = vld [vmem:[%s2313 + $0x38] sm:$0xf]
        %v2329 = vld [vmem:[%s2313 + $0x3c] sm:$0xf]
        %s2330 = scalar_lea.vmem [#allocation8], 512
        %v2331 = vld [vmem:[%s2330] sm:$0xf]
        %v2332 = vld [vmem:[%s2330 + $0x4] sm:$0xf]
        %v2333 = vld [vmem:[%s2330 + $0x8] sm:$0xf]
        %v2334 = vld [vmem:[%s2330 + $0xc] sm:$0xf]
        %v2335 = vld [vmem:[%s2330 + $0x10] sm:$0xf]
        %v2336 = vld [vmem:[%s2330 + $0x14] sm:$0xf]
        %v2337 = vld [vmem:[%s2330 + $0x18] sm:$0xf]
        %v2338 = vld [vmem:[%s2330 + $0x1c] sm:$0xf]
        %v2339 = vld [vmem:[%s2330 + $0x20] sm:$0xf]
        %v2340 = vld [vmem:[%s2330 + $0x24] sm:$0xf]
        %v2341 = vld [vmem:[%s2330 + $0x28] sm:$0xf]
        %v2342 = vld [vmem:[%s2330 + $0x2c] sm:$0xf]
        %v2343 = vld [vmem:[%s2330 + $0x30] sm:$0xf]
        %v2344 = vld [vmem:[%s2330 + $0x34] sm:$0xf]
        %v2345 = vld [vmem:[%s2330 + $0x38] sm:$0xf]
        %v2346 = vld [vmem:[%s2330 + $0x3c] sm:$0xf]
        %v2363 = vunpack.c.l.b16 %v2314
        %v2364 = vunpack.c.l.b16 %v2315
        %v2365 = vunpack.c.l.b16 %v2316
        %v2366 = vunpack.c.l.b16 %v2317
        %v2367 = vunpack.c.l.b16 %v2318
        %v2368 = vunpack.c.l.b16 %v2319
        %v2369 = vunpack.c.l.b16 %v2320
        %v2370 = vunpack.c.l.b16 %v2321
        %v2371 = vunpack.c.l.b16 %v2322
        %v2372 = vunpack.c.l.b16 %v2323
        %v2373 = vunpack.c.l.b16 %v2324
        %v2374 = vunpack.c.l.b16 %v2325
        %v2375 = vunpack.c.l.b16 %v2326
        %v2376 = vunpack.c.l.b16 %v2327
        %v2377 = vunpack.c.l.b16 %v2328
        %v2378 = vunpack.c.l.b16 %v2329
        %v2379 = vpack.c.b16 %v2364, %v2363
        %v2380 = vpack.c.b16 %v2366, %v2365
        %v2381 = vpack.c.b16 %v2368, %v2367
        %v2382 = vpack.c.b16 %v2370, %v2369
        %v2383 = vpack.c.b16 %v2372, %v2371
        %v2384 = vpack.c.b16 %v2374, %v2373
        %v2385 = vpack.c.b16 %v2376, %v2375
        %v2386 = vpack.c.b16 %v2378, %v2377
        %v2411 = vunpack.c.l.b16 %v2331
        %v2412 = vunpack.c.l.b16 %v2332
        %v2413 = vunpack.c.l.b16 %v2333
        %v2414 = vunpack.c.l.b16 %v2334
        %v2415 = vunpack.c.l.b16 %v2335
        %v2416 = vunpack.c.l.b16 %v2336
        %v2417 = vunpack.c.l.b16 %v2337
        %v2418 = vunpack.c.l.b16 %v2338
        %v2419 = vunpack.c.l.b16 %v2339
        %v2420 = vunpack.c.l.b16 %v2340
        %v2421 = vunpack.c.l.b16 %v2341
        %v2422 = vunpack.c.l.b16 %v2342
        %v2423 = vunpack.c.l.b16 %v2343
        %v2424 = vunpack.c.l.b16 %v2344
        %v2425 = vunpack.c.l.b16 %v2345
        %v2426 = vunpack.c.l.b16 %v2346
        %v2427 = vpack.c.b16 %v2412, %v2411
        %v2428 = vpack.c.b16 %v2414, %v2413
        %v2429 = vpack.c.b16 %v2416, %v2415
        %v2430 = vpack.c.b16 %v2418, %v2417
        %v2431 = vpack.c.b16 %v2420, %v2419
        %v2432 = vpack.c.b16 %v2422, %v2421
        %v2433 = vpack.c.b16 %v2424, %v2423
        %v2434 = vpack.c.b16 %v2426, %v2425
        %2443 = vmatprep.subr.bf16.mxu0 0
        %2444 = vmatpush1.bf16.msra.mxu0 %v2427
        %2445 = vmatprep.subr.bf16.mxu0 0
        %2446 = vmatpush1.bf16.msra.mxu0 %v2428
        %2447 = vmatprep.subr.bf16.mxu0 0
        %2448 = vmatpush1.bf16.msra.mxu0 %v2429
        %2449 = vmatprep.subr.bf16.mxu0 0
        %2450 = vmatpush1.bf16.msra.mxu0 %v2430
        %2451 = vmatprep.subr.bf16.mxu0 0
        %2452 = vmatpush1.bf16.msra.mxu0 %v2431
        %2453 = vmatprep.subr.bf16.mxu0 0
        %2454 = vmatpush1.bf16.msra.mxu0 %v2432
        %2455 = vmatprep.subr.bf16.mxu0 0
        %2456 = vmatpush1.bf16.msra.mxu0 %v2433
        %2457 = vmatprep.subr.bf16.mxu0 0
        %2458 = vmatpush1.bf16.msra.mxu0 %v2434
        %2459 = vmatprep.subr.bf16.mxu0 0
        %2460 = vmatpush1.bf16.msra.mxu0 0
        %2461 = vmatprep.subr.bf16.mxu0 0
        %2462 = vmatpush1.bf16.msra.mxu0 0
        %2463 = vmatprep.subr.bf16.mxu0 0
        %2464 = vmatpush1.bf16.msra.mxu0 0
        %2465 = vmatprep.subr.bf16.mxu0 0
        %2466 = vmatpush1.bf16.msra.mxu0 0
        %2467 = vmatprep.subr.bf16.mxu0 0
        %2468 = vmatpush1.bf16.msra.mxu0 0
        %2469 = vmatprep.subr.bf16.mxu0 0
        %2470 = vmatpush1.bf16.msra.mxu0 0
        %2471 = vmatprep.subr.bf16.mxu0 0
        %2472 = vmatpush1.bf16.msra.mxu0 0
        %2473 = vmatprep.subr.bf16.mxu0 0
        %2474 = vmatpush1.bf16.msra.mxu0 0
        %2475 = vmatprep.mubr.bf16.mxu0 0
        %2476 = vmatmul.mubr.bf16.gmra.mrb[0].mxu0 %v2379
        %v2477 = vpop.f32.mrb[0].mxu0
        %v2478 = vadd.f32 0.0, %v2477
        %v2479 = vpop.f32.mrb[0].mxu0
        %v2480 = vpop.f32.mrb[0].mxu0
        %v2481 = vadd.f32 0.0, %v2480
        %v2482 = vpop.f32.mrb[0].mxu0
        %2483 = vmatprep.mubr.bf16.mxu0 0
        %2484 = vmatmul.mubr.bf16.gmra.mrb[0].mxu0 %v2380
        %v2485 = vpop.f32.mrb[0].mxu0
        %v2486 = vadd.f32 0.0, %v2485
        %v2487 = vpop.f32.mrb[0].mxu0
        %v2488 = vpop.f32.mrb[0].mxu0
        %v2489 = vadd.f32 0.0, %v2488
        %v2490 = vpop.f32.mrb[0].mxu0
        %2491 = vmatprep.mubr.bf16.mxu0 0
        %2492 = vmatmul.mubr.bf16.gmra.mrb[0].mxu0 %v2381
        %v2493 = vpop.f32.mrb[0].mxu0
        %v2494 = vadd.f32 0.0, %v2493
        %v2495 = vpop.f32.mrb[0].mxu0
        %v2496 = vpop.f32.mrb[0].mxu0
        %v2497 = vadd.f32 0.0, %v2496
        %v2498 = vpop.f32.mrb[0].mxu0
        %2499 = vmatprep.mubr.bf16.mxu0 0
        %2500 = vmatmul.mubr.bf16.gmra.mrb[0].mxu0 %v2382
        %v2501 = vpop.f32.mrb[0].mxu0
        %v2502 = vadd.f32 0.0, %v2501
        %v2503 = vpop.f32.mrb[0].mxu0
        %v2504 = vpop.f32.mrb[0].mxu0
        %v2505 = vadd.f32 0.0, %v2504
        %v2506 = vpop.f32.mrb[0].mxu0
        %2507 = vmatprep.mubr.bf16.mxu0 0
        %2508 = vmatmul.mubr.bf16.gmra.mrb[0].mxu0 %v2383
        %v2509 = vpop.f32.mrb[0].mxu0
        %v2510 = vadd.f32 0.0, %v2509
        %v2511 = vpop.f32.mrb[0].mxu0
        %v2512 = vpop.f32.mrb[0].mxu0
        %v2513 = vadd.f32 0.0, %v2512
        %v2514 = vpop.f32.mrb[0].mxu0
        %2515 = vmatprep.mubr.bf16.mxu0 0
        %2516 = vmatmul.mubr.bf16.gmra.mrb[0].mxu0 %v2384
        %v2517 = vpop.f32.mrb[0].mxu0
        %v2518 = vadd.f32 0.0, %v2517
        %v2519 = vpop.f32.mrb[0].mxu0
        %v2520 = vpop.f32.mrb[0].mxu0
        %v2521 = vadd.f32 0.0, %v2520
        %v2522 = vpop.f32.mrb[0].mxu0
        %2523 = vmatprep.mubr.bf16.mxu0 0
        %2524 = vmatmul.mubr.bf16.gmra.mrb[0].mxu0 %v2385
        %v2525 = vpop.f32.mrb[0].mxu0
        %v2526 = vadd.f32 0.0, %v2525
        %v2527 = vpop.f32.mrb[0].mxu0
        %v2528 = vpop.f32.mrb[0].mxu0
        %v2529 = vadd.f32 0.0, %v2528
        %v2530 = vpop.f32.mrb[0].mxu0
        %2531 = vmatprep.mubr.bf16.mxu0 0
        %2532 = vmatmul.mubr.bf16.gmra.mrb[0].mxu0 %v2386
        %v2533 = vpop.f32.mrb[0].mxu0
        %v2534 = vadd.f32 0.0, %v2533
        %v2535 = vpop.f32.mrb[0].mxu0
        %v2536 = vpop.f32.mrb[0].mxu0
        %v2537 = vadd.f32 0.0, %v2536
        %v2538 = vpop.f32.mrb[0].mxu0
        %2539 = vdwg.mxu0
        %v2540 = vadd.f32 %v2297, %v2478
        %v2541 = vadd.f32 %v2298, %v2481
        %v2542 = vadd.f32 %v2299, %v2486
        %v2543 = vadd.f32 %v2300, %v2489
        %v2544 = vadd.f32 %v2301, %v2494
        %v2545 = vadd.f32 %v2302, %v2497
        %v2546 = vadd.f32 %v2303, %v2502
        %v2547 = vadd.f32 %v2304, %v2505
        %v2548 = vadd.f32 %v2305, %v2510
        %v2549 = vadd.f32 %v2306, %v2513
        %v2550 = vadd.f32 %v2307, %v2518
        %v2551 = vadd.f32 %v2308, %v2521
        %v2552 = vadd.f32 %v2309, %v2526
        %v2553 = vadd.f32 %v2310, %v2529
        %v2554 = vadd.f32 %v2311, %v2534
        %v2555 = vadd.f32 %v2312, %v2537
        %v2556 = vld [vmem:[#allocation10] sm:$0x1]
        %v2558 = vlaneseq
        %v2559 = vshrl.u32 %v2558, 7
        %v2560 = vsub.s32 0, %v2559
        %v2561 = vrot.slane %v2556, %v2560
        %v2563 = vadd.f32 %v2540, %v2561
        %v2564 = vadd.f32 %v2541, %v2561
        %v2565 = vadd.f32 %v2542, %v2561
        %v2566 = vadd.f32 %v2543, %v2561
        %v2567 = vadd.f32 %v2544, %v2561
        %v2568 = vadd.f32 %v2545, %v2561
        %v2569 = vadd.f32 %v2546, %v2561
        %v2570 = vadd.f32 %v2547, %v2561
        %v2571 = vadd.f32 %v2548, %v2561
        %v2572 = vadd.f32 %v2549, %v2561
        %v2573 = vadd.f32 %v2550, %v2561
        %v2574 = vadd.f32 %v2551, %v2561
        %v2575 = vadd.f32 %v2552, %v2561
        %v2576 = vadd.f32 %v2553, %v2561
        %v2577 = vadd.f32 %v2554, %v2561
        %v2578 = vadd.f32 %v2555, %v2561
        %v2579 = vpack.c.bf16 %v2564, %v2563
        %v2580 = vpack.c.bf16 %v2566, %v2565
        %v2581 = vpack.c.bf16 %v2568, %v2567
        %v2582 = vpack.c.bf16 %v2570, %v2569
        %v2583 = vpack.c.bf16 %v2572, %v2571
        %v2584 = vpack.c.bf16 %v2574, %v2573
        %v2585 = vpack.c.bf16 %v2576, %v2575
        %v2586 = vpack.c.bf16 %v2578, %v2577
        %v2595 = vunpack.c.l.b16 %v2579
        %v2596 = vunpack.c.h.b16 %v2579
        %v2597 = vunpack.c.l.b16 %v2580
        %v2598 = vunpack.c.h.b16 %v2580
        %v2599 = vunpack.c.l.b16 %v2581
        %v2600 = vunpack.c.h.b16 %v2581
        %v2601 = vunpack.c.l.b16 %v2582
        %v2602 = vunpack.c.h.b16 %v2582
        %v2603 = vunpack.c.l.b16 %v2583
        %v2604 = vunpack.c.h.b16 %v2583
        %v2605 = vunpack.c.l.b16 %v2584
        %v2606 = vunpack.c.h.b16 %v2584
        %v2607 = vunpack.c.l.b16 %v2585
        %v2608 = vunpack.c.h.b16 %v2585
        %v2609 = vunpack.c.l.b16 %v2586
        %v2610 = vunpack.c.h.b16 %v2586
        %v2611 = vpack.c.b16 %v2595, %v2595
        %v2612 = vpack.c.b16 %v2596, %v2596
        %v2613 = vpack.c.b16 %v2597, %v2597
        %v2614 = vpack.c.b16 %v2598, %v2598
        %v2615 = vpack.c.b16 %v2599, %v2599
        %v2616 = vpack.c.b16 %v2600, %v2600
        %v2617 = vpack.c.b16 %v2601, %v2601
        %v2618 = vpack.c.b16 %v2602, %v2602
        %v2619 = vpack.c.b16 %v2603, %v2603
        %v2620 = vpack.c.b16 %v2604, %v2604
        %v2621 = vpack.c.b16 %v2605, %v2605
        %v2622 = vpack.c.b16 %v2606, %v2606
        %v2623 = vpack.c.b16 %v2607, %v2607
        %v2624 = vpack.c.b16 %v2608, %v2608
        %v2625 = vpack.c.b16 %v2609, %v2609
        %v2626 = vpack.c.b16 %v2610, %v2610
        %2643 = vst [vmem:[%s392] sm:$0xf] %v2611
        %2644 = vst [vmem:[%s392 + $0x4] sm:$0xf] %v2612
        %2645 = vst [vmem:[%s392 + $0x8] sm:$0xf] %v2613
        %2646 = vst [vmem:[%s392 + $0xc] sm:$0xf] %v2614
        %2647 = vst [vmem:[%s392 + $0x10] sm:$0xf] %v2615
        %2648 = vst [vmem:[%s392 + $0x14] sm:$0xf] %v2616
        %2649 = vst [vmem:[%s392 + $0x18] sm:$0xf] %v2617
        %2650 = vst [vmem:[%s392 + $0x1c] sm:$0xf] %v2618
        %2651 = vst [vmem:[%s392 + $0x20] sm:$0xf] %v2619
        %2652 = vst [vmem:[%s392 + $0x24] sm:$0xf] %v2620
        %2653 = vst [vmem:[%s392 + $0x28] sm:$0xf] %v2621
        %2654 = vst [vmem:[%s392 + $0x2c] sm:$0xf] %v2622
        %2655 = vst [vmem:[%s392 + $0x30] sm:$0xf] %v2623
        %2656 = vst [vmem:[%s392 + $0x34] sm:$0xf] %v2624
        %2657 = vst [vmem:[%s392 + $0x38] sm:$0xf] %v2625
        %2658 = vst [vmem:[%s392 + $0x3c] sm:$0xf] %v2626
        %v2659 = vld [vmem:[#allocation12] sm:$0x1]
        %v2660 = vadd.f32 %v2563, %v2564
        %v2661 = vadd.f32 %v2660, %v2565
        %v2662 = vadd.f32 %v2661, %v2566
        %v2663 = vadd.f32 %v2662, %v2567
        %v2664 = vadd.f32 %v2663, %v2568
        %v2665 = vadd.f32 %v2664, %v2569
        %v2666 = vadd.f32 %v2665, %v2570
        %v2667 = vadd.f32 %v2666, %v2571
        %v2668 = vadd.f32 %v2667, %v2572
        %v2669 = vadd.f32 %v2668, %v2573
        %v2670 = vadd.f32 %v2669, %v2574
        %v2671 = vadd.f32 %v2670, %v2575
        %v2672 = vadd.f32 %v2671, %v2576
        %v2673 = vadd.f32 %v2672, %v2577
        %v2674 = vadd.f32 %v2673, %v2578
        %v2675 = vrot.slane %v2674, 4
        %v2676 = vadd.f32 %v2674, %v2675
        %v2677 = vrot.slane %v2676, 2
        %v2678 = vadd.f32 %v2676, %v2677
        %v2679 = vrot.slane %v2678, 1
        %v2680 = vadd.f32 %v2678, %v2679
        %v2681 = vadd.f32 %v2659, %v2680
        %2682 = vst [vmem:[#allocation12] sm:$0x1] %v2681
        %v2683 = vld [vmem:[#allocation14] sm:$0x1]
        %v2684 = vmul.f32 %v2563, %v2563
        %v2685 = vmul.f32 %v2564, %v2564
        %v2686 = vmul.f32 %v2565, %v2565
        %v2687 = vmul.f32 %v2566, %v2566
        %v2688 = vmul.f32 %v2567, %v2567
        %v2689 = vmul.f32 %v2568, %v2568
        %v2690 = vmul.f32 %v2569, %v2569
        %v2691 = vmul.f32 %v2570, %v2570
        %v2692 = vmul.f32 %v2571, %v2571
        %v2693 = vmul.f32 %v2572, %v2572
        %v2694 = vmul.f32 %v2573, %v2573
        %v2695 = vmul.f32 %v2574, %v2574
        %v2696 = vmul.f32 %v2575, %v2575
        %v2697 = vmul.f32 %v2576, %v2576
        %v2698 = vmul.f32 %v2577, %v2577
        %v2699 = vmul.f32 %v2578, %v2578
        %v2700 = vadd.f32 %v2684, %v2685
        %v2701 = vadd.f32 %v2700, %v2686
        %v2702 = vadd.f32 %v2701, %v2687
        %v2703 = vadd.f32 %v2702, %v2688
        %v2704 = vadd.f32 %v2703, %v2689
        %v2705 = vadd.f32 %v2704, %v2690
        %v2706 = vadd.f32 %v2705, %v2691
        %v2707 = vadd.f32 %v2706, %v2692
        %v2708 = vadd.f32 %v2707, %v2693
        %v2709 = vadd.f32 %v2708, %v2694
        %v2710 = vadd.f32 %v2709, %v2695
        %v2711 = vadd.f32 %v2710, %v2696
        %v2712 = vadd.f32 %v2711, %v2697
        %v2713 = vadd.f32 %v2712, %v2698
        %v2714 = vadd.f32 %v2713, %v2699
        %v2715 = vrot.slane %v2714, 4
        %v2716 = vadd.f32 %v2714, %v2715
        %v2717 = vrot.slane %v2716, 2
        %v2718 = vadd.f32 %v2716, %v2717
        %v2719 = vrot.slane %v2718, 1
        %v2720 = vadd.f32 %v2718, %v2719
        %v2721 = vadd.f32 %v2683, %v2720
        %2722 = vst [vmem:[#allocation14] sm:$0x1] %v2721
        %s2723 = sand.u32 %s158, 1
        %s2724 = scalar_lea.sflag [#allocation4], %s2723
        %s2725 = sand.u32 %s158, 1
        %s2726 = smul.addr %s2725, 64
        %s2727 = scalar_lea.vmem [#allocation11], %s2726
        // Predicated region
        $region65: #{double_conv.4} parent=39 // pred_check
          %p2728 = pneg %p168
        $region66: #{double_conv.4} parent=39 // pred_check_branch
          %2730 = sbr.rel (%p2728) target = $region68
        $region67: #{double_conv.4} parent=39 // pred_region
          %s2731 = smul.u32 16, %s30
          %s2733 = ssub.s32 1024, 1024
          %2734 = vsyncadd %s2724, %s2733
          %s2735 = smul.addr %s2731, 64
          %s2736 = scalar_lea.hbm %s5, %s2735
          %s2737 = sshll.u32 %s2727, 4
          %s2738 = int_to_ptr.vmem [resolvable:$true] %s2737
          %2743 = dma.vmem_to_hbm [thread:$0]  %s2738, 1024, %s2736, %s2724, 64, 64, 4
        $region68: #{double_conv.4} parent=39 // pred_fallthru
          _
        // Predicated region
        $region69: #{double_conv.4} parent=39 // pred_check
          %p2744 = pneg %p189
        $region70: #{double_conv.4} parent=39 // pred_check_branch
          %2746 = sbr.rel (%p2744) target = $region72
        $region71: #{double_conv.4} parent=39 // pred_region
          %s2748 = ssub.s32 16, 16
          %2749 = vsyncadd [#allocation13], %s2748
          %s2751 = sshll.u32 [#allocation12], 4
          %s2752 = int_to_ptr.vmem [resolvable:$true] %s2751
          %2754 = dma.vmem_to_hbm [thread:$0]  %s2752, 16, %s6, [#allocation13]
        $region72: #{double_conv.4} parent=39 // pred_fallthru
          _
        // Predicated region
        $region73: #{double_conv.4} parent=39 // pred_check
          %p2755 = pneg %p210
        $region74: #{double_conv.4} parent=39 // pred_check_branch
          %2757 = sbr.rel (%p2755) target = $region76
        $region75: #{double_conv.4} parent=39 // pred_region
          %s2759 = ssub.s32 16, 16
          %2760 = vsyncadd [#allocation13], %s2759
          %s2762 = sshll.u32 [#allocation14], 4
          %s2763 = int_to_ptr.vmem [resolvable:$true] %s2762
          %2765 = dma.vmem_to_hbm [thread:$0]  %s2763, 16, %s7, [#allocation13]
        $region76: #{double_conv.4} parent=39 // pred_fallthru
          _
        // Predicated region
        $region77: #{double_conv.4} parent=39 // pred_check
          %p2766 = pneg %p189
        $region78: #{double_conv.4} parent=39 // pred_check_branch
          %2768 = sbr.rel (%p2766) target = $region80
        $region79: #{double_conv.4} parent=39 // pred_region
          %2769 = dma.done [#allocation13], 16
        $region80: #{double_conv.4} parent=39 // pred_fallthru
          _
        // Predicated region
        $region81: #{double_conv.4} parent=39 // pred_check
          %p2770 = pneg %p210
        $region82: #{double_conv.4} parent=39 // pred_check_branch
          %2772 = sbr.rel (%p2770) target = $region84
        $region83: #{double_conv.4} parent=39 // pred_region
          %2773 = dma.done [#allocation13], 16
        $region84: #{double_conv.4} parent=39 // pred_fallthru
          _
      $region40: #{double_conv.4} parent=5 // pred_fallthru
        _
      %p2774 = scmp.le.s32.totalorder 2, %s25
      // Predicated region
      $region85: #{double_conv.4} parent=5 // pred_check
        %p2775 = pneg %p2774
      $region86: #{double_conv.4} parent=5 // pred_check_branch
        %2777 = sbr.rel (%p2775) target = $region88
      $region87: #{double_conv.4} parent=5 // pred_region
        %s2778 = ssub.s32 %s25, 2
        // Predicated region
        $region89: #{double_conv.4} parent=87 // pred_check
          %p2779 = pneg %p174
        $region90: #{double_conv.4} parent=87 // pred_check_branch
          %2781 = sbr.rel (%p2779) target = $region92
        $region91: #{double_conv.4} parent=87 // pred_region
          %s2782 = sand.u32 %s159, 1
          %s2783 = scalar_lea.sflag [#allocation4], %s2782
          %s2784 = sand.u32 %s159, 1
          %s2785 = smul.addr %s2784, 64
          %s2786 = scalar_lea.vmem [#allocation11], %s2785
          %2787 = dma.done %s2783, 1024
        $region92: #{double_conv.4} parent=87 // pred_fallthru
          _
      $region88: #{double_conv.4} parent=5 // pred_fallthru
        _
    $region6: #{double_conv.4} parent=1 // loop_footer
      %s29 = sadd.s32 1, %s25
    $region7: #{double_conv.4} parent=1 // loop_footer_branch
      %24 = sbr.rel target = $region3
    $region8: #{double_conv.4} parent=1 // loop_exit
      _
    %2788 = vsyncpa [#allocation3], 1
    %s2789 = scalar_lea.sflag [#allocation3], 1
    %2790 = vsyncpa %s2789, 1
    %2791 = vsyncpa [#allocation6], 1
    %s2792 = scalar_lea.sflag [#allocation6], 1
    %2793 = vsyncpa %s2792, 1
    %2794 = vsyncpa [#allocation9], 1
    %2795 = vsyncpa [#allocation4], 1
    %s2796 = scalar_lea.sflag [#allocation4], 1
    %2797 = vsyncpa %s2796, 1
    %2798 = vsyncpa [#allocation13], 1

// kernel: double_conv.7
$region0: #{double_conv.7}
  #allocation0 [shape = 'u32[]', space=smem, size = 0x4, offset = 0x4, fixed_abs, tag = 'smem constant byte address 0x4 - core index']
  #allocation1 [shape = 'u32[144,128]{1,0:T(1,128)}', space=vmem, size = 0x12000, scoped, tag = 'internal scratch']
  %s0 = inlined_call_operand.hbm [shape: bf16[512,128], index: 0, kind: input, shape index: {}]
  %s1 = inlined_call_operand.hbm [shape: f32[1,128], index: 1, kind: input, shape index: {}]
  %s2 = inlined_call_operand.hbm [shape: f32[1,128], index: 2, kind: input, shape index: {}]
  %s3 = inlined_call_operand.hbm [shape: f32[512,128], index: 3, kind: output, shape index: {}]
  %s4 = sld [smem:[#allocation0]]
  $region34: #{double_conv.7} parent=0
    _
  %s6 = ssub.s32 1, %s4
  %s7 = scalar_select 0, %s6, %s4
  $region1: #{double_conv.7} parent=0
    #allocation2 [shape = 'u8[131072]{0}', space=vmem, size = 0x20000, scoped, tag = 'input window, operand 0, single buffered']
    #allocation3 [shape = 's32[1]{0}', space=sflag, size = 0x4, scoped, tag = 'scoped memory for double_conv.7']
    #allocation4 [shape = 's32[1]{0}', space=sflag, size = 0x4, scoped, tag = 'scoped memory for double_conv.7']
    #allocation5 [shape = 'u8[512]{0}', space=vmem, size = 0x400, scoped, tag = 'input window, operand 1, single buffered']
    #allocation6 [shape = 's32[1]{0}', space=sflag, size = 0x4, scoped, tag = 'scoped memory for double_conv.7']
    #allocation7 [shape = 'u8[512]{0}', space=vmem, size = 0x400, scoped, tag = 'input window, operand 2, single buffered']
    #allocation8 [shape = 'u8[262144]{0}', space=vmem, size = 0x40000, scoped, tag = 'output window, operand 0, single buffered']
    %8 = vsyncpa [#allocation3], 0
    %9 = vsyncpa [#allocation6], 0
    %10 = vsyncpa [#allocation4], 0
    // Predicated region
    $region2: #{double_conv.7} parent=1 // pred_check
      _
    $region3: #{double_conv.7} parent=1 // pred_check_branch
      %12 = sbr.rel (0) target = $region5
    $region4: #{double_conv.7} parent=1 // pred_region
      %s14 = ssub.s32 4096, 4096
      %15 = vsyncadd [#allocation3], %s14
      %s16 = sshll.u32 [#allocation2], 4
      %s17 = int_to_ptr.vmem [resolvable:$true] %s16
      %22 = dma.hbm_to_vmem [thread:$0]  %s0, 4096, %s17, [#allocation3], 64, 64, 4
    $region5: #{double_conv.7} parent=1 // pred_fallthru
      _
    // Predicated region
    $region6: #{double_conv.7} parent=1 // pred_check
      _
    $region7: #{double_conv.7} parent=1 // pred_check_branch
      %24 = sbr.rel (0) target = $region9
    $region8: #{double_conv.7} parent=1 // pred_region
      %s26 = ssub.s32 16, 16
      %27 = vsyncadd [#allocation6], %s26
      %s29 = sshll.u32 [#allocation5], 4
      %s30 = int_to_ptr.vmem [resolvable:$true] %s29
      %32 = dma.hbm_to_vmem [thread:$0]  %s1, 16, %s30, [#allocation6]
    $region9: #{double_conv.7} parent=1 // pred_fallthru
      _
    // Predicated region
    $region10: #{double_conv.7} parent=1 // pred_check
      _
    $region11: #{double_conv.7} parent=1 // pred_check_branch
      %34 = sbr.rel (0) target = $region13
    $region12: #{double_conv.7} parent=1 // pred_region
      %s36 = ssub.s32 16, 16
      %37 = vsyncadd [#allocation6], %s36
      %s39 = sshll.u32 [#allocation7], 4
      %s40 = int_to_ptr.vmem [resolvable:$true] %s39
      %42 = dma.hbm_to_vmem [thread:$0]  %s2, 16, %s40, [#allocation6]
    $region13: #{double_conv.7} parent=1 // pred_fallthru
      _
    // Predicated region
    $region14: #{double_conv.7} parent=1 // pred_check
      _
    $region15: #{double_conv.7} parent=1 // pred_check_branch
      %44 = sbr.rel (0) target = $region17
    $region16: #{double_conv.7} parent=1 // pred_region
      %45 = dma.done [#allocation3], 4096
    $region17: #{double_conv.7} parent=1 // pred_fallthru
      _
    // Predicated region
    $region18: #{double_conv.7} parent=1 // pred_check
      _
    $region19: #{double_conv.7} parent=1 // pred_check_branch
      %47 = sbr.rel (0) target = $region21
    $region20: #{double_conv.7} parent=1 // pred_region
      %48 = dma.done [#allocation6], 16
    $region21: #{double_conv.7} parent=1 // pred_fallthru
      _
    // Predicated region
    $region22: #{double_conv.7} parent=1 // pred_check
      _
    $region23: #{double_conv.7} parent=1 // pred_check_branch
      %50 = sbr.rel (0) target = $region25
    $region24: #{double_conv.7} parent=1 // pred_region
      %51 = dma.done [#allocation6], 16
    $region25: #{double_conv.7} parent=1 // pred_fallthru
      _
    %v52 = vld [vmem:[#allocation2] sm:$0xf]
    %v53 = vld [vmem:[#allocation2 + $0x4] sm:$0xf]
    %v54 = vld [vmem:[#allocation2 + $0x8] sm:$0xf]
    %v55 = vld [vmem:[#allocation2 + $0xc] sm:$0xf]
    %v56 = vld [vmem:[#allocation2 + $0x10] sm:$0xf]
    %v57 = vld [vmem:[#allocation2 + $0x14] sm:$0xf]
    %v58 = vld [vmem:[#allocation2 + $0x18] sm:$0xf]
    %v59 = vld [vmem:[#allocation2 + $0x1c] sm:$0xf]
    %v60 = vld [vmem:[#allocation2 + $0x20] sm:$0xf]
    %v61 = vld [vmem:[#allocation2 + $0x24] sm:$0xf]
    %v62 = vld [vmem:[#allocation2 + $0x28] sm:$0xf]
    %v63 = vld [vmem:[#allocation2 + $0x2c] sm:$0xf]
    %v64 = vld [vmem:[#allocation2 + $0x30] sm:$0xf]
    %v65 = vld [vmem:[#allocation2 + $0x34] sm:$0xf]
    %v66 = vld [vmem:[#allocation2 + $0x38] sm:$0xf]
    %v67 = vld [vmem:[#allocation2 + $0x3c] sm:$0xf]
    %v68 = vld [vmem:[#allocation2 + $0x40] sm:$0xf]
    %v69 = vld [vmem:[#allocation2 + $0x44] sm:$0xf]
    %v70 = vld [vmem:[#allocation2 + $0x48] sm:$0xf]
    %v71 = vld [vmem:[#allocation2 + $0x4c] sm:$0xf]
    %v72 = vld [vmem:[#allocation2 + $0x50] sm:$0xf]
    %v73 = vld [vmem:[#allocation2 + $0x54] sm:$0xf]
    %v74 = vld [vmem:[#allocation2 + $0x58] sm:$0xf]
    %v75 = vld [vmem:[#allocation2 + $0x5c] sm:$0xf]
    %v76 = vld [vmem:[#allocation2 + $0x60] sm:$0xf]
    %v77 = vld [vmem:[#allocation2 + $0x64] sm:$0xf]
    %v78 = vld [vmem:[#allocation2 + $0x68] sm:$0xf]
    %v79 = vld [vmem:[#allocation2 + $0x6c] sm:$0xf]
    %v80 = vld [vmem:[#allocation2 + $0x70] sm:$0xf]
    %v81 = vld [vmem:[#allocation2 + $0x74] sm:$0xf]
    %v82 = vld [vmem:[#allocation2 + $0x78] sm:$0xf]
    %v83 = vld [vmem:[#allocation2 + $0x7c] sm:$0xf]
    %v84 = vld [vmem:[#allocation2 + $0x80] sm:$0xf]
    %v85 = vld [vmem:[#allocation2 + $0x84] sm:$0xf]
    %v86 = vld [vmem:[#allocation2 + $0x88] sm:$0xf]
    %v87 = vld [vmem:[#allocation2 + $0x8c] sm:$0xf]
    %v88 = vld [vmem:[#allocation2 + $0x90] sm:$0xf]
    %v89 = vld [vmem:[#allocation2 + $0x94] sm:$0xf]
    %v90 = vld [vmem:[#allocation2 + $0x98] sm:$0xf]
    %v91 = vld [vmem:[#allocation2 + $0x9c] sm:$0xf]
    %v92 = vld [vmem:[#allocation2 + $0xa0] sm:$0xf]
    %v93 = vld [vmem:[#allocation2 + $0xa4] sm:$0xf]
    %v94 = vld [vmem:[#allocation2 + $0xa8] sm:$0xf]
    %v95 = vld [vmem:[#allocation2 + $0xac] sm:$0xf]
    %v96 = vld [vmem:[#allocation2 + $0xb0] sm:$0xf]
    %v97 = vld [vmem:[#allocation2 + $0xb4] sm:$0xf]
    %v98 = vld [vmem:[#allocation2 + $0xb8] sm:$0xf]
    %v99 = vld [vmem:[#allocation2 + $0xbc] sm:$0xf]
    %v100 = vld [vmem:[#allocation2 + $0xc0] sm:$0xf]
    %v101 = vld [vmem:[#allocation2 + $0xc4] sm:$0xf]
    %v102 = vld [vmem:[#allocation2 + $0xc8] sm:$0xf]
    %v103 = vld [vmem:[#allocation2 + $0xcc] sm:$0xf]
    %v104 = vld [vmem:[#allocation2 + $0xd0] sm:$0xf]
    %v105 = vld [vmem:[#allocation2 + $0xd4] sm:$0xf]
    %v106 = vld [vmem:[#allocation2 + $0xd8] sm:$0xf]
    %v107 = vld [vmem:[#allocation2 + $0xdc] sm:$0xf]
    %v108 = vld [vmem:[#allocation2 + $0xe0] sm:$0xf]
    %v109 = vld [vmem:[#allocation2 + $0xe4] sm:$0xf]
    %v110 = vld [vmem:[#allocation2 + $0xe8] sm:$0xf]
    %v111 = vld [vmem:[#allocation2 + $0xec] sm:$0xf]
    %v112 = vld [vmem:[#allocation2 + $0xf0] sm:$0xf]
    %v113 = vld [vmem:[#allocation2 + $0xf4] sm:$0xf]
    %v114 = vld [vmem:[#allocation2 + $0xf8] sm:$0xf]
    %v115 = vld [vmem:[#allocation2 + $0xfc] sm:$0xf]
    %v116 = vunpack.c.l.bf16 %v52
    %v117 = vunpack.c.l.bf16 %v53
    %v118 = vunpack.c.l.bf16 %v54
    %v119 = vunpack.c.l.bf16 %v55
    %v120 = vunpack.c.l.bf16 %v56
    %v121 = vunpack.c.l.bf16 %v57
    %v122 = vunpack.c.l.bf16 %v58
    %v123 = vunpack.c.l.bf16 %v59
    %v124 = vunpack.c.l.bf16 %v60
    %v125 = vunpack.c.l.bf16 %v61
    %v126 = vunpack.c.l.bf16 %v62
    %v127 = vunpack.c.l.bf16 %v63
    %v128 = vunpack.c.l.bf16 %v64
    %v129 = vunpack.c.l.bf16 %v65
    %v130 = vunpack.c.l.bf16 %v66
    %v131 = vunpack.c.l.bf16 %v67
    %v132 = vunpack.c.l.bf16 %v68
    %v133 = vunpack.c.l.bf16 %v69
    %v134 = vunpack.c.l.bf16 %v70
    %v135 = vunpack.c.l.bf16 %v71
    %v136 = vunpack.c.l.bf16 %v72
    %v137 = vunpack.c.l.bf16 %v73
    %v138 = vunpack.c.l.bf16 %v74
    %v139 = vunpack.c.l.bf16 %v75
    %v140 = vunpack.c.l.bf16 %v76
    %v141 = vunpack.c.l.bf16 %v77
    %v142 = vunpack.c.l.bf16 %v78
    %v143 = vunpack.c.l.bf16 %v79
    %v144 = vunpack.c.l.bf16 %v80
    %v145 = vunpack.c.l.bf16 %v81
    %v146 = vunpack.c.l.bf16 %v82
    %v147 = vunpack.c.l.bf16 %v83
    %v148 = vunpack.c.l.bf16 %v84
    %v149 = vunpack.c.l.bf16 %v85
    %v150 = vunpack.c.l.bf16 %v86
    %v151 = vunpack.c.l.bf16 %v87
    %v152 = vunpack.c.l.bf16 %v88
    %v153 = vunpack.c.l.bf16 %v89
    %v154 = vunpack.c.l.bf16 %v90
    %v155 = vunpack.c.l.bf16 %v91
    %v156 = vunpack.c.l.bf16 %v92
    %v157 = vunpack.c.l.bf16 %v93
    %v158 = vunpack.c.l.bf16 %v94
    %v159 = vunpack.c.l.bf16 %v95
    %v160 = vunpack.c.l.bf16 %v96
    %v161 = vunpack.c.l.bf16 %v97
    %v162 = vunpack.c.l.bf16 %v98
    %v163 = vunpack.c.l.bf16 %v99
    %v164 = vunpack.c.l.bf16 %v100
    %v165 = vunpack.c.l.bf16 %v101
    %v166 = vunpack.c.l.bf16 %v102
    %v167 = vunpack.c.l.bf16 %v103
    %v168 = vunpack.c.l.bf16 %v104
    %v169 = vunpack.c.l.bf16 %v105
    %v170 = vunpack.c.l.bf16 %v106
    %v171 = vunpack.c.l.bf16 %v107
    %v172 = vunpack.c.l.bf16 %v108
    %v173 = vunpack.c.l.bf16 %v109
    %v174 = vunpack.c.l.bf16 %v110
    %v175 = vunpack.c.l.bf16 %v111
    %v176 = vunpack.c.l.bf16 %v112
    %v177 = vunpack.c.l.bf16 %v113
    %v178 = vunpack.c.l.bf16 %v114
    %v179 = vunpack.c.l.bf16 %v115
    %v180 = vld [vmem:[#allocation5] sm:$0x1]
    %v182 = vlaneseq
    %v183 = vshrl.u32 %v182, 7
    %v184 = vsub.s32 0, %v183
    %v185 = vrot.slane %v180, %v184
    %v187 = vmul.f32 %v116, %v185
    %v188 = vmul.f32 %v117, %v185
    %v189 = vmul.f32 %v118, %v185
    %v190 = vmul.f32 %v119, %v185
    %v191 = vmul.f32 %v120, %v185
    %v192 = vmul.f32 %v121, %v185
    %v193 = vmul.f32 %v122, %v185
    %v194 = vmul.f32 %v123, %v185
    %v195 = vmul.f32 %v124, %v185
    %v196 = vmul.f32 %v125, %v185
    %v197 = vmul.f32 %v126, %v185
    %v198 = vmul.f32 %v127, %v185
    %v199 = vmul.f32 %v128, %v185
    %v200 = vmul.f32 %v129, %v185
    %v201 = vmul.f32 %v130, %v185
    %v202 = vmul.f32 %v131, %v185
    %v203 = vmul.f32 %v132, %v185
    %v204 = vmul.f32 %v133, %v185
    %v205 = vmul.f32 %v134, %v185
    %v206 = vmul.f32 %v135, %v185
    %v207 = vmul.f32 %v136, %v185
    %v208 = vmul.f32 %v137, %v185
    %v209 = vmul.f32 %v138, %v185
    %v210 = vmul.f32 %v139, %v185
    %v211 = vmul.f32 %v140, %v185
    %v212 = vmul.f32 %v141, %v185
    %v213 = vmul.f32 %v142, %v185
    %v214 = vmul.f32 %v143, %v185
    %v215 = vmul.f32 %v144, %v185
    %v216 = vmul.f32 %v145, %v185
    %v217 = vmul.f32 %v146, %v185
    %v218 = vmul.f32 %v147, %v185
    %v219 = vmul.f32 %v148, %v185
    %v220 = vmul.f32 %v149, %v185
    %v221 = vmul.f32 %v150, %v185
    %v222 = vmul.f32 %v151, %v185
    %v223 = vmul.f32 %v152, %v185
    %v224 = vmul.f32 %v153, %v185
    %v225 = vmul.f32 %v154, %v185
    %v226 = vmul.f32 %v155, %v185
    %v227 = vmul.f32 %v156, %v185
    %v228 = vmul.f32 %v157, %v185
    %v229 = vmul.f32 %v158, %v185
    %v230 = vmul.f32 %v159, %v185
    %v231 = vmul.f32 %v160, %v185
    %v232 = vmul.f32 %v161, %v185
    %v233 = vmul.f32 %v162, %v185
    %v234 = vmul.f32 %v163, %v185
    %v235 = vmul.f32 %v164, %v185
    %v236 = vmul.f32 %v165, %v185
    %v237 = vmul.f32 %v166, %v185
    %v238 = vmul.f32 %v167, %v185
    %v239 = vmul.f32 %v168, %v185
    %v240 = vmul.f32 %v169, %v185
    %v241 = vmul.f32 %v170, %v185
    %v242 = vmul.f32 %v171, %v185
    %v243 = vmul.f32 %v172, %v185
    %v244 = vmul.f32 %v173, %v185
    %v245 = vmul.f32 %v174, %v185
    %v246 = vmul.f32 %v175, %v185
    %v247 = vmul.f32 %v176, %v185
    %v248 = vmul.f32 %v177, %v185
    %v249 = vmul.f32 %v178, %v185
    %v250 = vmul.f32 %v179, %v185
    %v251 = vld [vmem:[#allocation7] sm:$0x1]
    %v253 = vlaneseq
    %v254 = vshrl.u32 %v253, 7
    %v255 = vsub.s32 0, %v254
    %v256 = vrot.slane %v251, %v255
    %v258 = vadd.f32 %v187, %v256
    %v259 = vadd.f32 %v188, %v256
    %v260 = vadd.f32 %v189, %v256
    %v261 = vadd.f32 %v190, %v256
    %v262 = vadd.f32 %v191, %v256
    %v263 = vadd.f32 %v192, %v256
    %v264 = vadd.f32 %v193, %v256
    %v265 = vadd.f32 %v194, %v256
    %v266 = vadd.f32 %v195, %v256
    %v267 = vadd.f32 %v196, %v256
    %v268 = vadd.f32 %v197, %v256
    %v269 = vadd.f32 %v198, %v256
    %v270 = vadd.f32 %v199, %v256
    %v271 = vadd.f32 %v200, %v256
    %v272 = vadd.f32 %v201, %v256
    %v273 = vadd.f32 %v202, %v256
    %v274 = vadd.f32 %v203, %v256
    %v275 = vadd.f32 %v204, %v256
    %v276 = vadd.f32 %v205, %v256
    %v277 = vadd.f32 %v206, %v256
    %v278 = vadd.f32 %v207, %v256
    %v279 = vadd.f32 %v208, %v256
    %v280 = vadd.f32 %v209, %v256
    %v281 = vadd.f32 %v210, %v256
    %v282 = vadd.f32 %v211, %v256
    %v283 = vadd.f32 %v212, %v256
    %v284 = vadd.f32 %v213, %v256
    %v285 = vadd.f32 %v214, %v256
    %v286 = vadd.f32 %v215, %v256
    %v287 = vadd.f32 %v216, %v256
    %v288 = vadd.f32 %v217, %v256
    %v289 = vadd.f32 %v218, %v256
    %v290 = vadd.f32 %v219, %v256
    %v291 = vadd.f32 %v220, %v256
    %v292 = vadd.f32 %v221, %v256
    %v293 = vadd.f32 %v222, %v256
    %v294 = vadd.f32 %v223, %v256
    %v295 = vadd.f32 %v224, %v256
    %v296 = vadd.f32 %v225, %v256
    %v297 = vadd.f32 %v226, %v256
    %v298 = vadd.f32 %v227, %v256
    %v299 = vadd.f32 %v228, %v256
    %v300 = vadd.f32 %v229, %v256
    %v301 = vadd.f32 %v230, %v256
    %v302 = vadd.f32 %v231, %v256
    %v303 = vadd.f32 %v232, %v256
    %v304 = vadd.f32 %v233, %v256
    %v305 = vadd.f32 %v234, %v256
    %v306 = vadd.f32 %v235, %v256
    %v307 = vadd.f32 %v236, %v256
    %v308 = vadd.f32 %v237, %v256
    %v309 = vadd.f32 %v238, %v256
    %v310 = vadd.f32 %v239, %v256
    %v311 = vadd.f32 %v240, %v256
    %v312 = vadd.f32 %v241, %v256
    %v313 = vadd.f32 %v242, %v256
    %v314 = vadd.f32 %v243, %v256
    %v315 = vadd.f32 %v244, %v256
    %v316 = vadd.f32 %v245, %v256
    %v317 = vadd.f32 %v246, %v256
    %v318 = vadd.f32 %v247, %v256
    %v319 = vadd.f32 %v248, %v256
    %v320 = vadd.f32 %v249, %v256
    %v321 = vadd.f32 %v250, %v256
    %v322 = vmax.f32 %v258, 0.0
    %v323 = vmax.f32 %v259, 0.0
    %v324 = vmax.f32 %v260, 0.0
    %v325 = vmax.f32 %v261, 0.0
    %v326 = vmax.f32 %v262, 0.0
    %v327 = vmax.f32 %v263, 0.0
    %v328 = vmax.f32 %v264, 0.0
    %v329 = vmax.f32 %v265, 0.0
    %v330 = vmax.f32 %v266, 0.0
    %v331 = vmax.f32 %v267, 0.0
    %v332 = vmax.f32 %v268, 0.0
    %v333 = vmax.f32 %v269, 0.0
    %v334 = vmax.f32 %v270, 0.0
    %v335 = vmax.f32 %v271, 0.0
    %v336 = vmax.f32 %v272, 0.0
    %v337 = vmax.f32 %v273, 0.0
    %v338 = vmax.f32 %v274, 0.0
    %v339 = vmax.f32 %v275, 0.0
    %v340 = vmax.f32 %v276, 0.0
    %v341 = vmax.f32 %v277, 0.0
    %v342 = vmax.f32 %v278, 0.0
    %v343 = vmax.f32 %v279, 0.0
    %v344 = vmax.f32 %v280, 0.0
    %v345 = vmax.f32 %v281, 0.0
    %v346 = vmax.f32 %v282, 0.0
    %v347 = vmax.f32 %v283, 0.0
    %v348 = vmax.f32 %v284, 0.0
    %v349 = vmax.f32 %v285, 0.0
    %v350 = vmax.f32 %v286, 0.0
    %v351 = vmax.f32 %v287, 0.0
    %v352 = vmax.f32 %v288, 0.0
    %v353 = vmax.f32 %v289, 0.0
    %v354 = vmax.f32 %v290, 0.0
    %v355 = vmax.f32 %v291, 0.0
    %v356 = vmax.f32 %v292, 0.0
    %v357 = vmax.f32 %v293, 0.0
    %v358 = vmax.f32 %v294, 0.0
    %v359 = vmax.f32 %v295, 0.0
    %v360 = vmax.f32 %v296, 0.0
    %v361 = vmax.f32 %v297, 0.0
    %v362 = vmax.f32 %v298, 0.0
    %v363 = vmax.f32 %v299, 0.0
    %v364 = vmax.f32 %v300, 0.0
    %v365 = vmax.f32 %v301, 0.0
    %v366 = vmax.f32 %v302, 0.0
    %v367 = vmax.f32 %v303, 0.0
    %v368 = vmax.f32 %v304, 0.0
    %v369 = vmax.f32 %v305, 0.0
    %v370 = vmax.f32 %v306, 0.0
    %v371 = vmax.f32 %v307, 0.0
    %v372 = vmax.f32 %v308, 0.0
    %v373 = vmax.f32 %v309, 0.0
    %v374 = vmax.f32 %v310, 0.0
    %v375 = vmax.f32 %v311, 0.0
    %v376 = vmax.f32 %v312, 0.0
    %v377 = vmax.f32 %v313, 0.0
    %v378 = vmax.f32 %v314, 0.0
    %v379 = vmax.f32 %v315, 0.0
    %v380 = vmax.f32 %v316, 0.0
    %v381 = vmax.f32 %v317, 0.0
    %v382 = vmax.f32 %v318, 0.0
    %v383 = vmax.f32 %v319, 0.0
    %v384 = vmax.f32 %v320, 0.0
    %v385 = vmax.f32 %v321, 0.0
    %386 = vst [vmem:[#allocation8] sm:$0xff] %v322
    %387 = vst [vmem:[#allocation8 + $0x8] sm:$0xff] %v323
    %388 = vst [vmem:[#allocation8 + $0x10] sm:$0xff] %v324
    %389 = vst [vmem:[#allocation8 + $0x18] sm:$0xff] %v325
    %390 = vst [vmem:[#allocation8 + $0x20] sm:$0xff] %v326
    %391 = vst [vmem:[#allocation8 + $0x28] sm:$0xff] %v327
    %392 = vst [vmem:[#allocation8 + $0x30] sm:$0xff] %v328
    %393 = vst [vmem:[#allocation8 + $0x38] sm:$0xff] %v329
    %394 = vst [vmem:[#allocation8 + $0x40] sm:$0xff] %v330
    %395 = vst [vmem:[#allocation8 + $0x48] sm:$0xff] %v331
    %396 = vst [vmem:[#allocation8 + $0x50] sm:$0xff] %v332
    %397 = vst [vmem:[#allocation8 + $0x58] sm:$0xff] %v333
    %398 = vst [vmem:[#allocation8 + $0x60] sm:$0xff] %v334
    %399 = vst [vmem:[#allocation8 + $0x68] sm:$0xff] %v335
    %400 = vst [vmem:[#allocation8 + $0x70] sm:$0xff] %v336
    %401 = vst [vmem:[#allocation8 + $0x78] sm:$0xff] %v337
    %402 = vst [vmem:[#allocation8 + $0x80] sm:$0xff] %v338
    %403 = vst [vmem:[#allocation8 + $0x88] sm:$0xff] %v339
    %404 = vst [vmem:[#allocation8 + $0x90] sm:$0xff] %v340
    %405 = vst [vmem:[#allocation8 + $0x98] sm:$0xff] %v341
    %406 = vst [vmem:[#allocation8 + $0xa0] sm:$0xff] %v342
    %407 = vst [vmem:[#allocation8 + $0xa8] sm:$0xff] %v343
    %408 = vst [vmem:[#allocation8 + $0xb0] sm:$0xff] %v344
    %409 = vst [vmem:[#allocation8 + $0xb8] sm:$0xff] %v345
    %410 = vst [vmem:[#allocation8 + $0xc0] sm:$0xff] %v346
    %411 = vst [vmem:[#allocation8 + $0xc8] sm:$0xff] %v347
    %412 = vst [vmem:[#allocation8 + $0xd0] sm:$0xff] %v348
    %413 = vst [vmem:[#allocation8 + $0xd8] sm:$0xff] %v349
    %414 = vst [vmem:[#allocation8 + $0xe0] sm:$0xff] %v350
    %415 = vst [vmem:[#allocation8 + $0xe8] sm:$0xff] %v351
    %416 = vst [vmem:[#allocation8 + $0xf0] sm:$0xff] %v352
    %417 = vst [vmem:[#allocation8 + $0xf8] sm:$0xff] %v353
    %418 = vst [vmem:[#allocation8 + $0x100] sm:$0xff] %v354
    %419 = vst [vmem:[#allocation8 + $0x108] sm:$0xff] %v355
    %420 = vst [vmem:[#allocation8 + $0x110] sm:$0xff] %v356
    %421 = vst [vmem:[#allocation8 + $0x118] sm:$0xff] %v357
    %422 = vst [vmem:[#allocation8 + $0x120] sm:$0xff] %v358
    %423 = vst [vmem:[#allocation8 + $0x128] sm:$0xff] %v359
    %424 = vst [vmem:[#allocation8 + $0x130] sm:$0xff] %v360
    %425 = vst [vmem:[#allocation8 + $0x138] sm:$0xff] %v361
    %426 = vst [vmem:[#allocation8 + $0x140] sm:$0xff] %v362
    %427 = vst [vmem:[#allocation8 + $0x148] sm:$0xff] %v363
    %428 = vst [vmem:[#allocation8 + $0x150] sm:$0xff] %v364
    %429 = vst [vmem:[#allocation8 + $0x158] sm:$0xff] %v365
    %430 = vst [vmem:[#allocation8 + $0x160] sm:$0xff] %v366
    %431 = vst [vmem:[#allocation8 + $0x168] sm:$0xff] %v367
    %432 = vst [vmem:[#allocation8 + $0x170] sm:$0xff] %v368
    %433 = vst [vmem:[#allocation8 + $0x178] sm:$0xff] %v369
    %434 = vst [vmem:[#allocation8 + $0x180] sm:$0xff] %v370
    %435 = vst [vmem:[#allocation8 + $0x188] sm:$0xff] %v371
    %436 = vst [vmem:[#allocation8 + $0x190] sm:$0xff] %v372
    %437 = vst [vmem:[#allocation8 + $0x198] sm:$0xff] %v373
    %438 = vst [vmem:[#allocation8 + $0x1a0] sm:$0xff] %v374
    %439 = vst [vmem:[#allocation8 + $0x1a8] sm:$0xff] %v375
    %440 = vst [vmem:[#allocation8 + $0x1b0] sm:$0xff] %v376
    %441 = vst [vmem:[#allocation8 + $0x1b8] sm:$0xff] %v377
    %442 = vst [vmem:[#allocation8 + $0x1c0] sm:$0xff] %v378
    %443 = vst [vmem:[#allocation8 + $0x1c8] sm:$0xff] %v379
    %444 = vst [vmem:[#allocation8 + $0x1d0] sm:$0xff] %v380
    %445 = vst [vmem:[#allocation8 + $0x1d8] sm:$0xff] %v381
    %446 = vst [vmem:[#allocation8 + $0x1e0] sm:$0xff] %v382
    %447 = vst [vmem:[#allocation8 + $0x1e8] sm:$0xff] %v383
    %448 = vst [vmem:[#allocation8 + $0x1f0] sm:$0xff] %v384
    %449 = vst [vmem:[#allocation8 + $0x1f8] sm:$0xff] %v385
    // Predicated region
    $region26: #{double_conv.7} parent=1 // pred_check
      _
    $region27: #{double_conv.7} parent=1 // pred_check_branch
      %451 = sbr.rel (0) target = $region29
    $region28: #{double_conv.7} parent=1 // pred_region
      %s453 = ssub.s32 8192, 8192
      %454 = vsyncadd [#allocation4], %s453
      %s455 = sshll.u32 [#allocation8], 4
      %s456 = int_to_ptr.vmem [resolvable:$true] %s455
      %461 = dma.vmem_to_hbm [thread:$0]  %s456, 8192, %s3, [#allocation4], 128, 128, 8
    $region29: #{double_conv.7} parent=1 // pred_fallthru
      _
    // Predicated region
    $region30: #{double_conv.7} parent=1 // pred_check
      _
    $region31: #{double_conv.7} parent=1 // pred_check_branch
      %463 = sbr.rel (0) target = $region33
    $region32: #{double_conv.7} parent=1 // pred_region
      %464 = dma.done [#allocation4], 8192
    $region33: #{double_conv.7} parent=1 // pred_fallthru
      _
    %465 = vsyncpa [#allocation3], 1
    %466 = vsyncpa [#allocation6], 1
    %467 = vsyncpa [#allocation4], 1

</llo_original>
